<compile_context>
chip_gen: v7x
topology: tpu7x:2x2x1
jax: 0.10.0
libtpu: 0.0.40
codegen_flags: <defaults>
</compile_context>

<pallas_src>
import functools

import jax
import jax.numpy as jnp
from jax import lax
from jax.experimental import pallas as pl
from jax.experimental.pallas import tpu as pltpu

BN_EPS = 1e-4


# ----------------------------------------------------------------------------
# Fused kernel: conv (+bias | +training-mode BN) + ReLU for one whole layer.
# ----------------------------------------------------------------------------
def _fused_conv_bn_relu_kernel(x_ref, w_ref, a_ref, b_ref, m_ref, o_ref, *,
                               K, Wp, S, Pc, inv_n, eps, use_bn):
    """
    x_ref : (Cin,  Pfull)    zero-padded, flattened input (padded frame)
    w_ref : (K*K, Cout, Cin) conv weight, tap-major
    a_ref : (Cout, 1)        conv bias (use_bn=False) or BN gamma (use_bn=True)
    b_ref : (Cout, 1)        unused     (use_bn=False) or BN beta  (use_bn=True)
    m_ref : (1, Pc)          1.0 at true interior output positions, else 0.0
    o_ref : (Cout, Pfull)    output, in the same padded frame as the input
    """
    cout = o_ref.shape[0]
    acc = jnp.zeros((cout, Pc), jnp.float32)

    # im2col-free convolution: one small (Cout, Cin) @ (Cin, Pc) matmul per
    # kernel tap, each reading a shifted lane-slice of the VMEM-resident input.
    for kh in range(K):
        for kw in range(K):
            off = kh * Wp + kw
            xs = x_ref[:, off:off + Pc]                      # (Cin, Pc)
            acc = acc + jnp.dot(w_ref[kh * K + kw], xs,
                                preferred_element_type=jnp.float32)

    mask = m_ref[...]
    if use_bn:
        ym = acc * mask                         # pad-band positions contribute 0
        mean = jnp.sum(ym, axis=1, keepdims=True) * inv_n
        var = jnp.sum(ym * ym, axis=1, keepdims=True) * inv_n - mean * mean
        var = jnp.maximum(var, 0.0)             # guard against cancellation
        scale = a_ref[...] * lax.rsqrt(var + eps)
        shift = b_ref[...] - mean * scale
        y = acc * scale + shift
    else:
        y = acc + a_ref[...]                    # conv bias (first layer only)

    y = jnp.maximum(y, 0.0) * mask              # ReLU, re-zero the pad band

    o_ref[...] = jnp.zeros_like(o_ref)
    o_ref[:, S:S + Pc] = y


# ----------------------------------------------------------------------------
# Per-layer wrapper around pallas_call.
# ----------------------------------------------------------------------------
def _fused_layer(x_flat, w, bias, gamma, beta, *, N, H, W, K, p, use_bn):
    cin = x_flat.shape[0]
    cout = w.shape[0]
    Hp, Wp = H + 2 * p, W + 2 * p
    pfull = N * Hp * Wp
    S = p * Wp + p                       # leading/trailing pad run length
    Pc = pfull - 2 * S                   # central strip actually computed
    n_valid = N * H * W                  # BN statistics population

    # interior-position mask over the central strip [S, S + Pc)
    idx = S + jnp.arange(Pc)
    r = idx % (Hp * Wp)
    hh, ww = r // Wp, r % Wp
    mask = (((hh >= p) & (hh < Hp - p) & (ww >= p) & (ww < Wp - p))
            .astype(jnp.float32)).reshape(1, Pc)

    # weight as (K*K, Cout, Cin), tap-major
    w_taps = jnp.transpose(w, (2, 3, 0, 1)).reshape(K * K, cout, cin)

    # pad the contraction (Cin) dim to a sublane multiple with zeros (free:
    # those sublanes are padded in VMEM anyway, and zeros do not change the dot)
    cin_pad = (-cin) % 8
    if cin_pad:
        x_flat = jnp.pad(x_flat, ((0, cin_pad), (0, 0)))
        w_taps = jnp.pad(w_taps, ((0, 0), (0, 0), (0, cin_pad)))

    if use_bn:
        a_vec = gamma.reshape(cout, 1).astype(jnp.float32)
        b_vec = beta.reshape(cout, 1).astype(jnp.float32)
    else:
        a_vec = bias.reshape(cout, 1).astype(jnp.float32)
        b_vec = jnp.zeros((cout, 1), jnp.float32)            # unused

    kernel = functools.partial(
        _fused_conv_bn_relu_kernel, K=K, Wp=Wp, S=S, Pc=Pc,
        inv_n=1.0 / float(n_valid), eps=float(BN_EPS), use_bn=use_bn)

    vmem = pl.BlockSpec(memory_space=pltpu.MemorySpace.VMEM)
    return pl.pallas_call(
        kernel,
        out_shape=jax.ShapeDtypeStruct((cout, pfull), jnp.float32),
        in_specs=[vmem, vmem, vmem, vmem, vmem],
        out_specs=vmem,
    )(x_flat, w_taps, a_vec, b_vec, mask)


def _pad_flat(x_cnhw, p):
    """(C, N, H, W) -> (C, N*(H+2p)*(W+2p)) zero-padded, flattened."""
    xp = jnp.pad(x_cnhw, ((0, 0), (0, 0), (p, p), (p, p)))
    return xp.reshape(x_cnhw.shape[0], -1)


# ----------------------------------------------------------------------------
# DoubleModule forward.
# ----------------------------------------------------------------------------
@functools.partial(jax.jit, static_argnames=("kernel_size", "stride", "padding"))
def double_module_forward(x, params, *, kernel_size, stride, padding):
    """x: (N, Cin, H, W). params: ((w0, b0), ((w, b, gamma, beta),) * (depth+1))."""
    (w0, b0), bn_blocks = params
    K, p, s = kernel_size, padding, stride
    assert K == 2 * p + 1, "fused path assumes 'same' conv geometry"

    N, _, H, W = x.shape
    x_flat = _pad_flat(jnp.transpose(x, (1, 0, 2, 3)), p)

    # layer 0: Conv2d(in -> n, stride=s, bias) + ReLU   (no BatchNorm)
    y = _fused_layer(x_flat, w0, b0, None, None,
                     N=N, H=H, W=W, K=K, p=p, use_bn=False)
    if s == 1:
        Hc, Wc = H, W
        x_flat = y                                   # already next layer's layout
    else:
        Ho = (H + 2 * p - K) // s + 1
        Wo = (W + 2 * p - K) // s + 1
        y4 = y.reshape(-1, N, H + 2 * p, W + 2 * p)
        y4 = y4[:, :, p:p + (Ho - 1) * s + 1:s, p:p + (Wo - 1) * s + 1:s]
        x_flat = _pad_flat(y4, p)
        Hc, Wc = Ho, Wo

    # depth+1 blocks: Conv2d(n -> n) + BatchNorm2d (training stats) + ReLU.
    # The conv bias cancels exactly against the batch mean, so it is dropped.
    for (w, _b_cancels, gamma, beta) in bn_blocks:
        x_flat = _fused_layer(x_flat, w, None, gamma, beta,
                              N=N, H=Hc, W=Wc, K=K, p=p, use_bn=True)

    cout = bn_blocks[-1][0].shape[0]
    out = x_flat.reshape(cout, N, Hc + 2 * p, Wc + 2 * p)[:, :, p:p + Hc, p:p + Wc]
    return jnp.transpose(out, (1, 0, 2, 3))


# ----------------------------------------------------------------------------
# Pure-JAX reference (for an in-script correctness check).
# ----------------------------------------------------------------------------
def _reference_forward(x, params, *, kernel_size, stride, padding):
    (w0, b0), bn_blocks = params
    dn = ("NCHW", "OIHW", "NCHW")
    pad2 = [(padding, padding), (padding, padding)]
    y = lax.conv_general_dilated(x, w0, (stride, stride), pad2,
                                 dimension_numbers=dn)
    y = jnp.maximum(y + b0.reshape(1, -1, 1, 1), 0.0)
    for (w, b, gamma, beta) in bn_blocks:
        y = lax.conv_general_dilated(y, w, (1, 1), pad2, dimension_numbers=dn)
        y = y + b.reshape(1, -1, 1, 1)
        mean = jnp.mean(y, axis=(0, 2, 3), keepdims=True)
        var = jnp.mean((y - mean) ** 2, axis=(0, 2, 3), keepdims=True)
        y = (y - mean) * lax.rsqrt(var + BN_EPS)
        y = jnp.maximum(y * gamma.reshape(1, -1, 1, 1) + beta.reshape(1, -1, 1, 1),
                        0.0)
    return y


# ----------------------------------------------------------------------------
# Parameter construction (mirrors DoubleModule._initialize_weights).
# ----------------------------------------------------------------------------
def _orthogonal_conv(key, cout, cin, K):
    """Orthogonal init on the (cout, cin*K*K) flattening (like init.orthogonal_)."""
    flat = cin * K * K
    a = jax.random.normal(key, (flat, cout), jnp.float32)
    q, r = jnp.linalg.qr(a)                       # q: (flat, cout)
    q = q * jnp.sign(jnp.diagonal(r))
    return q.T.reshape(cout, cin, K, K)


def init_params(key, in_channels, n_channels, depth, kernel_size):
    K = kernel_size
    keys = jax.random.split(key, depth + 2)
    w0 = _orthogonal_conv(keys[0], n_channels, in_channels, K)
    b0 = jnp.zeros((n_channels,), jnp.float32)
    blocks = []
    for i in range(depth + 1):
        w = _orthogonal_conv(keys[i + 1], n_channels, n_channels, K)
        b = jnp.zeros((n_channels,), jnp.float32)   # cancels under training-mode BN
        gamma = jnp.ones((n_channels,), jnp.float32)
        beta = jnp.zeros((n_channels,), jnp.float32)
        blocks.append((w, b, gamma, beta))
    return ((w0, b0), tuple(blocks))


if __name__ == "__main__":
    in_channels, n_channels = 4, 8
    depth, kernel_size, stride, padding = 1, 3, 1, 1
    N, H, W = 2, 16, 16

    key = jax.random.PRNGKey(0)
    kx, kp = jax.random.split(key)
    x = jax.random.normal(kx, (N, in_channels, H, W), jnp.float32)
    params = init_params(kp, in_channels, n_channels, depth, kernel_size)

    out = double_module_forward(x, params, kernel_size=kernel_size,
                                stride=stride, padding=padding)
    out = jax.block_until_ready(out)

    assert out.shape == (N, n_channels, H, W), out.shape
    assert bool(jnp.all(jnp.isfinite(out)))
    assert bool(jnp.all(out >= 0.0))              # last op is a ReLU

    ref = _reference_forward(x, params, kernel_size=kernel_size,
                             stride=stride, padding=padding)
    assert bool(jnp.allclose(out, ref, atol=2e-4, rtol=2e-4)), \
        float(jnp.max(jnp.abs(out - ref)))

    print("KERNEL_OK")
</pallas_src>

<mosaic_0001>
module attributes {stable_mosaic.version = 11 : i64} {
  func.func @_fused_conv_bn_relu_kernel(%arg0: memref<8x648xf32, #tpu.memory_space<vmem>>, %arg1: memref<9x8x8xf32, #tpu.memory_space<vmem>>, %arg2: memref<8x1xf32, #tpu.memory_space<vmem>>, %arg3: memref<8x1xf32, #tpu.memory_space<vmem>>, %arg4: memref<1x610xf32, #tpu.memory_space<vmem>>, %arg5: memref<8x648xf32, #tpu.memory_space<vmem>>) attributes {dimension_semantics = [], scalar_prefetch = 0 : i64, scratch_operands = 0 : i64, tpu.core_type = #tpu.core_type<tc>} {
    %cst = arith.constant 0.000000e+00 : f32
    %0 = vector.broadcast %cst : f32 to vector<8x610xf32>
    %c0 = arith.constant 0 : index
    %c0_0 = arith.constant 0 : index
    %1 = vector.load %arg0[%c0, %c0_0] : memref<8x648xf32, #tpu.memory_space<vmem>>, vector<8x610xf32>
    %c0_1 = arith.constant 0 : index
    %c0_2 = arith.constant 0 : index
    %c0_3 = arith.constant 0 : index
    %2 = vector.load %arg1[%c0_1, %c0_2, %c0_3] : memref<9x8x8xf32, #tpu.memory_space<vmem>>, vector<1x8x8xf32>
    %3 = vector.shape_cast %2 : vector<1x8x8xf32> to vector<8x8xf32>
    %cst_4 = arith.constant dense<0.000000e+00> : vector<8x610xf32>
    %4 = tpu.matmul %3, %1, %cst_4 {dimension_numbers = #tpu.dot_dimension_numbers<[1], [0], [0], [1], [0, 0, 1, 1], [], []>} : vector<8x8xf32>, vector<8x610xf32>, vector<8x610xf32> -> vector<8x610xf32>
    %5 = arith.addf %0, %4 : vector<8x610xf32>
    %c0_5 = arith.constant 0 : index
    %c1 = arith.constant 1 : index
    %6 = vector.load %arg0[%c0_5, %c1] : memref<8x648xf32, #tpu.memory_space<vmem>>, vector<8x610xf32>
    %c1_6 = arith.constant 1 : index
    %c0_7 = arith.constant 0 : index
    %c0_8 = arith.constant 0 : index
    %7 = vector.load %arg1[%c1_6, %c0_7, %c0_8] : memref<9x8x8xf32, #tpu.memory_space<vmem>>, vector<1x8x8xf32>
    %8 = vector.shape_cast %7 : vector<1x8x8xf32> to vector<8x8xf32>
    %cst_9 = arith.constant dense<0.000000e+00> : vector<8x610xf32>
    %9 = tpu.matmul %8, %6, %cst_9 {dimension_numbers = #tpu.dot_dimension_numbers<[1], [0], [0], [1], [0, 0, 1, 1], [], []>} : vector<8x8xf32>, vector<8x610xf32>, vector<8x610xf32> -> vector<8x610xf32>
    %10 = arith.addf %5, %9 : vector<8x610xf32>
    %c0_10 = arith.constant 0 : index
    %c2 = arith.constant 2 : index
    %11 = vector.load %arg0[%c0_10, %c2] : memref<8x648xf32, #tpu.memory_space<vmem>>, vector<8x610xf32>
    %c2_11 = arith.constant 2 : index
    %c0_12 = arith.constant 0 : index
    %c0_13 = arith.constant 0 : index
    %12 = vector.load %arg1[%c2_11, %c0_12, %c0_13] : memref<9x8x8xf32, #tpu.memory_space<vmem>>, vector<1x8x8xf32>
    %13 = vector.shape_cast %12 : vector<1x8x8xf32> to vector<8x8xf32>
    %cst_14 = arith.constant dense<0.000000e+00> : vector<8x610xf32>
    %14 = tpu.matmul %13, %11, %cst_14 {dimension_numbers = #tpu.dot_dimension_numbers<[1], [0], [0], [1], [0, 0, 1, 1], [], []>} : vector<8x8xf32>, vector<8x610xf32>, vector<8x610xf32> -> vector<8x610xf32>
    %15 = arith.addf %10, %14 : vector<8x610xf32>
    %c0_15 = arith.constant 0 : index
    %c18 = arith.constant 18 : index
    %16 = vector.load %arg0[%c0_15, %c18] : memref<8x648xf32, #tpu.memory_space<vmem>>, vector<8x610xf32>
    %c3 = arith.constant 3 : index
    %c0_16 = arith.constant 0 : index
    %c0_17 = arith.constant 0 : index
    %17 = vector.load %arg1[%c3, %c0_16, %c0_17] : memref<9x8x8xf32, #tpu.memory_space<vmem>>, vector<1x8x8xf32>
    %18 = vector.shape_cast %17 : vector<1x8x8xf32> to vector<8x8xf32>
    %cst_18 = arith.constant dense<0.000000e+00> : vector<8x610xf32>
    %19 = tpu.matmul %18, %16, %cst_18 {dimension_numbers = #tpu.dot_dimension_numbers<[1], [0], [0], [1], [0, 0, 1, 1], [], []>} : vector<8x8xf32>, vector<8x610xf32>, vector<8x610xf32> -> vector<8x610xf32>
    %20 = arith.addf %15, %19 : vector<8x610xf32>
    %c0_19 = arith.constant 0 : index
    %c19 = arith.constant 19 : index
    %21 = vector.load %arg0[%c0_19, %c19] : memref<8x648xf32, #tpu.memory_space<vmem>>, vector<8x610xf32>
    %c4 = arith.constant 4 : index
    %c0_20 = arith.constant 0 : index
    %c0_21 = arith.constant 0 : index
    %22 = vector.load %arg1[%c4, %c0_20, %c0_21] : memref<9x8x8xf32, #tpu.memory_space<vmem>>, vector<1x8x8xf32>
    %23 = vector.shape_cast %22 : vector<1x8x8xf32> to vector<8x8xf32>
    %cst_22 = arith.constant dense<0.000000e+00> : vector<8x610xf32>
    %24 = tpu.matmul %23, %21, %cst_22 {dimension_numbers = #tpu.dot_dimension_numbers<[1], [0], [0], [1], [0, 0, 1, 1], [], []>} : vector<8x8xf32>, vector<8x610xf32>, vector<8x610xf32> -> vector<8x610xf32>
    %25 = arith.addf %20, %24 : vector<8x610xf32>
    %c0_23 = arith.constant 0 : index
    %c20 = arith.constant 20 : index
    %26 = vector.load %arg0[%c0_23, %c20] : memref<8x648xf32, #tpu.memory_space<vmem>>, vector<8x610xf32>
    %c5 = arith.constant 5 : index
    %c0_24 = arith.constant 0 : index
    %c0_25 = arith.constant 0 : index
    %27 = vector.load %arg1[%c5, %c0_24, %c0_25] : memref<9x8x8xf32, #tpu.memory_space<vmem>>, vector<1x8x8xf32>
    %28 = vector.shape_cast %27 : vector<1x8x8xf32> to vector<8x8xf32>
    %cst_26 = arith.constant dense<0.000000e+00> : vector<8x610xf32>
    %29 = tpu.matmul %28, %26, %cst_26 {dimension_numbers = #tpu.dot_dimension_numbers<[1], [0], [0], [1], [0, 0, 1, 1], [], []>} : vector<8x8xf32>, vector<8x610xf32>, vector<8x610xf32> -> vector<8x610xf32>
    %30 = arith.addf %25, %29 : vector<8x610xf32>
    %c0_27 = arith.constant 0 : index
    %c36 = arith.constant 36 : index
    %31 = vector.load %arg0[%c0_27, %c36] : memref<8x648xf32, #tpu.memory_space<vmem>>, vector<8x610xf32>
    %c6 = arith.constant 6 : index
    %c0_28 = arith.constant 0 : index
    %c0_29 = arith.constant 0 : index
    %32 = vector.load %arg1[%c6, %c0_28, %c0_29] : memref<9x8x8xf32, #tpu.memory_space<vmem>>, vector<1x8x8xf32>
    %33 = vector.shape_cast %32 : vector<1x8x8xf32> to vector<8x8xf32>
    %cst_30 = arith.constant dense<0.000000e+00> : vector<8x610xf32>
    %34 = tpu.matmul %33, %31, %cst_30 {dimension_numbers = #tpu.dot_dimension_numbers<[1], [0], [0], [1], [0, 0, 1, 1], [], []>} : vector<8x8xf32>, vector<8x610xf32>, vector<8x610xf32> -> vector<8x610xf32>
    %35 = arith.addf %30, %34 : vector<8x610xf32>
    %c0_31 = arith.constant 0 : index
    %c37 = arith.constant 37 : index
    %36 = vector.load %arg0[%c0_31, %c37] : memref<8x648xf32, #tpu.memory_space<vmem>>, vector<8x610xf32>
    %c7 = arith.constant 7 : index
    %c0_32 = arith.constant 0 : index
    %c0_33 = arith.constant 0 : index
    %37 = vector.load %arg1[%c7, %c0_32, %c0_33] : memref<9x8x8xf32, #tpu.memory_space<vmem>>, vector<1x8x8xf32>
    %38 = vector.shape_cast %37 : vector<1x8x8xf32> to vector<8x8xf32>
    %cst_34 = arith.constant dense<0.000000e+00> : vector<8x610xf32>
    %39 = tpu.matmul %38, %36, %cst_34 {dimension_numbers = #tpu.dot_dimension_numbers<[1], [0], [0], [1], [0, 0, 1, 1], [], []>} : vector<8x8xf32>, vector<8x610xf32>, vector<8x610xf32> -> vector<8x610xf32>
    %40 = arith.addf %35, %39 : vector<8x610xf32>
    %c0_35 = arith.constant 0 : index
    %c38 = arith.constant 38 : index
    %41 = vector.load %arg0[%c0_35, %c38] : memref<8x648xf32, #tpu.memory_space<vmem>>, vector<8x610xf32>
    %c8 = arith.constant 8 : index
    %c0_36 = arith.constant 0 : index
    %c0_37 = arith.constant 0 : index
    %42 = vector.load %arg1[%c8, %c0_36, %c0_37] : memref<9x8x8xf32, #tpu.memory_space<vmem>>, vector<1x8x8xf32>
    %43 = vector.shape_cast %42 : vector<1x8x8xf32> to vector<8x8xf32>
    %cst_38 = arith.constant dense<0.000000e+00> : vector<8x610xf32>
    %44 = tpu.matmul %43, %41, %cst_38 {dimension_numbers = #tpu.dot_dimension_numbers<[1], [0], [0], [1], [0, 0, 1, 1], [], []>} : vector<8x8xf32>, vector<8x610xf32>, vector<8x610xf32> -> vector<8x610xf32>
    %45 = arith.addf %40, %44 : vector<8x610xf32>
    %c0_39 = arith.constant 0 : index
    %c0_40 = arith.constant 0 : index
    %46 = vector.load %arg4[%c0_39, %c0_40] : memref<1x610xf32, #tpu.memory_space<vmem>>, vector<1x610xf32>
    %47 = vector.broadcast %46 : vector<1x610xf32> to vector<8x610xf32>
    %48 = arith.mulf %45, %47 : vector<8x610xf32>
    %cst_41 = arith.constant dense<0.000000e+00> : vector<8xf32>
    %49 = vector.multi_reduction <add>, %48, %cst_41 [1] : vector<8x610xf32> to vector<8xf32>
    %50 = vector.shape_cast %49 : vector<8xf32> to vector<8x1xf32>
    %cst_42 = arith.constant 0.001953125 : f32
    %51 = vector.broadcast %cst_42 : f32 to vector<8x1xf32>
    %52 = arith.mulf %50, %51 : vector<8x1xf32>
    %53 = arith.mulf %48, %48 : vector<8x610xf32>
    %cst_43 = arith.constant dense<0.000000e+00> : vector<8xf32>
    %54 = vector.multi_reduction <add>, %53, %cst_43 [1] : vector<8x610xf32> to vector<8xf32>
    %55 = vector.shape_cast %54 : vector<8xf32> to vector<8x1xf32>
    %cst_44 = arith.constant 0.001953125 : f32
    %56 = vector.broadcast %cst_44 : f32 to vector<8x1xf32>
    %57 = arith.mulf %55, %56 : vector<8x1xf32>
    %58 = arith.mulf %52, %52 : vector<8x1xf32>
    %59 = arith.subf %57, %58 : vector<8x1xf32>
    %cst_45 = arith.constant 0.000000e+00 : f32
    %60 = vector.broadcast %cst_45 : f32 to vector<8x1xf32>
    %61 = arith.maximumf %59, %60 : vector<8x1xf32>
    %c0_46 = arith.constant 0 : index
    %c0_47 = arith.constant 0 : index
    %62 = vector.load %arg2[%c0_46, %c0_47] : memref<8x1xf32, #tpu.memory_space<vmem>>, vector<8x1xf32>
    %cst_48 = arith.constant 9.99999974E-5 : f32
    %63 = vector.broadcast %cst_48 : f32 to vector<8x1xf32>
    %64 = arith.addf %61, %63 : vector<8x1xf32>
    %65 = math.rsqrt %64 : vector<8x1xf32>
    %66 = arith.mulf %62, %65 : vector<8x1xf32>
    %c0_49 = arith.constant 0 : index
    %c0_50 = arith.constant 0 : index
    %67 = vector.load %arg3[%c0_49, %c0_50] : memref<8x1xf32, #tpu.memory_space<vmem>>, vector<8x1xf32>
    %68 = arith.mulf %52, %66 : vector<8x1xf32>
    %69 = arith.subf %67, %68 : vector<8x1xf32>
    %70 = vector.broadcast %66 : vector<8x1xf32> to vector<8x610xf32>
    %71 = arith.mulf %45, %70 : vector<8x610xf32>
    %72 = vector.broadcast %69 : vector<8x1xf32> to vector<8x610xf32>
    %73 = arith.addf %71, %72 : vector<8x610xf32>
    %cst_51 = arith.constant 0.000000e+00 : f32
    %74 = vector.broadcast %cst_51 : f32 to vector<8x610xf32>
    %75 = arith.maximumf %73, %74 : vector<8x610xf32>
    %76 = vector.broadcast %46 : vector<1x610xf32> to vector<8x610xf32>
    %77 = arith.mulf %75, %76 : vector<8x610xf32>
    %cst_52 = arith.constant 0.000000e+00 : f32
    %78 = vector.broadcast %cst_52 : f32 to vector<8x648xf32>
    %c0_53 = arith.constant 0 : index
    %c0_54 = arith.constant 0 : index
    %79 = vector.load %arg5[%c0_53, %c0_54] : memref<8x648xf32, #tpu.memory_space<vmem>>, vector<8x648xf32>
    tpu.vector_store %arg5[%c0_53, %c0_54], %78 {strides = array<i32>} : memref<8x648xf32, #tpu.memory_space<vmem>>, vector<8x648xf32>,
    %c0_55 = arith.constant 0 : index
    %c19_56 = arith.constant 19 : index
    %80 = vector.load %arg5[%c0_55, %c19_56] : memref<8x648xf32, #tpu.memory_space<vmem>>, vector<8x610xf32>
    tpu.vector_store %arg5[%c0_55, %c19_56], %77 {strides = array<i32>} : memref<8x648xf32, #tpu.memory_space<vmem>>, vector<8x610xf32>,
    return
  }
}

module attributes {stable_mosaic.version = 11 : i64} {
  func.func @_fused_conv_bn_relu_kernel(%arg0: memref<8x648xf32, #tpu.memory_space<vmem>>, %arg1: memref<9x8x8xf32, #tpu.memory_space<vmem>>, %arg2: memref<8x1xf32, #tpu.memory_space<vmem>>, %arg3: memref<8x1xf32, #tpu.memory_space<vmem>>, %arg4: memref<1x610xf32, #tpu.memory_space<vmem>>, %arg5: memref<8x648xf32, #tpu.memory_space<vmem>>) attributes {dimension_semantics = [], scalar_prefetch = 0 : i64, scratch_operands = 0 : i64, tpu.core_type = #tpu.core_type<tc>} {
    %cst = arith.constant 0.000000e+00 : f32
    %0 = vector.broadcast %cst : f32 to vector<8x610xf32>
    %c0 = arith.constant 0 : index
    %c0_0 = arith.constant 0 : index
    %1 = vector.load %arg0[%c0, %c0_0] : memref<8x648xf32, #tpu.memory_space<vmem>>, vector<8x610xf32>
    %c0_1 = arith.constant 0 : index
    %c0_2 = arith.constant 0 : index
    %c0_3 = arith.constant 0 : index
    %2 = vector.load %arg1[%c0_1, %c0_2, %c0_3] : memref<9x8x8xf32, #tpu.memory_space<vmem>>, vector<1x8x8xf32>
    %3 = vector.shape_cast %2 : vector<1x8x8xf32> to vector<8x8xf32>
    %cst_4 = arith.constant dense<0.000000e+00> : vector<8x610xf32>
    %4 = tpu.matmul %3, %1, %cst_4 {dimension_numbers = #tpu.dot_dimension_numbers<[1], [0], [0], [1], [0, 0, 1, 1], [], []>} : vector<8x8xf32>, vector<8x610xf32>, vector<8x610xf32> -> vector<8x610xf32>
    %5 = arith.addf %0, %4 : vector<8x610xf32>
    %c0_5 = arith.constant 0 : index
    %c1 = arith.constant 1 : index
    %6 = vector.load %arg0[%c0_5, %c1] : memref<8x648xf32, #tpu.memory_space<vmem>>, vector<8x610xf32>
    %c1_6 = arith.constant 1 : index
    %c0_7 = arith.constant 0 : index
    %c0_8 = arith.constant 0 : index
    %7 = vector.load %arg1[%c1_6, %c0_7, %c0_8] : memref<9x8x8xf32, #tpu.memory_space<vmem>>, vector<1x8x8xf32>
    %8 = vector.shape_cast %7 : vector<1x8x8xf32> to vector<8x8xf32>
    %cst_9 = arith.constant dense<0.000000e+00> : vector<8x610xf32>
    %9 = tpu.matmul %8, %6, %cst_9 {dimension_numbers = #tpu.dot_dimension_numbers<[1], [0], [0], [1], [0, 0, 1, 1], [], []>} : vector<8x8xf32>, vector<8x610xf32>, vector<8x610xf32> -> vector<8x610xf32>
    %10 = arith.addf %5, %9 : vector<8x610xf32>
    %c0_10 = arith.constant 0 : index
    %c2 = arith.constant 2 : index
    %11 = vector.load %arg0[%c0_10, %c2] : memref<8x648xf32, #tpu.memory_space<vmem>>, vector<8x610xf32>
    %c2_11 = arith.constant 2 : index
    %c0_12 = arith.constant 0 : index
    %c0_13 = arith.constant 0 : index
    %12 = vector.load %arg1[%c2_11, %c0_12, %c0_13] : memref<9x8x8xf32, #tpu.memory_space<vmem>>, vector<1x8x8xf32>
    %13 = vector.shape_cast %12 : vector<1x8x8xf32> to vector<8x8xf32>
    %cst_14 = arith.constant dense<0.000000e+00> : vector<8x610xf32>
    %14 = tpu.matmul %13, %11, %cst_14 {dimension_numbers = #tpu.dot_dimension_numbers<[1], [0], [0], [1], [0, 0, 1, 1], [], []>} : vector<8x8xf32>, vector<8x610xf32>, vector<8x610xf32> -> vector<8x610xf32>
    %15 = arith.addf %10, %14 : vector<8x610xf32>
    %c0_15 = arith.constant 0 : index
    %c18 = arith.constant 18 : index
    %16 = vector.load %arg0[%c0_15, %c18] : memref<8x648xf32, #tpu.memory_space<vmem>>, vector<8x610xf32>
    %c3 = arith.constant 3 : index
    %c0_16 = arith.constant 0 : index
    %c0_17 = arith.constant 0 : index
    %17 = vector.load %arg1[%c3, %c0_16, %c0_17] : memref<9x8x8xf32, #tpu.memory_space<vmem>>, vector<1x8x8xf32>
    %18 = vector.shape_cast %17 : vector<1x8x8xf32> to vector<8x8xf32>
    %cst_18 = arith.constant dense<0.000000e+00> : vector<8x610xf32>
    %19 = tpu.matmul %18, %16, %cst_18 {dimension_numbers = #tpu.dot_dimension_numbers<[1], [0], [0], [1], [0, 0, 1, 1], [], []>} : vector<8x8xf32>, vector<8x610xf32>, vector<8x610xf32> -> vector<8x610xf32>
    %20 = arith.addf %15, %19 : vector<8x610xf32>
    %c0_19 = arith.constant 0 : index
    %c19 = arith.constant 19 : index
    %21 = vector.load %arg0[%c0_19, %c19] : memref<8x648xf32, #tpu.memory_space<vmem>>, vector<8x610xf32>
    %c4 = arith.constant 4 : index
    %c0_20 = arith.constant 0 : index
    %c0_21 = arith.constant 0 : index
    %22 = vector.load %arg1[%c4, %c0_20, %c0_21] : memref<9x8x8xf32, #tpu.memory_space<vmem>>, vector<1x8x8xf32>
    %23 = vector.shape_cast %22 : vector<1x8x8xf32> to vector<8x8xf32>
    %cst_22 = arith.constant dense<0.000000e+00> : vector<8x610xf32>
    %24 = tpu.matmul %23, %21, %cst_22 {dimension_numbers = #tpu.dot_dimension_numbers<[1], [0], [0], [1], [0, 0, 1, 1], [], []>} : vector<8x8xf32>, vector<8x610xf32>, vector<8x610xf32> -> vector<8x610xf32>
    %25 = arith.addf %20, %24 : vector<8x610xf32>
    %c0_23 = arith.constant 0 : index
    %c20 = arith.constant 20 : index
    %26 = vector.load %arg0[%c0_23, %c20] : memref<8x648xf32, #tpu.memory_space<vmem>>, vector<8x610xf32>
    %c5 = arith.constant 5 : index
    %c0_24 = arith.constant 0 : index
    %c0_25 = arith.constant 0 : index
    %27 = vector.load %arg1[%c5, %c0_24, %c0_25] : memref<9x8x8xf32, #tpu.memory_space<vmem>>, vector<1x8x8xf32>
    %28 = vector.shape_cast %27 : vector<1x8x8xf32> to vector<8x8xf32>
    %cst_26 = arith.constant dense<0.000000e+00> : vector<8x610xf32>
    %29 = tpu.matmul %28, %26, %cst_26 {dimension_numbers = #tpu.dot_dimension_numbers<[1], [0], [0], [1], [0, 0, 1, 1], [], []>} : vector<8x8xf32>, vector<8x610xf32>, vector<8x610xf32> -> vector<8x610xf32>
    %30 = arith.addf %25, %29 : vector<8x610xf32>
    %c0_27 = arith.constant 0 : index
    %c36 = arith.constant 36 : index
    %31 = vector.load %arg0[%c0_27, %c36] : memref<8x648xf32, #tpu.memory_space<vmem>>, vector<8x610xf32>
    %c6 = arith.constant 6 : index
    %c0_28 = arith.constant 0 : index
    %c0_29 = arith.constant 0 : index
    %32 = vector.load %arg1[%c6, %c0_28, %c0_29] : memref<9x8x8xf32, #tpu.memory_space<vmem>>, vector<1x8x8xf32>
    %33 = vector.shape_cast %32 : vector<1x8x8xf32> to vector<8x8xf32>
    %cst_30 = arith.constant dense<0.000000e+00> : vector<8x610xf32>
    %34 = tpu.matmul %33, %31, %cst_30 {dimension_numbers = #tpu.dot_dimension_numbers<[1], [0], [0], [1], [0, 0, 1, 1], [], []>} : vector<8x8xf32>, vector<8x610xf32>, vector<8x610xf32> -> vector<8x610xf32>
    %35 = arith.addf %30, %34 : vector<8x610xf32>
    %c0_31 = arith.constant 0 : index
    %c37 = arith.constant 37 : index
    %36 = vector.load %arg0[%c0_31, %c37] : memref<8x648xf32, #tpu.memory_space<vmem>>, vector<8x610xf32>
    %c7 = arith.constant 7 : index
    %c0_32 = arith.constant 0 : index
    %c0_33 = arith.constant 0 : index
    %37 = vector.load %arg1[%c7, %c0_32, %c0_33] : memref<9x8x8xf32, #tpu.memory_space<vmem>>, vector<1x8x8xf32>
    %38 = vector.shape_cast %37 : vector<1x8x8xf32> to vector<8x8xf32>
    %cst_34 = arith.constant dense<0.000000e+00> : vector<8x610xf32>
    %39 = tpu.matmul %38, %36, %cst_34 {dimension_numbers = #tpu.dot_dimension_numbers<[1], [0], [0], [1], [0, 0, 1, 1], [], []>} : vector<8x8xf32>, vector<8x610xf32>, vector<8x610xf32> -> vector<8x610xf32>
    %40 = arith.addf %35, %39 : vector<8x610xf32>
    %c0_35 = arith.constant 0 : index
    %c38 = arith.constant 38 : index
    %41 = vector.load %arg0[%c0_35, %c38] : memref<8x648xf32, #tpu.memory_space<vmem>>, vector<8x610xf32>
    %c8 = arith.constant 8 : index
    %c0_36 = arith.constant 0 : index
    %c0_37 = arith.constant 0 : index
    %42 = vector.load %arg1[%c8, %c0_36, %c0_37] : memref<9x8x8xf32, #tpu.memory_space<vmem>>, vector<1x8x8xf32>
    %43 = vector.shape_cast %42 : vector<1x8x8xf32> to vector<8x8xf32>
    %cst_38 = arith.constant dense<0.000000e+00> : vector<8x610xf32>
    %44 = tpu.matmul %43, %41, %cst_38 {dimension_numbers = #tpu.dot_dimension_numbers<[1], [0], [0], [1], [0, 0, 1, 1], [], []>} : vector<8x8xf32>, vector<8x610xf32>, vector<8x610xf32> -> vector<8x610xf32>
    %45 = arith.addf %40, %44 : vector<8x610xf32>
    %c0_39 = arith.constant 0 : index
    %c0_40 = arith.constant 0 : index
    %46 = vector.load %arg4[%c0_39, %c0_40] : memref<1x610xf32, #tpu.memory_space<vmem>>, vector<1x610xf32>
    %c0_41 = arith.constant 0 : index
    %c0_42 = arith.constant 0 : index
    %47 = vector.load %arg2[%c0_41, %c0_42] : memref<8x1xf32, #tpu.memory_space<vmem>>, vector<8x1xf32>
    %48 = vector.broadcast %47 : vector<8x1xf32> to vector<8x610xf32>
    %49 = arith.addf %45, %48 : vector<8x610xf32>
    %cst_43 = arith.constant 0.000000e+00 : f32
    %50 = vector.broadcast %cst_43 : f32 to vector<8x610xf32>
    %51 = arith.maximumf %49, %50 : vector<8x610xf32>
    %52 = vector.broadcast %46 : vector<1x610xf32> to vector<8x610xf32>
    %53 = arith.mulf %51, %52 : vector<8x610xf32>
    %cst_44 = arith.constant 0.000000e+00 : f32
    %54 = vector.broadcast %cst_44 : f32 to vector<8x648xf32>
    %c0_45 = arith.constant 0 : index
    %c0_46 = arith.constant 0 : index
    %55 = vector.load %arg5[%c0_45, %c0_46] : memref<8x648xf32, #tpu.memory_space<vmem>>, vector<8x648xf32>
    tpu.vector_store %arg5[%c0_45, %c0_46], %54 {strides = array<i32>} : memref<8x648xf32, #tpu.memory_space<vmem>>, vector<8x648xf32>,
    %c0_47 = arith.constant 0 : index
    %c19_48 = arith.constant 19 : index
    %56 = vector.load %arg5[%c0_47, %c19_48] : memref<8x648xf32, #tpu.memory_space<vmem>>, vector<8x610xf32>
    tpu.vector_store %arg5[%c0_47, %c19_48], %53 {strides = array<i32>} : memref<8x648xf32, #tpu.memory_space<vmem>>, vector<8x610xf32>,
    return
  }
}

</mosaic_0001>

<llo_original>
// kernel: double_module_forward.3
$region0: #{double_module_forward.3}
  #allocation0 [shape = 'u32[]', space=smem, size = 0x4, offset = 0x4, fixed_abs, tag = 'smem constant byte address 0x4 - core index']
  #allocation1 [shape = 'u32[144,128]{1,0:T(1,128)}', space=vmem, size = 0x12000, scoped, tag = 'internal scratch']
  %s0 = inlined_call_operand.vmem [shape: f32[8,648], index: 0, kind: input, shape index: {}]
  %s1 = inlined_call_operand.vmem [shape: f32[9,8,8], index: 1, kind: input, shape index: {}]
  %s2 = inlined_call_operand.vmem [shape: f32[8,1], index: 2, kind: input, shape index: {}]
  %s3 = inlined_call_operand.vmem [shape: f32[8,1], index: 3, kind: input, shape index: {}]
  %s4 = inlined_call_operand.vmem [shape: f32[1,610], index: 4, kind: input, shape index: {}]
  %s5 = inlined_call_operand.vmem [shape: f32[8,648], index: 5, kind: output, shape index: {}]
  %s6 = sld [smem:[#allocation0]]
  $region30: #{double_module_forward.3} parent=0
    _
  %s8 = ssub.s32 1, %s6
  %s9 = scalar_select 0, %s8, %s6
  // Predicated region
  $region2: #{double_module_forward.3} parent=0 // pred_check
    _
  $region3: #{double_module_forward.3} parent=0 // pred_check_branch
    %11 = sbr.rel (0) target = $region5
  $region4: #{double_module_forward.3} parent=0 // pred_region
    _
  $region5: #{double_module_forward.3} parent=0 // pred_fallthru
    _
  // Predicated region
  $region6: #{double_module_forward.3} parent=0 // pred_check
    _
  $region7: #{double_module_forward.3} parent=0 // pred_check_branch
    %13 = sbr.rel (0) target = $region9
  $region8: #{double_module_forward.3} parent=0 // pred_region
    _
  $region9: #{double_module_forward.3} parent=0 // pred_fallthru
    _
  // Predicated region
  $region10: #{double_module_forward.3} parent=0 // pred_check
    _
  $region11: #{double_module_forward.3} parent=0 // pred_check_branch
    %15 = sbr.rel (0) target = $region13
  $region12: #{double_module_forward.3} parent=0 // pred_region
    _
  $region13: #{double_module_forward.3} parent=0 // pred_fallthru
    _
  // Predicated region
  $region14: #{double_module_forward.3} parent=0 // pred_check
    _
  $region15: #{double_module_forward.3} parent=0 // pred_check_branch
    %17 = sbr.rel (0) target = $region17
  $region16: #{double_module_forward.3} parent=0 // pred_region
    _
  $region17: #{double_module_forward.3} parent=0 // pred_fallthru
    _
  // Predicated region
  $region18: #{double_module_forward.3} parent=0 // pred_check
    _
  $region19: #{double_module_forward.3} parent=0 // pred_check_branch
    %19 = sbr.rel (0) target = $region21
  $region20: #{double_module_forward.3} parent=0 // pred_region
    _
  $region21: #{double_module_forward.3} parent=0 // pred_fallthru
    _
  %v20 = vld [vmem:[%s0] sm:$0xff]
  %v21 = vld [vmem:[%s0 + $0x8] sm:$0xff]
  %v22 = vld [vmem:[%s0 + $0x10] sm:$0xff]
  %v23 = vld [vmem:[%s0 + $0x18] sm:$0xff]
  %v24 = vld [vmem:[%s0 + $0x20] sm:$0xff]
  %v25 = vld [vmem:[%s1] sm:$0xff]
  %s26 = scalar_lea.vmem %s1, 8
  %v27 = vld [vmem:[%s26] sm:$0xff]
  %33 = vrot.lane.b32.xlu0 %v20, 127
  %v34 = vpop.permute.xlu0 %33
  %35 = vrot.lane.b32.xlu0 %v21, 127
  %v36 = vpop.permute.xlu0 %35
  %37 = vrot.lane.b32.xlu0 %v22, 127
  %v38 = vpop.permute.xlu0 %37
  %39 = vrot.lane.b32.xlu0 %v23, 127
  %v40 = vpop.permute.xlu0 %39
  %41 = vrot.lane.b32.xlu0 %v24, 127
  %v42 = vpop.permute.xlu0 %41
  %vm43 = vcmask 1039360
  %v44 = vsel %vm43, %v34, %v36
  %v45 = vsel %vm43, %v36, %v38
  %v46 = vsel %vm43, %v38, %v40
  %v47 = vsel %vm43, %v40, %v42
  %vm53 = vcmask 64512
  %v55 = vsel %vm53, %v27, 0
  %57 = vmatprep.subr.mxu0 %v45
  %58 = vmatpush1.msra.mxu0 %v44
  %59 = vmatprep.subr.mxu0 0.0
  %60 = vmatpush1.msra.mxu0 0.0
  %61 = vmatprep.subr.mxu0 0.0
  %62 = vmatpush1.msra.mxu0 0.0
  %63 = vmatprep.subr.mxu0 0.0
  %64 = vmatpush1.msra.mxu0 0.0
  %65 = vmatprep.subr.mxu0 0.0
  %66 = vmatpush1.msra.mxu0 0.0
  %67 = vmatprep.subr.mxu0 0.0
  %68 = vmatpush1.msra.mxu0 0.0
  %69 = vmatprep.subr.mxu0 0.0
  %70 = vmatpush1.msra.mxu0 0.0
  %71 = vmatprep.subr.mxu0 0.0
  %72 = vmatpush1.msra.mxu0 0.0
  %73 = vmatprep.subr.mxu0 0.0
  %74 = vmatpush1.msra.mxu0 0.0
  %75 = vmatprep.subr.mxu0 0.0
  %76 = vmatpush1.msra.mxu0 0.0
  %77 = vmatprep.subr.mxu0 0.0
  %78 = vmatpush1.msra.mxu0 0.0
  %79 = vmatprep.subr.mxu0 0.0
  %80 = vmatpush1.msra.mxu0 0.0
  %81 = vmatprep.subr.mxu0 0.0
  %82 = vmatpush1.msra.mxu0 0.0
  %83 = vmatprep.subr.mxu0 0.0
  %84 = vmatpush1.msra.mxu0 0.0
  %85 = vmatprep.subr.mxu0 0.0
  %86 = vmatpush1.msra.mxu0 0.0
  %87 = vmatprep.subr.mxu0 0.0
  %88 = vmatpush1.msra.mxu0 0.0
  %89 = vmatprep.subr.mxu0 0.0
  %90 = vmatpush1.msra.mxu0 0.0
  %91 = vmatprep.subr.mxu0 0.0
  %92 = vmatpush1.msra.mxu0 0.0
  %93 = vmatprep.subr.mxu0 0.0
  %94 = vmatpush1.msra.mxu0 0.0
  %95 = vmatprep.subr.mxu0 0.0
  %96 = vmatpush1.msra.mxu0 0.0
  %97 = vmatprep.subr.mxu0 0.0
  %98 = vmatpush1.msra.mxu0 0.0
  %99 = vmatprep.subr.mxu0 0.0
  %100 = vmatpush1.msra.mxu0 0.0
  %101 = vmatprep.subr.mxu0 0.0
  %102 = vmatpush1.msra.mxu0 0.0
  %103 = vmatprep.subr.mxu0 0.0
  %104 = vmatpush1.msra.mxu0 0.0
  %105 = vmatprep.subr.mxu0 0.0
  %106 = vmatpush1.msra.mxu0 0.0
  %107 = vmatprep.subr.mxu0 0.0
  %108 = vmatpush1.msra.mxu0 0.0
  %109 = vmatprep.subr.mxu0 0.0
  %110 = vmatpush1.msra.mxu0 0.0
  %111 = vmatprep.subr.mxu0 0.0
  %112 = vmatpush1.msra.mxu0 0.0
  %113 = vmatprep.subr.mxu0 0.0
  %114 = vmatpush1.msra.mxu0 0.0
  %115 = vmatprep.subr.mxu0 0.0
  %116 = vmatpush1.msra.mxu0 0.0
  %117 = vmatprep.subr.mxu0 0.0
  %118 = vmatpush1.msra.mxu0 0.0
  %119 = vmatprep.subr.mxu0 0.0
  %120 = vmatpush1.msra.mxu0 0.0
  %121 = vmatprep.mubr.f32.mxu0 0.0
  %122 = vmatmul.mubr.f32.gmra.mrb[0].mxu0 %v55
  %v123 = vpop.f32.mrb[0].mxu0
  %v124 = vadd.f32 0.0, %v123
  %v125 = vpop.f32.mrb[0].mxu0
  %v126 = vadd.f32 0.0, %v125
  %127 = vdwg.mxu0
  %128 = vmatprep.subr.mxu0 %v47
  %129 = vmatpush1.msra.mxu0 %v46
  %130 = vmatprep.subr.mxu0 0.0
  %131 = vmatpush1.msra.mxu0 0.0
  %132 = vmatprep.subr.mxu0 0.0
  %133 = vmatpush1.msra.mxu0 0.0
  %134 = vmatprep.subr.mxu0 0.0
  %135 = vmatpush1.msra.mxu0 0.0
  %136 = vmatprep.subr.mxu0 0.0
  %137 = vmatpush1.msra.mxu0 0.0
  %138 = vmatprep.subr.mxu0 0.0
  %139 = vmatpush1.msra.mxu0 0.0
  %140 = vmatprep.subr.mxu0 0.0
  %141 = vmatpush1.msra.mxu0 0.0
  %142 = vmatprep.subr.mxu0 0.0
  %143 = vmatpush1.msra.mxu0 0.0
  %144 = vmatprep.subr.mxu0 0.0
  %145 = vmatpush1.msra.mxu0 0.0
  %146 = vmatprep.subr.mxu0 0.0
  %147 = vmatpush1.msra.mxu0 0.0
  %148 = vmatprep.subr.mxu0 0.0
  %149 = vmatpush1.msra.mxu0 0.0
  %150 = vmatprep.subr.mxu0 0.0
  %151 = vmatpush1.msra.mxu0 0.0
  %152 = vmatprep.subr.mxu0 0.0
  %153 = vmatpush1.msra.mxu0 0.0
  %154 = vmatprep.subr.mxu0 0.0
  %155 = vmatpush1.msra.mxu0 0.0
  %156 = vmatprep.subr.mxu0 0.0
  %157 = vmatpush1.msra.mxu0 0.0
  %158 = vmatprep.subr.mxu0 0.0
  %159 = vmatpush1.msra.mxu0 0.0
  %160 = vmatprep.subr.mxu0 0.0
  %161 = vmatpush1.msra.mxu0 0.0
  %162 = vmatprep.subr.mxu0 0.0
  %163 = vmatpush1.msra.mxu0 0.0
  %164 = vmatprep.subr.mxu0 0.0
  %165 = vmatpush1.msra.mxu0 0.0
  %166 = vmatprep.subr.mxu0 0.0
  %167 = vmatpush1.msra.mxu0 0.0
  %168 = vmatprep.subr.mxu0 0.0
  %169 = vmatpush1.msra.mxu0 0.0
  %170 = vmatprep.subr.mxu0 0.0
  %171 = vmatpush1.msra.mxu0 0.0
  %172 = vmatprep.subr.mxu0 0.0
  %173 = vmatpush1.msra.mxu0 0.0
  %174 = vmatprep.subr.mxu0 0.0
  %175 = vmatpush1.msra.mxu0 0.0
  %176 = vmatprep.subr.mxu0 0.0
  %177 = vmatpush1.msra.mxu0 0.0
  %178 = vmatprep.subr.mxu0 0.0
  %179 = vmatpush1.msra.mxu0 0.0
  %180 = vmatprep.subr.mxu0 0.0
  %181 = vmatpush1.msra.mxu0 0.0
  %182 = vmatprep.subr.mxu0 0.0
  %183 = vmatpush1.msra.mxu0 0.0
  %184 = vmatprep.subr.mxu0 0.0
  %185 = vmatpush1.msra.mxu0 0.0
  %186 = vmatprep.subr.mxu0 0.0
  %187 = vmatpush1.msra.mxu0 0.0
  %188 = vmatprep.subr.mxu0 0.0
  %189 = vmatpush1.msra.mxu0 0.0
  %190 = vmatprep.subr.mxu0 0.0
  %191 = vmatpush1.msra.mxu0 0.0
  %192 = vmatprep.mubr.f32.mxu0 0.0
  %193 = vmatmul.mubr.f32.gmra.mrb[0].mxu0 %v55
  %v194 = vpop.f32.mrb[0].mxu0
  %v195 = vadd.f32 0.0, %v194
  %v196 = vpop.f32.mrb[0].mxu0
  %v197 = vadd.f32 0.0, %v196
  %198 = vdwg.mxu0
  %199 = vmatprep.subr.mxu0 0.0
  %200 = vmatpush1.msra.mxu0 %v42
  %201 = vmatprep.subr.mxu0 0.0
  %202 = vmatpush1.msra.mxu0 0.0
  %203 = vmatprep.subr.mxu0 0.0
  %204 = vmatpush1.msra.mxu0 0.0
  %205 = vmatprep.subr.mxu0 0.0
  %206 = vmatpush1.msra.mxu0 0.0
  %207 = vmatprep.subr.mxu0 0.0
  %208 = vmatpush1.msra.mxu0 0.0
  %209 = vmatprep.subr.mxu0 0.0
  %210 = vmatpush1.msra.mxu0 0.0
  %211 = vmatprep.subr.mxu0 0.0
  %212 = vmatpush1.msra.mxu0 0.0
  %213 = vmatprep.subr.mxu0 0.0
  %214 = vmatpush1.msra.mxu0 0.0
  %215 = vmatprep.subr.mxu0 0.0
  %216 = vmatpush1.msra.mxu0 0.0
  %217 = vmatprep.subr.mxu0 0.0
  %218 = vmatpush1.msra.mxu0 0.0
  %219 = vmatprep.subr.mxu0 0.0
  %220 = vmatpush1.msra.mxu0 0.0
  %221 = vmatprep.subr.mxu0 0.0
  %222 = vmatpush1.msra.mxu0 0.0
  %223 = vmatprep.subr.mxu0 0.0
  %224 = vmatpush1.msra.mxu0 0.0
  %225 = vmatprep.subr.mxu0 0.0
  %226 = vmatpush1.msra.mxu0 0.0
  %227 = vmatprep.subr.mxu0 0.0
  %228 = vmatpush1.msra.mxu0 0.0
  %229 = vmatprep.subr.mxu0 0.0
  %230 = vmatpush1.msra.mxu0 0.0
  %231 = vmatprep.subr.mxu0 0.0
  %232 = vmatpush1.msra.mxu0 0.0
  %233 = vmatprep.subr.mxu0 0.0
  %234 = vmatpush1.msra.mxu0 0.0
  %235 = vmatprep.subr.mxu0 0.0
  %236 = vmatpush1.msra.mxu0 0.0
  %237 = vmatprep.subr.mxu0 0.0
  %238 = vmatpush1.msra.mxu0 0.0
  %239 = vmatprep.subr.mxu0 0.0
  %240 = vmatpush1.msra.mxu0 0.0
  %241 = vmatprep.subr.mxu0 0.0
  %242 = vmatpush1.msra.mxu0 0.0
  %243 = vmatprep.subr.mxu0 0.0
  %244 = vmatpush1.msra.mxu0 0.0
  %245 = vmatprep.subr.mxu0 0.0
  %246 = vmatpush1.msra.mxu0 0.0
  %247 = vmatprep.subr.mxu0 0.0
  %248 = vmatpush1.msra.mxu0 0.0
  %249 = vmatprep.subr.mxu0 0.0
  %250 = vmatpush1.msra.mxu0 0.0
  %251 = vmatprep.subr.mxu0 0.0
  %252 = vmatpush1.msra.mxu0 0.0
  %253 = vmatprep.subr.mxu0 0.0
  %254 = vmatpush1.msra.mxu0 0.0
  %255 = vmatprep.subr.mxu0 0.0
  %256 = vmatpush1.msra.mxu0 0.0
  %257 = vmatprep.subr.mxu0 0.0
  %258 = vmatpush1.msra.mxu0 0.0
  %259 = vmatprep.subr.mxu0 0.0
  %260 = vmatpush1.msra.mxu0 0.0
  %261 = vmatprep.subr.mxu0 0.0
  %262 = vmatpush1.msra.mxu0 0.0
  %263 = vmatprep.mubr.f32.mxu0 0.0
  %264 = vmatmul.mubr.f32.gmra.mrb[0].mxu0 %v55
  %v265 = vpop.f32.mrb[0].mxu0
  %v266 = vadd.f32 0.0, %v265
  %v267 = vpop.f32.mrb[0].mxu0
  %268 = vdwg.mxu0
  %v270 = vsel %vm53, %v25, 0
  %272 = vmatprep.subr.mxu0 %v21
  %273 = vmatpush1.msra.mxu0 %v20
  %274 = vmatprep.subr.mxu0 0.0
  %275 = vmatpush1.msra.mxu0 0.0
  %276 = vmatprep.subr.mxu0 0.0
  %277 = vmatpush1.msra.mxu0 0.0
  %278 = vmatprep.subr.mxu0 0.0
  %279 = vmatpush1.msra.mxu0 0.0
  %280 = vmatprep.subr.mxu0 0.0
  %281 = vmatpush1.msra.mxu0 0.0
  %282 = vmatprep.subr.mxu0 0.0
  %283 = vmatpush1.msra.mxu0 0.0
  %284 = vmatprep.subr.mxu0 0.0
  %285 = vmatpush1.msra.mxu0 0.0
  %286 = vmatprep.subr.mxu0 0.0
  %287 = vmatpush1.msra.mxu0 0.0
  %288 = vmatprep.subr.mxu0 0.0
  %289 = vmatpush1.msra.mxu0 0.0
  %290 = vmatprep.subr.mxu0 0.0
  %291 = vmatpush1.msra.mxu0 0.0
  %292 = vmatprep.subr.mxu0 0.0
  %293 = vmatpush1.msra.mxu0 0.0
  %294 = vmatprep.subr.mxu0 0.0
  %295 = vmatpush1.msra.mxu0 0.0
  %296 = vmatprep.subr.mxu0 0.0
  %297 = vmatpush1.msra.mxu0 0.0
  %298 = vmatprep.subr.mxu0 0.0
  %299 = vmatpush1.msra.mxu0 0.0
  %300 = vmatprep.subr.mxu0 0.0
  %301 = vmatpush1.msra.mxu0 0.0
  %302 = vmatprep.subr.mxu0 0.0
  %303 = vmatpush1.msra.mxu0 0.0
  %304 = vmatprep.subr.mxu0 0.0
  %305 = vmatpush1.msra.mxu0 0.0
  %306 = vmatprep.subr.mxu0 0.0
  %307 = vmatpush1.msra.mxu0 0.0
  %308 = vmatprep.subr.mxu0 0.0
  %309 = vmatpush1.msra.mxu0 0.0
  %310 = vmatprep.subr.mxu0 0.0
  %311 = vmatpush1.msra.mxu0 0.0
  %312 = vmatprep.subr.mxu0 0.0
  %313 = vmatpush1.msra.mxu0 0.0
  %314 = vmatprep.subr.mxu0 0.0
  %315 = vmatpush1.msra.mxu0 0.0
  %316 = vmatprep.subr.mxu0 0.0
  %317 = vmatpush1.msra.mxu0 0.0
  %318 = vmatprep.subr.mxu0 0.0
  %319 = vmatpush1.msra.mxu0 0.0
  %320 = vmatprep.subr.mxu0 0.0
  %321 = vmatpush1.msra.mxu0 0.0
  %322 = vmatprep.subr.mxu0 0.0
  %323 = vmatpush1.msra.mxu0 0.0
  %324 = vmatprep.subr.mxu0 0.0
  %325 = vmatpush1.msra.mxu0 0.0
  %326 = vmatprep.subr.mxu0 0.0
  %327 = vmatpush1.msra.mxu0 0.0
  %328 = vmatprep.subr.mxu0 0.0
  %329 = vmatpush1.msra.mxu0 0.0
  %330 = vmatprep.subr.mxu0 0.0
  %331 = vmatpush1.msra.mxu0 0.0
  %332 = vmatprep.subr.mxu0 0.0
  %333 = vmatpush1.msra.mxu0 0.0
  %334 = vmatprep.subr.mxu0 0.0
  %335 = vmatpush1.msra.mxu0 0.0
  %336 = vmatprep.mubr.f32.mxu0 0.0
  %337 = vmatmul.mubr.f32.gmra.mrb[0].mxu0 %v270
  %v338 = vpop.f32.mrb[0].mxu0
  %v339 = vadd.f32 %v124, %v338
  %v340 = vpop.f32.mrb[0].mxu0
  %v341 = vadd.f32 %v126, %v340
  %342 = vdwg.mxu0
  %343 = vmatprep.subr.mxu0 %v23
  %344 = vmatpush1.msra.mxu0 %v22
  %345 = vmatprep.subr.mxu0 0.0
  %346 = vmatpush1.msra.mxu0 0.0
  %347 = vmatprep.subr.mxu0 0.0
  %348 = vmatpush1.msra.mxu0 0.0
  %349 = vmatprep.subr.mxu0 0.0
  %350 = vmatpush1.msra.mxu0 0.0
  %351 = vmatprep.subr.mxu0 0.0
  %352 = vmatpush1.msra.mxu0 0.0
  %353 = vmatprep.subr.mxu0 0.0
  %354 = vmatpush1.msra.mxu0 0.0
  %355 = vmatprep.subr.mxu0 0.0
  %356 = vmatpush1.msra.mxu0 0.0
  %357 = vmatprep.subr.mxu0 0.0
  %358 = vmatpush1.msra.mxu0 0.0
  %359 = vmatprep.subr.mxu0 0.0
  %360 = vmatpush1.msra.mxu0 0.0
  %361 = vmatprep.subr.mxu0 0.0
  %362 = vmatpush1.msra.mxu0 0.0
  %363 = vmatprep.subr.mxu0 0.0
  %364 = vmatpush1.msra.mxu0 0.0
  %365 = vmatprep.subr.mxu0 0.0
  %366 = vmatpush1.msra.mxu0 0.0
  %367 = vmatprep.subr.mxu0 0.0
  %368 = vmatpush1.msra.mxu0 0.0
  %369 = vmatprep.subr.mxu0 0.0
  %370 = vmatpush1.msra.mxu0 0.0
  %371 = vmatprep.subr.mxu0 0.0
  %372 = vmatpush1.msra.mxu0 0.0
  %373 = vmatprep.subr.mxu0 0.0
  %374 = vmatpush1.msra.mxu0 0.0
  %375 = vmatprep.subr.mxu0 0.0
  %376 = vmatpush1.msra.mxu0 0.0
  %377 = vmatprep.subr.mxu0 0.0
  %378 = vmatpush1.msra.mxu0 0.0
  %379 = vmatprep.subr.mxu0 0.0
  %380 = vmatpush1.msra.mxu0 0.0
  %381 = vmatprep.subr.mxu0 0.0
  %382 = vmatpush1.msra.mxu0 0.0
  %383 = vmatprep.subr.mxu0 0.0
  %384 = vmatpush1.msra.mxu0 0.0
  %385 = vmatprep.subr.mxu0 0.0
  %386 = vmatpush1.msra.mxu0 0.0
  %387 = vmatprep.subr.mxu0 0.0
  %388 = vmatpush1.msra.mxu0 0.0
  %389 = vmatprep.subr.mxu0 0.0
  %390 = vmatpush1.msra.mxu0 0.0
  %391 = vmatprep.subr.mxu0 0.0
  %392 = vmatpush1.msra.mxu0 0.0
  %393 = vmatprep.subr.mxu0 0.0
  %394 = vmatpush1.msra.mxu0 0.0
  %395 = vmatprep.subr.mxu0 0.0
  %396 = vmatpush1.msra.mxu0 0.0
  %397 = vmatprep.subr.mxu0 0.0
  %398 = vmatpush1.msra.mxu0 0.0
  %399 = vmatprep.subr.mxu0 0.0
  %400 = vmatpush1.msra.mxu0 0.0
  %401 = vmatprep.subr.mxu0 0.0
  %402 = vmatpush1.msra.mxu0 0.0
  %403 = vmatprep.subr.mxu0 0.0
  %404 = vmatpush1.msra.mxu0 0.0
  %405 = vmatprep.subr.mxu0 0.0
  %406 = vmatpush1.msra.mxu0 0.0
  %407 = vmatprep.mubr.f32.mxu0 0.0
  %408 = vmatmul.mubr.f32.gmra.mrb[0].mxu0 %v270
  %v409 = vpop.f32.mrb[0].mxu0
  %v410 = vadd.f32 %v195, %v409
  %v411 = vpop.f32.mrb[0].mxu0
  %v412 = vadd.f32 %v197, %v411
  %413 = vdwg.mxu0
  %414 = vmatprep.subr.mxu0 0.0
  %415 = vmatpush1.msra.mxu0 %v24
  %416 = vmatprep.subr.mxu0 0.0
  %417 = vmatpush1.msra.mxu0 0.0
  %418 = vmatprep.subr.mxu0 0.0
  %419 = vmatpush1.msra.mxu0 0.0
  %420 = vmatprep.subr.mxu0 0.0
  %421 = vmatpush1.msra.mxu0 0.0
  %422 = vmatprep.subr.mxu0 0.0
  %423 = vmatpush1.msra.mxu0 0.0
  %424 = vmatprep.subr.mxu0 0.0
  %425 = vmatpush1.msra.mxu0 0.0
  %426 = vmatprep.subr.mxu0 0.0
  %427 = vmatpush1.msra.mxu0 0.0
  %428 = vmatprep.subr.mxu0 0.0
  %429 = vmatpush1.msra.mxu0 0.0
  %430 = vmatprep.subr.mxu0 0.0
  %431 = vmatpush1.msra.mxu0 0.0
  %432 = vmatprep.subr.mxu0 0.0
  %433 = vmatpush1.msra.mxu0 0.0
  %434 = vmatprep.subr.mxu0 0.0
  %435 = vmatpush1.msra.mxu0 0.0
  %436 = vmatprep.subr.mxu0 0.0
  %437 = vmatpush1.msra.mxu0 0.0
  %438 = vmatprep.subr.mxu0 0.0
  %439 = vmatpush1.msra.mxu0 0.0
  %440 = vmatprep.subr.mxu0 0.0
  %441 = vmatpush1.msra.mxu0 0.0
  %442 = vmatprep.subr.mxu0 0.0
  %443 = vmatpush1.msra.mxu0 0.0
  %444 = vmatprep.subr.mxu0 0.0
  %445 = vmatpush1.msra.mxu0 0.0
  %446 = vmatprep.subr.mxu0 0.0
  %447 = vmatpush1.msra.mxu0 0.0
  %448 = vmatprep.subr.mxu0 0.0
  %449 = vmatpush1.msra.mxu0 0.0
  %450 = vmatprep.subr.mxu0 0.0
  %451 = vmatpush1.msra.mxu0 0.0
  %452 = vmatprep.subr.mxu0 0.0
  %453 = vmatpush1.msra.mxu0 0.0
  %454 = vmatprep.subr.mxu0 0.0
  %455 = vmatpush1.msra.mxu0 0.0
  %456 = vmatprep.subr.mxu0 0.0
  %457 = vmatpush1.msra.mxu0 0.0
  %458 = vmatprep.subr.mxu0 0.0
  %459 = vmatpush1.msra.mxu0 0.0
  %460 = vmatprep.subr.mxu0 0.0
  %461 = vmatpush1.msra.mxu0 0.0
  %462 = vmatprep.subr.mxu0 0.0
  %463 = vmatpush1.msra.mxu0 0.0
  %464 = vmatprep.subr.mxu0 0.0
  %465 = vmatpush1.msra.mxu0 0.0
  %466 = vmatprep.subr.mxu0 0.0
  %467 = vmatpush1.msra.mxu0 0.0
  %468 = vmatprep.subr.mxu0 0.0
  %469 = vmatpush1.msra.mxu0 0.0
  %470 = vmatprep.subr.mxu0 0.0
  %471 = vmatpush1.msra.mxu0 0.0
  %472 = vmatprep.subr.mxu0 0.0
  %473 = vmatpush1.msra.mxu0 0.0
  %474 = vmatprep.subr.mxu0 0.0
  %475 = vmatpush1.msra.mxu0 0.0
  %476 = vmatprep.subr.mxu0 0.0
  %477 = vmatpush1.msra.mxu0 0.0
  %478 = vmatprep.mubr.f32.mxu0 0.0
  %479 = vmatmul.mubr.f32.gmra.mrb[0].mxu0 %v270
  %v480 = vpop.f32.mrb[0].mxu0
  %v481 = vadd.f32 %v266, %v480
  %v482 = vpop.f32.mrb[0].mxu0
  %483 = vdwg.mxu0
  %s484 = scalar_lea.vmem %s1, 16
  %v485 = vld [vmem:[%s484] sm:$0xff]
  %486 = vrot.lane.b32.xlu0 %v20, 126
  %v487 = vpop.permute.xlu0 %486
  %488 = vrot.lane.b32.xlu0 %v21, 126
  %v489 = vpop.permute.xlu0 %488
  %490 = vrot.lane.b32.xlu0 %v22, 126
  %v491 = vpop.permute.xlu0 %490
  %492 = vrot.lane.b32.xlu0 %v23, 126
  %v493 = vpop.permute.xlu0 %492
  %494 = vrot.lane.b32.xlu0 %v24, 126
  %v495 = vpop.permute.xlu0 %494
  %vm496 = vcmask 1031168
  %v497 = vsel %vm496, %v487, %v489
  %v498 = vsel %vm496, %v489, %v491
  %v499 = vsel %vm496, %v491, %v493
  %v500 = vsel %vm496, %v493, %v495
  %v507 = vsel %vm53, %v485, 0
  %509 = vmatprep.subr.mxu0 %v498
  %510 = vmatpush1.msra.mxu0 %v497
  %511 = vmatprep.subr.mxu0 0.0
  %512 = vmatpush1.msra.mxu0 0.0
  %513 = vmatprep.subr.mxu0 0.0
  %514 = vmatpush1.msra.mxu0 0.0
  %515 = vmatprep.subr.mxu0 0.0
  %516 = vmatpush1.msra.mxu0 0.0
  %517 = vmatprep.subr.mxu0 0.0
  %518 = vmatpush1.msra.mxu0 0.0
  %519 = vmatprep.subr.mxu0 0.0
  %520 = vmatpush1.msra.mxu0 0.0
  %521 = vmatprep.subr.mxu0 0.0
  %522 = vmatpush1.msra.mxu0 0.0
  %523 = vmatprep.subr.mxu0 0.0
  %524 = vmatpush1.msra.mxu0 0.0
  %525 = vmatprep.subr.mxu0 0.0
  %526 = vmatpush1.msra.mxu0 0.0
  %527 = vmatprep.subr.mxu0 0.0
  %528 = vmatpush1.msra.mxu0 0.0
  %529 = vmatprep.subr.mxu0 0.0
  %530 = vmatpush1.msra.mxu0 0.0
  %531 = vmatprep.subr.mxu0 0.0
  %532 = vmatpush1.msra.mxu0 0.0
  %533 = vmatprep.subr.mxu0 0.0
  %534 = vmatpush1.msra.mxu0 0.0
  %535 = vmatprep.subr.mxu0 0.0
  %536 = vmatpush1.msra.mxu0 0.0
  %537 = vmatprep.subr.mxu0 0.0
  %538 = vmatpush1.msra.mxu0 0.0
  %539 = vmatprep.subr.mxu0 0.0
  %540 = vmatpush1.msra.mxu0 0.0
  %541 = vmatprep.subr.mxu0 0.0
  %542 = vmatpush1.msra.mxu0 0.0
  %543 = vmatprep.subr.mxu0 0.0
  %544 = vmatpush1.msra.mxu0 0.0
  %545 = vmatprep.subr.mxu0 0.0
  %546 = vmatpush1.msra.mxu0 0.0
  %547 = vmatprep.subr.mxu0 0.0
  %548 = vmatpush1.msra.mxu0 0.0
  %549 = vmatprep.subr.mxu0 0.0
  %550 = vmatpush1.msra.mxu0 0.0
  %551 = vmatprep.subr.mxu0 0.0
  %552 = vmatpush1.msra.mxu0 0.0
  %553 = vmatprep.subr.mxu0 0.0
  %554 = vmatpush1.msra.mxu0 0.0
  %555 = vmatprep.subr.mxu0 0.0
  %556 = vmatpush1.msra.mxu0 0.0
  %557 = vmatprep.subr.mxu0 0.0
  %558 = vmatpush1.msra.mxu0 0.0
  %559 = vmatprep.subr.mxu0 0.0
  %560 = vmatpush1.msra.mxu0 0.0
  %561 = vmatprep.subr.mxu0 0.0
  %562 = vmatpush1.msra.mxu0 0.0
  %563 = vmatprep.subr.mxu0 0.0
  %564 = vmatpush1.msra.mxu0 0.0
  %565 = vmatprep.subr.mxu0 0.0
  %566 = vmatpush1.msra.mxu0 0.0
  %567 = vmatprep.subr.mxu0 0.0
  %568 = vmatpush1.msra.mxu0 0.0
  %569 = vmatprep.subr.mxu0 0.0
  %570 = vmatpush1.msra.mxu0 0.0
  %571 = vmatprep.subr.mxu0 0.0
  %572 = vmatpush1.msra.mxu0 0.0
  %573 = vmatprep.mubr.f32.mxu0 0.0
  %574 = vmatmul.mubr.f32.gmra.mrb[0].mxu0 %v507
  %v575 = vpop.f32.mrb[0].mxu0
  %v576 = vadd.f32 0.0, %v575
  %v577 = vpop.f32.mrb[0].mxu0
  %v578 = vadd.f32 0.0, %v577
  %579 = vdwg.mxu0
  %580 = vmatprep.subr.mxu0 %v500
  %581 = vmatpush1.msra.mxu0 %v499
  %582 = vmatprep.subr.mxu0 0.0
  %583 = vmatpush1.msra.mxu0 0.0
  %584 = vmatprep.subr.mxu0 0.0
  %585 = vmatpush1.msra.mxu0 0.0
  %586 = vmatprep.subr.mxu0 0.0
  %587 = vmatpush1.msra.mxu0 0.0
  %588 = vmatprep.subr.mxu0 0.0
  %589 = vmatpush1.msra.mxu0 0.0
  %590 = vmatprep.subr.mxu0 0.0
  %591 = vmatpush1.msra.mxu0 0.0
  %592 = vmatprep.subr.mxu0 0.0
  %593 = vmatpush1.msra.mxu0 0.0
  %594 = vmatprep.subr.mxu0 0.0
  %595 = vmatpush1.msra.mxu0 0.0
  %596 = vmatprep.subr.mxu0 0.0
  %597 = vmatpush1.msra.mxu0 0.0
  %598 = vmatprep.subr.mxu0 0.0
  %599 = vmatpush1.msra.mxu0 0.0
  %600 = vmatprep.subr.mxu0 0.0
  %601 = vmatpush1.msra.mxu0 0.0
  %602 = vmatprep.subr.mxu0 0.0
  %603 = vmatpush1.msra.mxu0 0.0
  %604 = vmatprep.subr.mxu0 0.0
  %605 = vmatpush1.msra.mxu0 0.0
  %606 = vmatprep.subr.mxu0 0.0
  %607 = vmatpush1.msra.mxu0 0.0
  %608 = vmatprep.subr.mxu0 0.0
  %609 = vmatpush1.msra.mxu0 0.0
  %610 = vmatprep.subr.mxu0 0.0
  %611 = vmatpush1.msra.mxu0 0.0
  %612 = vmatprep.subr.mxu0 0.0
  %613 = vmatpush1.msra.mxu0 0.0
  %614 = vmatprep.subr.mxu0 0.0
  %615 = vmatpush1.msra.mxu0 0.0
  %616 = vmatprep.subr.mxu0 0.0
  %617 = vmatpush1.msra.mxu0 0.0
  %618 = vmatprep.subr.mxu0 0.0
  %619 = vmatpush1.msra.mxu0 0.0
  %620 = vmatprep.subr.mxu0 0.0
  %621 = vmatpush1.msra.mxu0 0.0
  %622 = vmatprep.subr.mxu0 0.0
  %623 = vmatpush1.msra.mxu0 0.0
  %624 = vmatprep.subr.mxu0 0.0
  %625 = vmatpush1.msra.mxu0 0.0
  %626 = vmatprep.subr.mxu0 0.0
  %627 = vmatpush1.msra.mxu0 0.0
  %628 = vmatprep.subr.mxu0 0.0
  %629 = vmatpush1.msra.mxu0 0.0
  %630 = vmatprep.subr.mxu0 0.0
  %631 = vmatpush1.msra.mxu0 0.0
  %632 = vmatprep.subr.mxu0 0.0
  %633 = vmatpush1.msra.mxu0 0.0
  %634 = vmatprep.subr.mxu0 0.0
  %635 = vmatpush1.msra.mxu0 0.0
  %636 = vmatprep.subr.mxu0 0.0
  %637 = vmatpush1.msra.mxu0 0.0
  %638 = vmatprep.subr.mxu0 0.0
  %639 = vmatpush1.msra.mxu0 0.0
  %640 = vmatprep.subr.mxu0 0.0
  %641 = vmatpush1.msra.mxu0 0.0
  %642 = vmatprep.subr.mxu0 0.0
  %643 = vmatpush1.msra.mxu0 0.0
  %644 = vmatprep.mubr.f32.mxu0 0.0
  %645 = vmatmul.mubr.f32.gmra.mrb[0].mxu0 %v507
  %v646 = vpop.f32.mrb[0].mxu0
  %v647 = vadd.f32 0.0, %v646
  %v648 = vpop.f32.mrb[0].mxu0
  %v649 = vadd.f32 0.0, %v648
  %650 = vdwg.mxu0
  %651 = vmatprep.subr.mxu0 0.0
  %652 = vmatpush1.msra.mxu0 %v495
  %653 = vmatprep.subr.mxu0 0.0
  %654 = vmatpush1.msra.mxu0 0.0
  %655 = vmatprep.subr.mxu0 0.0
  %656 = vmatpush1.msra.mxu0 0.0
  %657 = vmatprep.subr.mxu0 0.0
  %658 = vmatpush1.msra.mxu0 0.0
  %659 = vmatprep.subr.mxu0 0.0
  %660 = vmatpush1.msra.mxu0 0.0
  %661 = vmatprep.subr.mxu0 0.0
  %662 = vmatpush1.msra.mxu0 0.0
  %663 = vmatprep.subr.mxu0 0.0
  %664 = vmatpush1.msra.mxu0 0.0
  %665 = vmatprep.subr.mxu0 0.0
  %666 = vmatpush1.msra.mxu0 0.0
  %667 = vmatprep.subr.mxu0 0.0
  %668 = vmatpush1.msra.mxu0 0.0
  %669 = vmatprep.subr.mxu0 0.0
  %670 = vmatpush1.msra.mxu0 0.0
  %671 = vmatprep.subr.mxu0 0.0
  %672 = vmatpush1.msra.mxu0 0.0
  %673 = vmatprep.subr.mxu0 0.0
  %674 = vmatpush1.msra.mxu0 0.0
  %675 = vmatprep.subr.mxu0 0.0
  %676 = vmatpush1.msra.mxu0 0.0
  %677 = vmatprep.subr.mxu0 0.0
  %678 = vmatpush1.msra.mxu0 0.0
  %679 = vmatprep.subr.mxu0 0.0
  %680 = vmatpush1.msra.mxu0 0.0
  %681 = vmatprep.subr.mxu0 0.0
  %682 = vmatpush1.msra.mxu0 0.0
  %683 = vmatprep.subr.mxu0 0.0
  %684 = vmatpush1.msra.mxu0 0.0
  %685 = vmatprep.subr.mxu0 0.0
  %686 = vmatpush1.msra.mxu0 0.0
  %687 = vmatprep.subr.mxu0 0.0
  %688 = vmatpush1.msra.mxu0 0.0
  %689 = vmatprep.subr.mxu0 0.0
  %690 = vmatpush1.msra.mxu0 0.0
  %691 = vmatprep.subr.mxu0 0.0
  %692 = vmatpush1.msra.mxu0 0.0
  %693 = vmatprep.subr.mxu0 0.0
  %694 = vmatpush1.msra.mxu0 0.0
  %695 = vmatprep.subr.mxu0 0.0
  %696 = vmatpush1.msra.mxu0 0.0
  %697 = vmatprep.subr.mxu0 0.0
  %698 = vmatpush1.msra.mxu0 0.0
  %699 = vmatprep.subr.mxu0 0.0
  %700 = vmatpush1.msra.mxu0 0.0
  %701 = vmatprep.subr.mxu0 0.0
  %702 = vmatpush1.msra.mxu0 0.0
  %703 = vmatprep.subr.mxu0 0.0
  %704 = vmatpush1.msra.mxu0 0.0
  %705 = vmatprep.subr.mxu0 0.0
  %706 = vmatpush1.msra.mxu0 0.0
  %707 = vmatprep.subr.mxu0 0.0
  %708 = vmatpush1.msra.mxu0 0.0
  %709 = vmatprep.subr.mxu0 0.0
  %710 = vmatpush1.msra.mxu0 0.0
  %711 = vmatprep.subr.mxu0 0.0
  %712 = vmatpush1.msra.mxu0 0.0
  %713 = vmatprep.subr.mxu0 0.0
  %714 = vmatpush1.msra.mxu0 0.0
  %715 = vmatprep.mubr.f32.mxu0 0.0
  %716 = vmatmul.mubr.f32.gmra.mrb[0].mxu0 %v507
  %v717 = vpop.f32.mrb[0].mxu0
  %v718 = vadd.f32 0.0, %v717
  %v719 = vpop.f32.mrb[0].mxu0
  %720 = vdwg.mxu0
  %v721 = vadd.f32 %v339, %v576
  %v722 = vadd.f32 %v341, %v578
  %v723 = vadd.f32 %v410, %v647
  %v724 = vadd.f32 %v412, %v649
  %v725 = vadd.f32 %v481, %v718
  %s726 = scalar_lea.vmem %s1, 24
  %v727 = vld [vmem:[%s726] sm:$0xff]
  %728 = vrot.lane.b32.xlu0 %v20, 110
  %v729 = vpop.permute.xlu0 %728
  %730 = vrot.lane.b32.xlu0 %v21, 110
  %v731 = vpop.permute.xlu0 %730
  %732 = vrot.lane.b32.xlu0 %v22, 110
  %v733 = vpop.permute.xlu0 %732
  %734 = vrot.lane.b32.xlu0 %v23, 110
  %v735 = vpop.permute.xlu0 %734
  %736 = vrot.lane.b32.xlu0 %v24, 110
  %v737 = vpop.permute.xlu0 %736
  %vm738 = vcmask 900096
  %v739 = vsel %vm738, %v729, %v731
  %v740 = vsel %vm738, %v731, %v733
  %v741 = vsel %vm738, %v733, %v735
  %v742 = vsel %vm738, %v735, %v737
  %v749 = vsel %vm53, %v727, 0
  %751 = vmatprep.subr.mxu0 %v740
  %752 = vmatpush1.msra.mxu0 %v739
  %753 = vmatprep.subr.mxu0 0.0
  %754 = vmatpush1.msra.mxu0 0.0
  %755 = vmatprep.subr.mxu0 0.0
  %756 = vmatpush1.msra.mxu0 0.0
  %757 = vmatprep.subr.mxu0 0.0
  %758 = vmatpush1.msra.mxu0 0.0
  %759 = vmatprep.subr.mxu0 0.0
  %760 = vmatpush1.msra.mxu0 0.0
  %761 = vmatprep.subr.mxu0 0.0
  %762 = vmatpush1.msra.mxu0 0.0
  %763 = vmatprep.subr.mxu0 0.0
  %764 = vmatpush1.msra.mxu0 0.0
  %765 = vmatprep.subr.mxu0 0.0
  %766 = vmatpush1.msra.mxu0 0.0
  %767 = vmatprep.subr.mxu0 0.0
  %768 = vmatpush1.msra.mxu0 0.0
  %769 = vmatprep.subr.mxu0 0.0
  %770 = vmatpush1.msra.mxu0 0.0
  %771 = vmatprep.subr.mxu0 0.0
  %772 = vmatpush1.msra.mxu0 0.0
  %773 = vmatprep.subr.mxu0 0.0
  %774 = vmatpush1.msra.mxu0 0.0
  %775 = vmatprep.subr.mxu0 0.0
  %776 = vmatpush1.msra.mxu0 0.0
  %777 = vmatprep.subr.mxu0 0.0
  %778 = vmatpush1.msra.mxu0 0.0
  %779 = vmatprep.subr.mxu0 0.0
  %780 = vmatpush1.msra.mxu0 0.0
  %781 = vmatprep.subr.mxu0 0.0
  %782 = vmatpush1.msra.mxu0 0.0
  %783 = vmatprep.subr.mxu0 0.0
  %784 = vmatpush1.msra.mxu0 0.0
  %785 = vmatprep.subr.mxu0 0.0
  %786 = vmatpush1.msra.mxu0 0.0
  %787 = vmatprep.subr.mxu0 0.0
  %788 = vmatpush1.msra.mxu0 0.0
  %789 = vmatprep.subr.mxu0 0.0
  %790 = vmatpush1.msra.mxu0 0.0
  %791 = vmatprep.subr.mxu0 0.0
  %792 = vmatpush1.msra.mxu0 0.0
  %793 = vmatprep.subr.mxu0 0.0
  %794 = vmatpush1.msra.mxu0 0.0
  %795 = vmatprep.subr.mxu0 0.0
  %796 = vmatpush1.msra.mxu0 0.0
  %797 = vmatprep.subr.mxu0 0.0
  %798 = vmatpush1.msra.mxu0 0.0
  %799 = vmatprep.subr.mxu0 0.0
  %800 = vmatpush1.msra.mxu0 0.0
  %801 = vmatprep.subr.mxu0 0.0
  %802 = vmatpush1.msra.mxu0 0.0
  %803 = vmatprep.subr.mxu0 0.0
  %804 = vmatpush1.msra.mxu0 0.0
  %805 = vmatprep.subr.mxu0 0.0
  %806 = vmatpush1.msra.mxu0 0.0
  %807 = vmatprep.subr.mxu0 0.0
  %808 = vmatpush1.msra.mxu0 0.0
  %809 = vmatprep.subr.mxu0 0.0
  %810 = vmatpush1.msra.mxu0 0.0
  %811 = vmatprep.subr.mxu0 0.0
  %812 = vmatpush1.msra.mxu0 0.0
  %813 = vmatprep.subr.mxu0 0.0
  %814 = vmatpush1.msra.mxu0 0.0
  %815 = vmatprep.mubr.f32.mxu0 0.0
  %816 = vmatmul.mubr.f32.gmra.mrb[0].mxu0 %v749
  %v817 = vpop.f32.mrb[0].mxu0
  %v818 = vadd.f32 0.0, %v817
  %v819 = vpop.f32.mrb[0].mxu0
  %v820 = vadd.f32 0.0, %v819
  %821 = vdwg.mxu0
  %822 = vmatprep.subr.mxu0 %v742
  %823 = vmatpush1.msra.mxu0 %v741
  %824 = vmatprep.subr.mxu0 0.0
  %825 = vmatpush1.msra.mxu0 0.0
  %826 = vmatprep.subr.mxu0 0.0
  %827 = vmatpush1.msra.mxu0 0.0
  %828 = vmatprep.subr.mxu0 0.0
  %829 = vmatpush1.msra.mxu0 0.0
  %830 = vmatprep.subr.mxu0 0.0
  %831 = vmatpush1.msra.mxu0 0.0
  %832 = vmatprep.subr.mxu0 0.0
  %833 = vmatpush1.msra.mxu0 0.0
  %834 = vmatprep.subr.mxu0 0.0
  %835 = vmatpush1.msra.mxu0 0.0
  %836 = vmatprep.subr.mxu0 0.0
  %837 = vmatpush1.msra.mxu0 0.0
  %838 = vmatprep.subr.mxu0 0.0
  %839 = vmatpush1.msra.mxu0 0.0
  %840 = vmatprep.subr.mxu0 0.0
  %841 = vmatpush1.msra.mxu0 0.0
  %842 = vmatprep.subr.mxu0 0.0
  %843 = vmatpush1.msra.mxu0 0.0
  %844 = vmatprep.subr.mxu0 0.0
  %845 = vmatpush1.msra.mxu0 0.0
  %846 = vmatprep.subr.mxu0 0.0
  %847 = vmatpush1.msra.mxu0 0.0
  %848 = vmatprep.subr.mxu0 0.0
  %849 = vmatpush1.msra.mxu0 0.0
  %850 = vmatprep.subr.mxu0 0.0
  %851 = vmatpush1.msra.mxu0 0.0
  %852 = vmatprep.subr.mxu0 0.0
  %853 = vmatpush1.msra.mxu0 0.0
  %854 = vmatprep.subr.mxu0 0.0
  %855 = vmatpush1.msra.mxu0 0.0
  %856 = vmatprep.subr.mxu0 0.0
  %857 = vmatpush1.msra.mxu0 0.0
  %858 = vmatprep.subr.mxu0 0.0
  %859 = vmatpush1.msra.mxu0 0.0
  %860 = vmatprep.subr.mxu0 0.0
  %861 = vmatpush1.msra.mxu0 0.0
  %862 = vmatprep.subr.mxu0 0.0
  %863 = vmatpush1.msra.mxu0 0.0
  %864 = vmatprep.subr.mxu0 0.0
  %865 = vmatpush1.msra.mxu0 0.0
  %866 = vmatprep.subr.mxu0 0.0
  %867 = vmatpush1.msra.mxu0 0.0
  %868 = vmatprep.subr.mxu0 0.0
  %869 = vmatpush1.msra.mxu0 0.0
  %870 = vmatprep.subr.mxu0 0.0
  %871 = vmatpush1.msra.mxu0 0.0
  %872 = vmatprep.subr.mxu0 0.0
  %873 = vmatpush1.msra.mxu0 0.0
  %874 = vmatprep.subr.mxu0 0.0
  %875 = vmatpush1.msra.mxu0 0.0
  %876 = vmatprep.subr.mxu0 0.0
  %877 = vmatpush1.msra.mxu0 0.0
  %878 = vmatprep.subr.mxu0 0.0
  %879 = vmatpush1.msra.mxu0 0.0
  %880 = vmatprep.subr.mxu0 0.0
  %881 = vmatpush1.msra.mxu0 0.0
  %882 = vmatprep.subr.mxu0 0.0
  %883 = vmatpush1.msra.mxu0 0.0
  %884 = vmatprep.subr.mxu0 0.0
  %885 = vmatpush1.msra.mxu0 0.0
  %886 = vmatprep.mubr.f32.mxu0 0.0
  %887 = vmatmul.mubr.f32.gmra.mrb[0].mxu0 %v749
  %v888 = vpop.f32.mrb[0].mxu0
  %v889 = vadd.f32 0.0, %v888
  %v890 = vpop.f32.mrb[0].mxu0
  %v891 = vadd.f32 0.0, %v890
  %892 = vdwg.mxu0
  %893 = vmatprep.subr.mxu0 0.0
  %894 = vmatpush1.msra.mxu0 %v737
  %895 = vmatprep.subr.mxu0 0.0
  %896 = vmatpush1.msra.mxu0 0.0
  %897 = vmatprep.subr.mxu0 0.0
  %898 = vmatpush1.msra.mxu0 0.0
  %899 = vmatprep.subr.mxu0 0.0
  %900 = vmatpush1.msra.mxu0 0.0
  %901 = vmatprep.subr.mxu0 0.0
  %902 = vmatpush1.msra.mxu0 0.0
  %903 = vmatprep.subr.mxu0 0.0
  %904 = vmatpush1.msra.mxu0 0.0
  %905 = vmatprep.subr.mxu0 0.0
  %906 = vmatpush1.msra.mxu0 0.0
  %907 = vmatprep.subr.mxu0 0.0
  %908 = vmatpush1.msra.mxu0 0.0
  %909 = vmatprep.subr.mxu0 0.0
  %910 = vmatpush1.msra.mxu0 0.0
  %911 = vmatprep.subr.mxu0 0.0
  %912 = vmatpush1.msra.mxu0 0.0
  %913 = vmatprep.subr.mxu0 0.0
  %914 = vmatpush1.msra.mxu0 0.0
  %915 = vmatprep.subr.mxu0 0.0
  %916 = vmatpush1.msra.mxu0 0.0
  %917 = vmatprep.subr.mxu0 0.0
  %918 = vmatpush1.msra.mxu0 0.0
  %919 = vmatprep.subr.mxu0 0.0
  %920 = vmatpush1.msra.mxu0 0.0
  %921 = vmatprep.subr.mxu0 0.0
  %922 = vmatpush1.msra.mxu0 0.0
  %923 = vmatprep.subr.mxu0 0.0
  %924 = vmatpush1.msra.mxu0 0.0
  %925 = vmatprep.subr.mxu0 0.0
  %926 = vmatpush1.msra.mxu0 0.0
  %927 = vmatprep.subr.mxu0 0.0
  %928 = vmatpush1.msra.mxu0 0.0
  %929 = vmatprep.subr.mxu0 0.0
  %930 = vmatpush1.msra.mxu0 0.0
  %931 = vmatprep.subr.mxu0 0.0
  %932 = vmatpush1.msra.mxu0 0.0
  %933 = vmatprep.subr.mxu0 0.0
  %934 = vmatpush1.msra.mxu0 0.0
  %935 = vmatprep.subr.mxu0 0.0
  %936 = vmatpush1.msra.mxu0 0.0
  %937 = vmatprep.subr.mxu0 0.0
  %938 = vmatpush1.msra.mxu0 0.0
  %939 = vmatprep.subr.mxu0 0.0
  %940 = vmatpush1.msra.mxu0 0.0
  %941 = vmatprep.subr.mxu0 0.0
  %942 = vmatpush1.msra.mxu0 0.0
  %943 = vmatprep.subr.mxu0 0.0
  %944 = vmatpush1.msra.mxu0 0.0
  %945 = vmatprep.subr.mxu0 0.0
  %946 = vmatpush1.msra.mxu0 0.0
  %947 = vmatprep.subr.mxu0 0.0
  %948 = vmatpush1.msra.mxu0 0.0
  %949 = vmatprep.subr.mxu0 0.0
  %950 = vmatpush1.msra.mxu0 0.0
  %951 = vmatprep.subr.mxu0 0.0
  %952 = vmatpush1.msra.mxu0 0.0
  %953 = vmatprep.subr.mxu0 0.0
  %954 = vmatpush1.msra.mxu0 0.0
  %955 = vmatprep.subr.mxu0 0.0
  %956 = vmatpush1.msra.mxu0 0.0
  %957 = vmatprep.mubr.f32.mxu0 0.0
  %958 = vmatmul.mubr.f32.gmra.mrb[0].mxu0 %v749
  %v959 = vpop.f32.mrb[0].mxu0
  %v960 = vadd.f32 0.0, %v959
  %v961 = vpop.f32.mrb[0].mxu0
  %962 = vdwg.mxu0
  %v963 = vadd.f32 %v721, %v818
  %v964 = vadd.f32 %v722, %v820
  %v965 = vadd.f32 %v723, %v889
  %v966 = vadd.f32 %v724, %v891
  %v967 = vadd.f32 %v725, %v960
  %s968 = scalar_lea.vmem %s1, 32
  %v969 = vld [vmem:[%s968] sm:$0xff]
  %970 = vrot.lane.b32.xlu0 %v20, 109
  %v971 = vpop.permute.xlu0 %970
  %972 = vrot.lane.b32.xlu0 %v21, 109
  %v973 = vpop.permute.xlu0 %972
  %974 = vrot.lane.b32.xlu0 %v22, 109
  %v975 = vpop.permute.xlu0 %974
  %976 = vrot.lane.b32.xlu0 %v23, 109
  %v977 = vpop.permute.xlu0 %976
  %978 = vrot.lane.b32.xlu0 %v24, 109
  %v979 = vpop.permute.xlu0 %978
  %vm980 = vcmask 891904
  %v981 = vsel %vm980, %v971, %v973
  %v982 = vsel %vm980, %v973, %v975
  %v983 = vsel %vm980, %v975, %v977
  %v984 = vsel %vm980, %v977, %v979
  %v991 = vsel %vm53, %v969, 0
  %993 = vmatprep.subr.mxu0 %v982
  %994 = vmatpush1.msra.mxu0 %v981
  %995 = vmatprep.subr.mxu0 0.0
  %996 = vmatpush1.msra.mxu0 0.0
  %997 = vmatprep.subr.mxu0 0.0
  %998 = vmatpush1.msra.mxu0 0.0
  %999 = vmatprep.subr.mxu0 0.0
  %1000 = vmatpush1.msra.mxu0 0.0
  %1001 = vmatprep.subr.mxu0 0.0
  %1002 = vmatpush1.msra.mxu0 0.0
  %1003 = vmatprep.subr.mxu0 0.0
  %1004 = vmatpush1.msra.mxu0 0.0
  %1005 = vmatprep.subr.mxu0 0.0
  %1006 = vmatpush1.msra.mxu0 0.0
  %1007 = vmatprep.subr.mxu0 0.0
  %1008 = vmatpush1.msra.mxu0 0.0
  %1009 = vmatprep.subr.mxu0 0.0
  %1010 = vmatpush1.msra.mxu0 0.0
  %1011 = vmatprep.subr.mxu0 0.0
  %1012 = vmatpush1.msra.mxu0 0.0
  %1013 = vmatprep.subr.mxu0 0.0
  %1014 = vmatpush1.msra.mxu0 0.0
  %1015 = vmatprep.subr.mxu0 0.0
  %1016 = vmatpush1.msra.mxu0 0.0
  %1017 = vmatprep.subr.mxu0 0.0
  %1018 = vmatpush1.msra.mxu0 0.0
  %1019 = vmatprep.subr.mxu0 0.0
  %1020 = vmatpush1.msra.mxu0 0.0
  %1021 = vmatprep.subr.mxu0 0.0
  %1022 = vmatpush1.msra.mxu0 0.0
  %1023 = vmatprep.subr.mxu0 0.0
  %1024 = vmatpush1.msra.mxu0 0.0
  %1025 = vmatprep.subr.mxu0 0.0
  %1026 = vmatpush1.msra.mxu0 0.0
  %1027 = vmatprep.subr.mxu0 0.0
  %1028 = vmatpush1.msra.mxu0 0.0
  %1029 = vmatprep.subr.mxu0 0.0
  %1030 = vmatpush1.msra.mxu0 0.0
  %1031 = vmatprep.subr.mxu0 0.0
  %1032 = vmatpush1.msra.mxu0 0.0
  %1033 = vmatprep.subr.mxu0 0.0
  %1034 = vmatpush1.msra.mxu0 0.0
  %1035 = vmatprep.subr.mxu0 0.0
  %1036 = vmatpush1.msra.mxu0 0.0
  %1037 = vmatprep.subr.mxu0 0.0
  %1038 = vmatpush1.msra.mxu0 0.0
  %1039 = vmatprep.subr.mxu0 0.0
  %1040 = vmatpush1.msra.mxu0 0.0
  %1041 = vmatprep.subr.mxu0 0.0
  %1042 = vmatpush1.msra.mxu0 0.0
  %1043 = vmatprep.subr.mxu0 0.0
  %1044 = vmatpush1.msra.mxu0 0.0
  %1045 = vmatprep.subr.mxu0 0.0
  %1046 = vmatpush1.msra.mxu0 0.0
  %1047 = vmatprep.subr.mxu0 0.0
  %1048 = vmatpush1.msra.mxu0 0.0
  %1049 = vmatprep.subr.mxu0 0.0
  %1050 = vmatpush1.msra.mxu0 0.0
  %1051 = vmatprep.subr.mxu0 0.0
  %1052 = vmatpush1.msra.mxu0 0.0
  %1053 = vmatprep.subr.mxu0 0.0
  %1054 = vmatpush1.msra.mxu0 0.0
  %1055 = vmatprep.subr.mxu0 0.0
  %1056 = vmatpush1.msra.mxu0 0.0
  %1057 = vmatprep.mubr.f32.mxu0 0.0
  %1058 = vmatmul.mubr.f32.gmra.mrb[0].mxu0 %v991
  %v1059 = vpop.f32.mrb[0].mxu0
  %v1060 = vadd.f32 0.0, %v1059
  %v1061 = vpop.f32.mrb[0].mxu0
  %v1062 = vadd.f32 0.0, %v1061
  %1063 = vdwg.mxu0
  %1064 = vmatprep.subr.mxu0 %v984
  %1065 = vmatpush1.msra.mxu0 %v983
  %1066 = vmatprep.subr.mxu0 0.0
  %1067 = vmatpush1.msra.mxu0 0.0
  %1068 = vmatprep.subr.mxu0 0.0
  %1069 = vmatpush1.msra.mxu0 0.0
  %1070 = vmatprep.subr.mxu0 0.0
  %1071 = vmatpush1.msra.mxu0 0.0
  %1072 = vmatprep.subr.mxu0 0.0
  %1073 = vmatpush1.msra.mxu0 0.0
  %1074 = vmatprep.subr.mxu0 0.0
  %1075 = vmatpush1.msra.mxu0 0.0
  %1076 = vmatprep.subr.mxu0 0.0
  %1077 = vmatpush1.msra.mxu0 0.0
  %1078 = vmatprep.subr.mxu0 0.0
  %1079 = vmatpush1.msra.mxu0 0.0
  %1080 = vmatprep.subr.mxu0 0.0
  %1081 = vmatpush1.msra.mxu0 0.0
  %1082 = vmatprep.subr.mxu0 0.0
  %1083 = vmatpush1.msra.mxu0 0.0
  %1084 = vmatprep.subr.mxu0 0.0
  %1085 = vmatpush1.msra.mxu0 0.0
  %1086 = vmatprep.subr.mxu0 0.0
  %1087 = vmatpush1.msra.mxu0 0.0
  %1088 = vmatprep.subr.mxu0 0.0
  %1089 = vmatpush1.msra.mxu0 0.0
  %1090 = vmatprep.subr.mxu0 0.0
  %1091 = vmatpush1.msra.mxu0 0.0
  %1092 = vmatprep.subr.mxu0 0.0
  %1093 = vmatpush1.msra.mxu0 0.0
  %1094 = vmatprep.subr.mxu0 0.0
  %1095 = vmatpush1.msra.mxu0 0.0
  %1096 = vmatprep.subr.mxu0 0.0
  %1097 = vmatpush1.msra.mxu0 0.0
  %1098 = vmatprep.subr.mxu0 0.0
  %1099 = vmatpush1.msra.mxu0 0.0
  %1100 = vmatprep.subr.mxu0 0.0
  %1101 = vmatpush1.msra.mxu0 0.0
  %1102 = vmatprep.subr.mxu0 0.0
  %1103 = vmatpush1.msra.mxu0 0.0
  %1104 = vmatprep.subr.mxu0 0.0
  %1105 = vmatpush1.msra.mxu0 0.0
  %1106 = vmatprep.subr.mxu0 0.0
  %1107 = vmatpush1.msra.mxu0 0.0
  %1108 = vmatprep.subr.mxu0 0.0
  %1109 = vmatpush1.msra.mxu0 0.0
  %1110 = vmatprep.subr.mxu0 0.0
  %1111 = vmatpush1.msra.mxu0 0.0
  %1112 = vmatprep.subr.mxu0 0.0
  %1113 = vmatpush1.msra.mxu0 0.0
  %1114 = vmatprep.subr.mxu0 0.0
  %1115 = vmatpush1.msra.mxu0 0.0
  %1116 = vmatprep.subr.mxu0 0.0
  %1117 = vmatpush1.msra.mxu0 0.0
  %1118 = vmatprep.subr.mxu0 0.0
  %1119 = vmatpush1.msra.mxu0 0.0
  %1120 = vmatprep.subr.mxu0 0.0
  %1121 = vmatpush1.msra.mxu0 0.0
  %1122 = vmatprep.subr.mxu0 0.0
  %1123 = vmatpush1.msra.mxu0 0.0
  %1124 = vmatprep.subr.mxu0 0.0
  %1125 = vmatpush1.msra.mxu0 0.0
  %1126 = vmatprep.subr.mxu0 0.0
  %1127 = vmatpush1.msra.mxu0 0.0
  %1128 = vmatprep.mubr.f32.mxu0 0.0
  %1129 = vmatmul.mubr.f32.gmra.mrb[0].mxu0 %v991
  %v1130 = vpop.f32.mrb[0].mxu0
  %v1131 = vadd.f32 0.0, %v1130
  %v1132 = vpop.f32.mrb[0].mxu0
  %v1133 = vadd.f32 0.0, %v1132
  %1134 = vdwg.mxu0
  %1135 = vmatprep.subr.mxu0 0.0
  %1136 = vmatpush1.msra.mxu0 %v979
  %1137 = vmatprep.subr.mxu0 0.0
  %1138 = vmatpush1.msra.mxu0 0.0
  %1139 = vmatprep.subr.mxu0 0.0
  %1140 = vmatpush1.msra.mxu0 0.0
  %1141 = vmatprep.subr.mxu0 0.0
  %1142 = vmatpush1.msra.mxu0 0.0
  %1143 = vmatprep.subr.mxu0 0.0
  %1144 = vmatpush1.msra.mxu0 0.0
  %1145 = vmatprep.subr.mxu0 0.0
  %1146 = vmatpush1.msra.mxu0 0.0
  %1147 = vmatprep.subr.mxu0 0.0
  %1148 = vmatpush1.msra.mxu0 0.0
  %1149 = vmatprep.subr.mxu0 0.0
  %1150 = vmatpush1.msra.mxu0 0.0
  %1151 = vmatprep.subr.mxu0 0.0
  %1152 = vmatpush1.msra.mxu0 0.0
  %1153 = vmatprep.subr.mxu0 0.0
  %1154 = vmatpush1.msra.mxu0 0.0
  %1155 = vmatprep.subr.mxu0 0.0
  %1156 = vmatpush1.msra.mxu0 0.0
  %1157 = vmatprep.subr.mxu0 0.0
  %1158 = vmatpush1.msra.mxu0 0.0
  %1159 = vmatprep.subr.mxu0 0.0
  %1160 = vmatpush1.msra.mxu0 0.0
  %1161 = vmatprep.subr.mxu0 0.0
  %1162 = vmatpush1.msra.mxu0 0.0
  %1163 = vmatprep.subr.mxu0 0.0
  %1164 = vmatpush1.msra.mxu0 0.0
  %1165 = vmatprep.subr.mxu0 0.0
  %1166 = vmatpush1.msra.mxu0 0.0
  %1167 = vmatprep.subr.mxu0 0.0
  %1168 = vmatpush1.msra.mxu0 0.0
  %1169 = vmatprep.subr.mxu0 0.0
  %1170 = vmatpush1.msra.mxu0 0.0
  %1171 = vmatprep.subr.mxu0 0.0
  %1172 = vmatpush1.msra.mxu0 0.0
  %1173 = vmatprep.subr.mxu0 0.0
  %1174 = vmatpush1.msra.mxu0 0.0
  %1175 = vmatprep.subr.mxu0 0.0
  %1176 = vmatpush1.msra.mxu0 0.0
  %1177 = vmatprep.subr.mxu0 0.0
  %1178 = vmatpush1.msra.mxu0 0.0
  %1179 = vmatprep.subr.mxu0 0.0
  %1180 = vmatpush1.msra.mxu0 0.0
  %1181 = vmatprep.subr.mxu0 0.0
  %1182 = vmatpush1.msra.mxu0 0.0
  %1183 = vmatprep.subr.mxu0 0.0
  %1184 = vmatpush1.msra.mxu0 0.0
  %1185 = vmatprep.subr.mxu0 0.0
  %1186 = vmatpush1.msra.mxu0 0.0
  %1187 = vmatprep.subr.mxu0 0.0
  %1188 = vmatpush1.msra.mxu0 0.0
  %1189 = vmatprep.subr.mxu0 0.0
  %1190 = vmatpush1.msra.mxu0 0.0
  %1191 = vmatprep.subr.mxu0 0.0
  %1192 = vmatpush1.msra.mxu0 0.0
  %1193 = vmatprep.subr.mxu0 0.0
  %1194 = vmatpush1.msra.mxu0 0.0
  %1195 = vmatprep.subr.mxu0 0.0
  %1196 = vmatpush1.msra.mxu0 0.0
  %1197 = vmatprep.subr.mxu0 0.0
  %1198 = vmatpush1.msra.mxu0 0.0
  %1199 = vmatprep.mubr.f32.mxu0 0.0
  %1200 = vmatmul.mubr.f32.gmra.mrb[0].mxu0 %v991
  %v1201 = vpop.f32.mrb[0].mxu0
  %v1202 = vadd.f32 0.0, %v1201
  %v1203 = vpop.f32.mrb[0].mxu0
  %1204 = vdwg.mxu0
  %v1205 = vadd.f32 %v963, %v1060
  %v1206 = vadd.f32 %v964, %v1062
  %v1207 = vadd.f32 %v965, %v1131
  %v1208 = vadd.f32 %v966, %v1133
  %v1209 = vadd.f32 %v967, %v1202
  %s1210 = scalar_lea.vmem %s1, 40
  %v1211 = vld [vmem:[%s1210] sm:$0xff]
  %1212 = vrot.lane.b32.xlu0 %v20, 108
  %v1213 = vpop.permute.xlu0 %1212
  %1214 = vrot.lane.b32.xlu0 %v21, 108
  %v1215 = vpop.permute.xlu0 %1214
  %1216 = vrot.lane.b32.xlu0 %v22, 108
  %v1217 = vpop.permute.xlu0 %1216
  %1218 = vrot.lane.b32.xlu0 %v23, 108
  %v1219 = vpop.permute.xlu0 %1218
  %1220 = vrot.lane.b32.xlu0 %v24, 108
  %v1221 = vpop.permute.xlu0 %1220
  %vm1222 = vcmask 883712
  %v1223 = vsel %vm1222, %v1213, %v1215
  %v1224 = vsel %vm1222, %v1215, %v1217
  %v1225 = vsel %vm1222, %v1217, %v1219
  %v1226 = vsel %vm1222, %v1219, %v1221
  %v1233 = vsel %vm53, %v1211, 0
  %1235 = vmatprep.subr.mxu0 %v1224
  %1236 = vmatpush1.msra.mxu0 %v1223
  %1237 = vmatprep.subr.mxu0 0.0
  %1238 = vmatpush1.msra.mxu0 0.0
  %1239 = vmatprep.subr.mxu0 0.0
  %1240 = vmatpush1.msra.mxu0 0.0
  %1241 = vmatprep.subr.mxu0 0.0
  %1242 = vmatpush1.msra.mxu0 0.0
  %1243 = vmatprep.subr.mxu0 0.0
  %1244 = vmatpush1.msra.mxu0 0.0
  %1245 = vmatprep.subr.mxu0 0.0
  %1246 = vmatpush1.msra.mxu0 0.0
  %1247 = vmatprep.subr.mxu0 0.0
  %1248 = vmatpush1.msra.mxu0 0.0
  %1249 = vmatprep.subr.mxu0 0.0
  %1250 = vmatpush1.msra.mxu0 0.0
  %1251 = vmatprep.subr.mxu0 0.0
  %1252 = vmatpush1.msra.mxu0 0.0
  %1253 = vmatprep.subr.mxu0 0.0
  %1254 = vmatpush1.msra.mxu0 0.0
  %1255 = vmatprep.subr.mxu0 0.0
  %1256 = vmatpush1.msra.mxu0 0.0
  %1257 = vmatprep.subr.mxu0 0.0
  %1258 = vmatpush1.msra.mxu0 0.0
  %1259 = vmatprep.subr.mxu0 0.0
  %1260 = vmatpush1.msra.mxu0 0.0
  %1261 = vmatprep.subr.mxu0 0.0
  %1262 = vmatpush1.msra.mxu0 0.0
  %1263 = vmatprep.subr.mxu0 0.0
  %1264 = vmatpush1.msra.mxu0 0.0
  %1265 = vmatprep.subr.mxu0 0.0
  %1266 = vmatpush1.msra.mxu0 0.0
  %1267 = vmatprep.subr.mxu0 0.0
  %1268 = vmatpush1.msra.mxu0 0.0
  %1269 = vmatprep.subr.mxu0 0.0
  %1270 = vmatpush1.msra.mxu0 0.0
  %1271 = vmatprep.subr.mxu0 0.0
  %1272 = vmatpush1.msra.mxu0 0.0
  %1273 = vmatprep.subr.mxu0 0.0
  %1274 = vmatpush1.msra.mxu0 0.0
  %1275 = vmatprep.subr.mxu0 0.0
  %1276 = vmatpush1.msra.mxu0 0.0
  %1277 = vmatprep.subr.mxu0 0.0
  %1278 = vmatpush1.msra.mxu0 0.0
  %1279 = vmatprep.subr.mxu0 0.0
  %1280 = vmatpush1.msra.mxu0 0.0
  %1281 = vmatprep.subr.mxu0 0.0
  %1282 = vmatpush1.msra.mxu0 0.0
  %1283 = vmatprep.subr.mxu0 0.0
  %1284 = vmatpush1.msra.mxu0 0.0
  %1285 = vmatprep.subr.mxu0 0.0
  %1286 = vmatpush1.msra.mxu0 0.0
  %1287 = vmatprep.subr.mxu0 0.0
  %1288 = vmatpush1.msra.mxu0 0.0
  %1289 = vmatprep.subr.mxu0 0.0
  %1290 = vmatpush1.msra.mxu0 0.0
  %1291 = vmatprep.subr.mxu0 0.0
  %1292 = vmatpush1.msra.mxu0 0.0
  %1293 = vmatprep.subr.mxu0 0.0
  %1294 = vmatpush1.msra.mxu0 0.0
  %1295 = vmatprep.subr.mxu0 0.0
  %1296 = vmatpush1.msra.mxu0 0.0
  %1297 = vmatprep.subr.mxu0 0.0
  %1298 = vmatpush1.msra.mxu0 0.0
  %1299 = vmatprep.mubr.f32.mxu0 0.0
  %1300 = vmatmul.mubr.f32.gmra.mrb[0].mxu0 %v1233
  %v1301 = vpop.f32.mrb[0].mxu0
  %v1302 = vadd.f32 0.0, %v1301
  %v1303 = vpop.f32.mrb[0].mxu0
  %v1304 = vadd.f32 0.0, %v1303
  %1305 = vdwg.mxu0
  %1306 = vmatprep.subr.mxu0 %v1226
  %1307 = vmatpush1.msra.mxu0 %v1225
  %1308 = vmatprep.subr.mxu0 0.0
  %1309 = vmatpush1.msra.mxu0 0.0
  %1310 = vmatprep.subr.mxu0 0.0
  %1311 = vmatpush1.msra.mxu0 0.0
  %1312 = vmatprep.subr.mxu0 0.0
  %1313 = vmatpush1.msra.mxu0 0.0
  %1314 = vmatprep.subr.mxu0 0.0
  %1315 = vmatpush1.msra.mxu0 0.0
  %1316 = vmatprep.subr.mxu0 0.0
  %1317 = vmatpush1.msra.mxu0 0.0
  %1318 = vmatprep.subr.mxu0 0.0
  %1319 = vmatpush1.msra.mxu0 0.0
  %1320 = vmatprep.subr.mxu0 0.0
  %1321 = vmatpush1.msra.mxu0 0.0
  %1322 = vmatprep.subr.mxu0 0.0
  %1323 = vmatpush1.msra.mxu0 0.0
  %1324 = vmatprep.subr.mxu0 0.0
  %1325 = vmatpush1.msra.mxu0 0.0
  %1326 = vmatprep.subr.mxu0 0.0
  %1327 = vmatpush1.msra.mxu0 0.0
  %1328 = vmatprep.subr.mxu0 0.0
  %1329 = vmatpush1.msra.mxu0 0.0
  %1330 = vmatprep.subr.mxu0 0.0
  %1331 = vmatpush1.msra.mxu0 0.0
  %1332 = vmatprep.subr.mxu0 0.0
  %1333 = vmatpush1.msra.mxu0 0.0
  %1334 = vmatprep.subr.mxu0 0.0
  %1335 = vmatpush1.msra.mxu0 0.0
  %1336 = vmatprep.subr.mxu0 0.0
  %1337 = vmatpush1.msra.mxu0 0.0
  %1338 = vmatprep.subr.mxu0 0.0
  %1339 = vmatpush1.msra.mxu0 0.0
  %1340 = vmatprep.subr.mxu0 0.0
  %1341 = vmatpush1.msra.mxu0 0.0
  %1342 = vmatprep.subr.mxu0 0.0
  %1343 = vmatpush1.msra.mxu0 0.0
  %1344 = vmatprep.subr.mxu0 0.0
  %1345 = vmatpush1.msra.mxu0 0.0
  %1346 = vmatprep.subr.mxu0 0.0
  %1347 = vmatpush1.msra.mxu0 0.0
  %1348 = vmatprep.subr.mxu0 0.0
  %1349 = vmatpush1.msra.mxu0 0.0
  %1350 = vmatprep.subr.mxu0 0.0
  %1351 = vmatpush1.msra.mxu0 0.0
  %1352 = vmatprep.subr.mxu0 0.0
  %1353 = vmatpush1.msra.mxu0 0.0
  %1354 = vmatprep.subr.mxu0 0.0
  %1355 = vmatpush1.msra.mxu0 0.0
  %1356 = vmatprep.subr.mxu0 0.0
  %1357 = vmatpush1.msra.mxu0 0.0
  %1358 = vmatprep.subr.mxu0 0.0
  %1359 = vmatpush1.msra.mxu0 0.0
  %1360 = vmatprep.subr.mxu0 0.0
  %1361 = vmatpush1.msra.mxu0 0.0
  %1362 = vmatprep.subr.mxu0 0.0
  %1363 = vmatpush1.msra.mxu0 0.0
  %1364 = vmatprep.subr.mxu0 0.0
  %1365 = vmatpush1.msra.mxu0 0.0
  %1366 = vmatprep.subr.mxu0 0.0
  %1367 = vmatpush1.msra.mxu0 0.0
  %1368 = vmatprep.subr.mxu0 0.0
  %1369 = vmatpush1.msra.mxu0 0.0
  %1370 = vmatprep.mubr.f32.mxu0 0.0
  %1371 = vmatmul.mubr.f32.gmra.mrb[0].mxu0 %v1233
  %v1372 = vpop.f32.mrb[0].mxu0
  %v1373 = vadd.f32 0.0, %v1372
  %v1374 = vpop.f32.mrb[0].mxu0
  %v1375 = vadd.f32 0.0, %v1374
  %1376 = vdwg.mxu0
  %1377 = vmatprep.subr.mxu0 0.0
  %1378 = vmatpush1.msra.mxu0 %v1221
  %1379 = vmatprep.subr.mxu0 0.0
  %1380 = vmatpush1.msra.mxu0 0.0
  %1381 = vmatprep.subr.mxu0 0.0
  %1382 = vmatpush1.msra.mxu0 0.0
  %1383 = vmatprep.subr.mxu0 0.0
  %1384 = vmatpush1.msra.mxu0 0.0
  %1385 = vmatprep.subr.mxu0 0.0
  %1386 = vmatpush1.msra.mxu0 0.0
  %1387 = vmatprep.subr.mxu0 0.0
  %1388 = vmatpush1.msra.mxu0 0.0
  %1389 = vmatprep.subr.mxu0 0.0
  %1390 = vmatpush1.msra.mxu0 0.0
  %1391 = vmatprep.subr.mxu0 0.0
  %1392 = vmatpush1.msra.mxu0 0.0
  %1393 = vmatprep.subr.mxu0 0.0
  %1394 = vmatpush1.msra.mxu0 0.0
  %1395 = vmatprep.subr.mxu0 0.0
  %1396 = vmatpush1.msra.mxu0 0.0
  %1397 = vmatprep.subr.mxu0 0.0
  %1398 = vmatpush1.msra.mxu0 0.0
  %1399 = vmatprep.subr.mxu0 0.0
  %1400 = vmatpush1.msra.mxu0 0.0
  %1401 = vmatprep.subr.mxu0 0.0
  %1402 = vmatpush1.msra.mxu0 0.0
  %1403 = vmatprep.subr.mxu0 0.0
  %1404 = vmatpush1.msra.mxu0 0.0
  %1405 = vmatprep.subr.mxu0 0.0
  %1406 = vmatpush1.msra.mxu0 0.0
  %1407 = vmatprep.subr.mxu0 0.0
  %1408 = vmatpush1.msra.mxu0 0.0
  %1409 = vmatprep.subr.mxu0 0.0
  %1410 = vmatpush1.msra.mxu0 0.0
  %1411 = vmatprep.subr.mxu0 0.0
  %1412 = vmatpush1.msra.mxu0 0.0
  %1413 = vmatprep.subr.mxu0 0.0
  %1414 = vmatpush1.msra.mxu0 0.0
  %1415 = vmatprep.subr.mxu0 0.0
  %1416 = vmatpush1.msra.mxu0 0.0
  %1417 = vmatprep.subr.mxu0 0.0
  %1418 = vmatpush1.msra.mxu0 0.0
  %1419 = vmatprep.subr.mxu0 0.0
  %1420 = vmatpush1.msra.mxu0 0.0
  %1421 = vmatprep.subr.mxu0 0.0
  %1422 = vmatpush1.msra.mxu0 0.0
  %1423 = vmatprep.subr.mxu0 0.0
  %1424 = vmatpush1.msra.mxu0 0.0
  %1425 = vmatprep.subr.mxu0 0.0
  %1426 = vmatpush1.msra.mxu0 0.0
  %1427 = vmatprep.subr.mxu0 0.0
  %1428 = vmatpush1.msra.mxu0 0.0
  %1429 = vmatprep.subr.mxu0 0.0
  %1430 = vmatpush1.msra.mxu0 0.0
  %1431 = vmatprep.subr.mxu0 0.0
  %1432 = vmatpush1.msra.mxu0 0.0
  %1433 = vmatprep.subr.mxu0 0.0
  %1434 = vmatpush1.msra.mxu0 0.0
  %1435 = vmatprep.subr.mxu0 0.0
  %1436 = vmatpush1.msra.mxu0 0.0
  %1437 = vmatprep.subr.mxu0 0.0
  %1438 = vmatpush1.msra.mxu0 0.0
  %1439 = vmatprep.subr.mxu0 0.0
  %1440 = vmatpush1.msra.mxu0 0.0
  %1441 = vmatprep.mubr.f32.mxu0 0.0
  %1442 = vmatmul.mubr.f32.gmra.mrb[0].mxu0 %v1233
  %v1443 = vpop.f32.mrb[0].mxu0
  %v1444 = vadd.f32 0.0, %v1443
  %v1445 = vpop.f32.mrb[0].mxu0
  %1446 = vdwg.mxu0
  %v1447 = vadd.f32 %v1205, %v1302
  %v1448 = vadd.f32 %v1206, %v1304
  %v1449 = vadd.f32 %v1207, %v1373
  %v1450 = vadd.f32 %v1208, %v1375
  %v1451 = vadd.f32 %v1209, %v1444
  %v1452 = vld [vmem:[%s0] sm:$0xff]
  %v1453 = vld [vmem:[%s0 + $0x8] sm:$0xff]
  %v1454 = vld [vmem:[%s0 + $0x10] sm:$0xff]
  %v1455 = vld [vmem:[%s0 + $0x18] sm:$0xff]
  %v1456 = vld [vmem:[%s0 + $0x20] sm:$0xff]
  %v1457 = vld [vmem:[%s0 + $0x28] sm:$0xff]
  %s1458 = scalar_lea.vmem %s1, 48
  %v1459 = vld [vmem:[%s1458] sm:$0xff]
  %1466 = vrot.lane.b32.xlu0 %v1452, 92
  %v1467 = vpop.permute.xlu0 %1466
  %1468 = vrot.lane.b32.xlu0 %v1453, 92
  %v1469 = vpop.permute.xlu0 %1468
  %1470 = vrot.lane.b32.xlu0 %v1454, 92
  %v1471 = vpop.permute.xlu0 %1470
  %1472 = vrot.lane.b32.xlu0 %v1455, 92
  %v1473 = vpop.permute.xlu0 %1472
  %1474 = vrot.lane.b32.xlu0 %v1456, 92
  %v1475 = vpop.permute.xlu0 %1474
  %1476 = vrot.lane.b32.xlu0 %v1457, 92
  %v1477 = vpop.permute.xlu0 %1476
  %vm1478 = vcmask 752640
  %v1479 = vsel %vm1478, %v1467, %v1469
  %v1480 = vsel %vm1478, %v1469, %v1471
  %v1481 = vsel %vm1478, %v1471, %v1473
  %v1482 = vsel %vm1478, %v1473, %v1475
  %v1483 = vsel %vm1478, %v1475, %v1477
  %v1490 = vsel %vm53, %v1459, 0
  %1492 = vmatprep.subr.mxu0 %v1480
  %1493 = vmatpush1.msra.mxu0 %v1479
  %1494 = vmatprep.subr.mxu0 0.0
  %1495 = vmatpush1.msra.mxu0 0.0
  %1496 = vmatprep.subr.mxu0 0.0
  %1497 = vmatpush1.msra.mxu0 0.0
  %1498 = vmatprep.subr.mxu0 0.0
  %1499 = vmatpush1.msra.mxu0 0.0
  %1500 = vmatprep.subr.mxu0 0.0
  %1501 = vmatpush1.msra.mxu0 0.0
  %1502 = vmatprep.subr.mxu0 0.0
  %1503 = vmatpush1.msra.mxu0 0.0
  %1504 = vmatprep.subr.mxu0 0.0
  %1505 = vmatpush1.msra.mxu0 0.0
  %1506 = vmatprep.subr.mxu0 0.0
  %1507 = vmatpush1.msra.mxu0 0.0
  %1508 = vmatprep.subr.mxu0 0.0
  %1509 = vmatpush1.msra.mxu0 0.0
  %1510 = vmatprep.subr.mxu0 0.0
  %1511 = vmatpush1.msra.mxu0 0.0
  %1512 = vmatprep.subr.mxu0 0.0
  %1513 = vmatpush1.msra.mxu0 0.0
  %1514 = vmatprep.subr.mxu0 0.0
  %1515 = vmatpush1.msra.mxu0 0.0
  %1516 = vmatprep.subr.mxu0 0.0
  %1517 = vmatpush1.msra.mxu0 0.0
  %1518 = vmatprep.subr.mxu0 0.0
  %1519 = vmatpush1.msra.mxu0 0.0
  %1520 = vmatprep.subr.mxu0 0.0
  %1521 = vmatpush1.msra.mxu0 0.0
  %1522 = vmatprep.subr.mxu0 0.0
  %1523 = vmatpush1.msra.mxu0 0.0
  %1524 = vmatprep.subr.mxu0 0.0
  %1525 = vmatpush1.msra.mxu0 0.0
  %1526 = vmatprep.subr.mxu0 0.0
  %1527 = vmatpush1.msra.mxu0 0.0
  %1528 = vmatprep.subr.mxu0 0.0
  %1529 = vmatpush1.msra.mxu0 0.0
  %1530 = vmatprep.subr.mxu0 0.0
  %1531 = vmatpush1.msra.mxu0 0.0
  %1532 = vmatprep.subr.mxu0 0.0
  %1533 = vmatpush1.msra.mxu0 0.0
  %1534 = vmatprep.subr.mxu0 0.0
  %1535 = vmatpush1.msra.mxu0 0.0
  %1536 = vmatprep.subr.mxu0 0.0
  %1537 = vmatpush1.msra.mxu0 0.0
  %1538 = vmatprep.subr.mxu0 0.0
  %1539 = vmatpush1.msra.mxu0 0.0
  %1540 = vmatprep.subr.mxu0 0.0
  %1541 = vmatpush1.msra.mxu0 0.0
  %1542 = vmatprep.subr.mxu0 0.0
  %1543 = vmatpush1.msra.mxu0 0.0
  %1544 = vmatprep.subr.mxu0 0.0
  %1545 = vmatpush1.msra.mxu0 0.0
  %1546 = vmatprep.subr.mxu0 0.0
  %1547 = vmatpush1.msra.mxu0 0.0
  %1548 = vmatprep.subr.mxu0 0.0
  %1549 = vmatpush1.msra.mxu0 0.0
  %1550 = vmatprep.subr.mxu0 0.0
  %1551 = vmatpush1.msra.mxu0 0.0
  %1552 = vmatprep.subr.mxu0 0.0
  %1553 = vmatpush1.msra.mxu0 0.0
  %1554 = vmatprep.subr.mxu0 0.0
  %1555 = vmatpush1.msra.mxu0 0.0
  %1556 = vmatprep.mubr.f32.mxu0 0.0
  %1557 = vmatmul.mubr.f32.gmra.mrb[0].mxu0 %v1490
  %v1558 = vpop.f32.mrb[0].mxu0
  %v1559 = vadd.f32 0.0, %v1558
  %v1560 = vpop.f32.mrb[0].mxu0
  %v1561 = vadd.f32 0.0, %v1560
  %1562 = vdwg.mxu0
  %1563 = vmatprep.subr.mxu0 %v1482
  %1564 = vmatpush1.msra.mxu0 %v1481
  %1565 = vmatprep.subr.mxu0 0.0
  %1566 = vmatpush1.msra.mxu0 0.0
  %1567 = vmatprep.subr.mxu0 0.0
  %1568 = vmatpush1.msra.mxu0 0.0
  %1569 = vmatprep.subr.mxu0 0.0
  %1570 = vmatpush1.msra.mxu0 0.0
  %1571 = vmatprep.subr.mxu0 0.0
  %1572 = vmatpush1.msra.mxu0 0.0
  %1573 = vmatprep.subr.mxu0 0.0
  %1574 = vmatpush1.msra.mxu0 0.0
  %1575 = vmatprep.subr.mxu0 0.0
  %1576 = vmatpush1.msra.mxu0 0.0
  %1577 = vmatprep.subr.mxu0 0.0
  %1578 = vmatpush1.msra.mxu0 0.0
  %1579 = vmatprep.subr.mxu0 0.0
  %1580 = vmatpush1.msra.mxu0 0.0
  %1581 = vmatprep.subr.mxu0 0.0
  %1582 = vmatpush1.msra.mxu0 0.0
  %1583 = vmatprep.subr.mxu0 0.0
  %1584 = vmatpush1.msra.mxu0 0.0
  %1585 = vmatprep.subr.mxu0 0.0
  %1586 = vmatpush1.msra.mxu0 0.0
  %1587 = vmatprep.subr.mxu0 0.0
  %1588 = vmatpush1.msra.mxu0 0.0
  %1589 = vmatprep.subr.mxu0 0.0
  %1590 = vmatpush1.msra.mxu0 0.0
  %1591 = vmatprep.subr.mxu0 0.0
  %1592 = vmatpush1.msra.mxu0 0.0
  %1593 = vmatprep.subr.mxu0 0.0
  %1594 = vmatpush1.msra.mxu0 0.0
  %1595 = vmatprep.subr.mxu0 0.0
  %1596 = vmatpush1.msra.mxu0 0.0
  %1597 = vmatprep.subr.mxu0 0.0
  %1598 = vmatpush1.msra.mxu0 0.0
  %1599 = vmatprep.subr.mxu0 0.0
  %1600 = vmatpush1.msra.mxu0 0.0
  %1601 = vmatprep.subr.mxu0 0.0
  %1602 = vmatpush1.msra.mxu0 0.0
  %1603 = vmatprep.subr.mxu0 0.0
  %1604 = vmatpush1.msra.mxu0 0.0
  %1605 = vmatprep.subr.mxu0 0.0
  %1606 = vmatpush1.msra.mxu0 0.0
  %1607 = vmatprep.subr.mxu0 0.0
  %1608 = vmatpush1.msra.mxu0 0.0
  %1609 = vmatprep.subr.mxu0 0.0
  %1610 = vmatpush1.msra.mxu0 0.0
  %1611 = vmatprep.subr.mxu0 0.0
  %1612 = vmatpush1.msra.mxu0 0.0
  %1613 = vmatprep.subr.mxu0 0.0
  %1614 = vmatpush1.msra.mxu0 0.0
  %1615 = vmatprep.subr.mxu0 0.0
  %1616 = vmatpush1.msra.mxu0 0.0
  %1617 = vmatprep.subr.mxu0 0.0
  %1618 = vmatpush1.msra.mxu0 0.0
  %1619 = vmatprep.subr.mxu0 0.0
  %1620 = vmatpush1.msra.mxu0 0.0
  %1621 = vmatprep.subr.mxu0 0.0
  %1622 = vmatpush1.msra.mxu0 0.0
  %1623 = vmatprep.subr.mxu0 0.0
  %1624 = vmatpush1.msra.mxu0 0.0
  %1625 = vmatprep.subr.mxu0 0.0
  %1626 = vmatpush1.msra.mxu0 0.0
  %1627 = vmatprep.mubr.f32.mxu0 0.0
  %1628 = vmatmul.mubr.f32.gmra.mrb[0].mxu0 %v1490
  %v1629 = vpop.f32.mrb[0].mxu0
  %v1630 = vadd.f32 0.0, %v1629
  %v1631 = vpop.f32.mrb[0].mxu0
  %v1632 = vadd.f32 0.0, %v1631
  %1633 = vdwg.mxu0
  %1634 = vmatprep.subr.mxu0 0.0
  %1635 = vmatpush1.msra.mxu0 %v1483
  %1636 = vmatprep.subr.mxu0 0.0
  %1637 = vmatpush1.msra.mxu0 0.0
  %1638 = vmatprep.subr.mxu0 0.0
  %1639 = vmatpush1.msra.mxu0 0.0
  %1640 = vmatprep.subr.mxu0 0.0
  %1641 = vmatpush1.msra.mxu0 0.0
  %1642 = vmatprep.subr.mxu0 0.0
  %1643 = vmatpush1.msra.mxu0 0.0
  %1644 = vmatprep.subr.mxu0 0.0
  %1645 = vmatpush1.msra.mxu0 0.0
  %1646 = vmatprep.subr.mxu0 0.0
  %1647 = vmatpush1.msra.mxu0 0.0
  %1648 = vmatprep.subr.mxu0 0.0
  %1649 = vmatpush1.msra.mxu0 0.0
  %1650 = vmatprep.subr.mxu0 0.0
  %1651 = vmatpush1.msra.mxu0 0.0
  %1652 = vmatprep.subr.mxu0 0.0
  %1653 = vmatpush1.msra.mxu0 0.0
  %1654 = vmatprep.subr.mxu0 0.0
  %1655 = vmatpush1.msra.mxu0 0.0
  %1656 = vmatprep.subr.mxu0 0.0
  %1657 = vmatpush1.msra.mxu0 0.0
  %1658 = vmatprep.subr.mxu0 0.0
  %1659 = vmatpush1.msra.mxu0 0.0
  %1660 = vmatprep.subr.mxu0 0.0
  %1661 = vmatpush1.msra.mxu0 0.0
  %1662 = vmatprep.subr.mxu0 0.0
  %1663 = vmatpush1.msra.mxu0 0.0
  %1664 = vmatprep.subr.mxu0 0.0
  %1665 = vmatpush1.msra.mxu0 0.0
  %1666 = vmatprep.subr.mxu0 0.0
  %1667 = vmatpush1.msra.mxu0 0.0
  %1668 = vmatprep.subr.mxu0 0.0
  %1669 = vmatpush1.msra.mxu0 0.0
  %1670 = vmatprep.subr.mxu0 0.0
  %1671 = vmatpush1.msra.mxu0 0.0
  %1672 = vmatprep.subr.mxu0 0.0
  %1673 = vmatpush1.msra.mxu0 0.0
  %1674 = vmatprep.subr.mxu0 0.0
  %1675 = vmatpush1.msra.mxu0 0.0
  %1676 = vmatprep.subr.mxu0 0.0
  %1677 = vmatpush1.msra.mxu0 0.0
  %1678 = vmatprep.subr.mxu0 0.0
  %1679 = vmatpush1.msra.mxu0 0.0
  %1680 = vmatprep.subr.mxu0 0.0
  %1681 = vmatpush1.msra.mxu0 0.0
  %1682 = vmatprep.subr.mxu0 0.0
  %1683 = vmatpush1.msra.mxu0 0.0
  %1684 = vmatprep.subr.mxu0 0.0
  %1685 = vmatpush1.msra.mxu0 0.0
  %1686 = vmatprep.subr.mxu0 0.0
  %1687 = vmatpush1.msra.mxu0 0.0
  %1688 = vmatprep.subr.mxu0 0.0
  %1689 = vmatpush1.msra.mxu0 0.0
  %1690 = vmatprep.subr.mxu0 0.0
  %1691 = vmatpush1.msra.mxu0 0.0
  %1692 = vmatprep.subr.mxu0 0.0
  %1693 = vmatpush1.msra.mxu0 0.0
  %1694 = vmatprep.subr.mxu0 0.0
  %1695 = vmatpush1.msra.mxu0 0.0
  %1696 = vmatprep.subr.mxu0 0.0
  %1697 = vmatpush1.msra.mxu0 0.0
  %1698 = vmatprep.mubr.f32.mxu0 0.0
  %1699 = vmatmul.mubr.f32.gmra.mrb[0].mxu0 %v1490
  %v1700 = vpop.f32.mrb[0].mxu0
  %v1701 = vadd.f32 0.0, %v1700
  %v1702 = vpop.f32.mrb[0].mxu0
  %1703 = vdwg.mxu0
  %v1704 = vadd.f32 %v1447, %v1559
  %v1705 = vadd.f32 %v1448, %v1561
  %v1706 = vadd.f32 %v1449, %v1630
  %v1707 = vadd.f32 %v1450, %v1632
  %v1708 = vadd.f32 %v1451, %v1701
  %s1709 = scalar_lea.vmem %s1, 56
  %v1710 = vld [vmem:[%s1709] sm:$0xff]
  %1711 = vrot.lane.b32.xlu0 %v1452, 91
  %v1712 = vpop.permute.xlu0 %1711
  %1713 = vrot.lane.b32.xlu0 %v1453, 91
  %v1714 = vpop.permute.xlu0 %1713
  %1715 = vrot.lane.b32.xlu0 %v1454, 91
  %v1716 = vpop.permute.xlu0 %1715
  %1717 = vrot.lane.b32.xlu0 %v1455, 91
  %v1718 = vpop.permute.xlu0 %1717
  %1719 = vrot.lane.b32.xlu0 %v1456, 91
  %v1720 = vpop.permute.xlu0 %1719
  %1721 = vrot.lane.b32.xlu0 %v1457, 91
  %v1722 = vpop.permute.xlu0 %1721
  %vm1723 = vcmask 744448
  %v1724 = vsel %vm1723, %v1712, %v1714
  %v1725 = vsel %vm1723, %v1714, %v1716
  %v1726 = vsel %vm1723, %v1716, %v1718
  %v1727 = vsel %vm1723, %v1718, %v1720
  %v1728 = vsel %vm1723, %v1720, %v1722
  %v1735 = vsel %vm53, %v1710, 0
  %1737 = vmatprep.subr.mxu0 %v1725
  %1738 = vmatpush1.msra.mxu0 %v1724
  %1739 = vmatprep.subr.mxu0 0.0
  %1740 = vmatpush1.msra.mxu0 0.0
  %1741 = vmatprep.subr.mxu0 0.0
  %1742 = vmatpush1.msra.mxu0 0.0
  %1743 = vmatprep.subr.mxu0 0.0
  %1744 = vmatpush1.msra.mxu0 0.0
  %1745 = vmatprep.subr.mxu0 0.0
  %1746 = vmatpush1.msra.mxu0 0.0
  %1747 = vmatprep.subr.mxu0 0.0
  %1748 = vmatpush1.msra.mxu0 0.0
  %1749 = vmatprep.subr.mxu0 0.0
  %1750 = vmatpush1.msra.mxu0 0.0
  %1751 = vmatprep.subr.mxu0 0.0
  %1752 = vmatpush1.msra.mxu0 0.0
  %1753 = vmatprep.subr.mxu0 0.0
  %1754 = vmatpush1.msra.mxu0 0.0
  %1755 = vmatprep.subr.mxu0 0.0
  %1756 = vmatpush1.msra.mxu0 0.0
  %1757 = vmatprep.subr.mxu0 0.0
  %1758 = vmatpush1.msra.mxu0 0.0
  %1759 = vmatprep.subr.mxu0 0.0
  %1760 = vmatpush1.msra.mxu0 0.0
  %1761 = vmatprep.subr.mxu0 0.0
  %1762 = vmatpush1.msra.mxu0 0.0
  %1763 = vmatprep.subr.mxu0 0.0
  %1764 = vmatpush1.msra.mxu0 0.0
  %1765 = vmatprep.subr.mxu0 0.0
  %1766 = vmatpush1.msra.mxu0 0.0
  %1767 = vmatprep.subr.mxu0 0.0
  %1768 = vmatpush1.msra.mxu0 0.0
  %1769 = vmatprep.subr.mxu0 0.0
  %1770 = vmatpush1.msra.mxu0 0.0
  %1771 = vmatprep.subr.mxu0 0.0
  %1772 = vmatpush1.msra.mxu0 0.0
  %1773 = vmatprep.subr.mxu0 0.0
  %1774 = vmatpush1.msra.mxu0 0.0
  %1775 = vmatprep.subr.mxu0 0.0
  %1776 = vmatpush1.msra.mxu0 0.0
  %1777 = vmatprep.subr.mxu0 0.0
  %1778 = vmatpush1.msra.mxu0 0.0
  %1779 = vmatprep.subr.mxu0 0.0
  %1780 = vmatpush1.msra.mxu0 0.0
  %1781 = vmatprep.subr.mxu0 0.0
  %1782 = vmatpush1.msra.mxu0 0.0
  %1783 = vmatprep.subr.mxu0 0.0
  %1784 = vmatpush1.msra.mxu0 0.0
  %1785 = vmatprep.subr.mxu0 0.0
  %1786 = vmatpush1.msra.mxu0 0.0
  %1787 = vmatprep.subr.mxu0 0.0
  %1788 = vmatpush1.msra.mxu0 0.0
  %1789 = vmatprep.subr.mxu0 0.0
  %1790 = vmatpush1.msra.mxu0 0.0
  %1791 = vmatprep.subr.mxu0 0.0
  %1792 = vmatpush1.msra.mxu0 0.0
  %1793 = vmatprep.subr.mxu0 0.0
  %1794 = vmatpush1.msra.mxu0 0.0
  %1795 = vmatprep.subr.mxu0 0.0
  %1796 = vmatpush1.msra.mxu0 0.0
  %1797 = vmatprep.subr.mxu0 0.0
  %1798 = vmatpush1.msra.mxu0 0.0
  %1799 = vmatprep.subr.mxu0 0.0
  %1800 = vmatpush1.msra.mxu0 0.0
  %1801 = vmatprep.mubr.f32.mxu0 0.0
  %1802 = vmatmul.mubr.f32.gmra.mrb[0].mxu0 %v1735
  %v1803 = vpop.f32.mrb[0].mxu0
  %v1804 = vadd.f32 0.0, %v1803
  %v1805 = vpop.f32.mrb[0].mxu0
  %v1806 = vadd.f32 0.0, %v1805
  %1807 = vdwg.mxu0
  %1808 = vmatprep.subr.mxu0 %v1727
  %1809 = vmatpush1.msra.mxu0 %v1726
  %1810 = vmatprep.subr.mxu0 0.0
  %1811 = vmatpush1.msra.mxu0 0.0
  %1812 = vmatprep.subr.mxu0 0.0
  %1813 = vmatpush1.msra.mxu0 0.0
  %1814 = vmatprep.subr.mxu0 0.0
  %1815 = vmatpush1.msra.mxu0 0.0
  %1816 = vmatprep.subr.mxu0 0.0
  %1817 = vmatpush1.msra.mxu0 0.0
  %1818 = vmatprep.subr.mxu0 0.0
  %1819 = vmatpush1.msra.mxu0 0.0
  %1820 = vmatprep.subr.mxu0 0.0
  %1821 = vmatpush1.msra.mxu0 0.0
  %1822 = vmatprep.subr.mxu0 0.0
  %1823 = vmatpush1.msra.mxu0 0.0
  %1824 = vmatprep.subr.mxu0 0.0
  %1825 = vmatpush1.msra.mxu0 0.0
  %1826 = vmatprep.subr.mxu0 0.0
  %1827 = vmatpush1.msra.mxu0 0.0
  %1828 = vmatprep.subr.mxu0 0.0
  %1829 = vmatpush1.msra.mxu0 0.0
  %1830 = vmatprep.subr.mxu0 0.0
  %1831 = vmatpush1.msra.mxu0 0.0
  %1832 = vmatprep.subr.mxu0 0.0
  %1833 = vmatpush1.msra.mxu0 0.0
  %1834 = vmatprep.subr.mxu0 0.0
  %1835 = vmatpush1.msra.mxu0 0.0
  %1836 = vmatprep.subr.mxu0 0.0
  %1837 = vmatpush1.msra.mxu0 0.0
  %1838 = vmatprep.subr.mxu0 0.0
  %1839 = vmatpush1.msra.mxu0 0.0
  %1840 = vmatprep.subr.mxu0 0.0
  %1841 = vmatpush1.msra.mxu0 0.0
  %1842 = vmatprep.subr.mxu0 0.0
  %1843 = vmatpush1.msra.mxu0 0.0
  %1844 = vmatprep.subr.mxu0 0.0
  %1845 = vmatpush1.msra.mxu0 0.0
  %1846 = vmatprep.subr.mxu0 0.0
  %1847 = vmatpush1.msra.mxu0 0.0
  %1848 = vmatprep.subr.mxu0 0.0
  %1849 = vmatpush1.msra.mxu0 0.0
  %1850 = vmatprep.subr.mxu0 0.0
  %1851 = vmatpush1.msra.mxu0 0.0
  %1852 = vmatprep.subr.mxu0 0.0
  %1853 = vmatpush1.msra.mxu0 0.0
  %1854 = vmatprep.subr.mxu0 0.0
  %1855 = vmatpush1.msra.mxu0 0.0
  %1856 = vmatprep.subr.mxu0 0.0
  %1857 = vmatpush1.msra.mxu0 0.0
  %1858 = vmatprep.subr.mxu0 0.0
  %1859 = vmatpush1.msra.mxu0 0.0
  %1860 = vmatprep.subr.mxu0 0.0
  %1861 = vmatpush1.msra.mxu0 0.0
  %1862 = vmatprep.subr.mxu0 0.0
  %1863 = vmatpush1.msra.mxu0 0.0
  %1864 = vmatprep.subr.mxu0 0.0
  %1865 = vmatpush1.msra.mxu0 0.0
  %1866 = vmatprep.subr.mxu0 0.0
  %1867 = vmatpush1.msra.mxu0 0.0
  %1868 = vmatprep.subr.mxu0 0.0
  %1869 = vmatpush1.msra.mxu0 0.0
  %1870 = vmatprep.subr.mxu0 0.0
  %1871 = vmatpush1.msra.mxu0 0.0
  %1872 = vmatprep.mubr.f32.mxu0 0.0
  %1873 = vmatmul.mubr.f32.gmra.mrb[0].mxu0 %v1735
  %v1874 = vpop.f32.mrb[0].mxu0
  %v1875 = vadd.f32 0.0, %v1874
  %v1876 = vpop.f32.mrb[0].mxu0
  %v1877 = vadd.f32 0.0, %v1876
  %1878 = vdwg.mxu0
  %1879 = vmatprep.subr.mxu0 0.0
  %1880 = vmatpush1.msra.mxu0 %v1728
  %1881 = vmatprep.subr.mxu0 0.0
  %1882 = vmatpush1.msra.mxu0 0.0
  %1883 = vmatprep.subr.mxu0 0.0
  %1884 = vmatpush1.msra.mxu0 0.0
  %1885 = vmatprep.subr.mxu0 0.0
  %1886 = vmatpush1.msra.mxu0 0.0
  %1887 = vmatprep.subr.mxu0 0.0
  %1888 = vmatpush1.msra.mxu0 0.0
  %1889 = vmatprep.subr.mxu0 0.0
  %1890 = vmatpush1.msra.mxu0 0.0
  %1891 = vmatprep.subr.mxu0 0.0
  %1892 = vmatpush1.msra.mxu0 0.0
  %1893 = vmatprep.subr.mxu0 0.0
  %1894 = vmatpush1.msra.mxu0 0.0
  %1895 = vmatprep.subr.mxu0 0.0
  %1896 = vmatpush1.msra.mxu0 0.0
  %1897 = vmatprep.subr.mxu0 0.0
  %1898 = vmatpush1.msra.mxu0 0.0
  %1899 = vmatprep.subr.mxu0 0.0
  %1900 = vmatpush1.msra.mxu0 0.0
  %1901 = vmatprep.subr.mxu0 0.0
  %1902 = vmatpush1.msra.mxu0 0.0
  %1903 = vmatprep.subr.mxu0 0.0
  %1904 = vmatpush1.msra.mxu0 0.0
  %1905 = vmatprep.subr.mxu0 0.0
  %1906 = vmatpush1.msra.mxu0 0.0
  %1907 = vmatprep.subr.mxu0 0.0
  %1908 = vmatpush1.msra.mxu0 0.0
  %1909 = vmatprep.subr.mxu0 0.0
  %1910 = vmatpush1.msra.mxu0 0.0
  %1911 = vmatprep.subr.mxu0 0.0
  %1912 = vmatpush1.msra.mxu0 0.0
  %1913 = vmatprep.subr.mxu0 0.0
  %1914 = vmatpush1.msra.mxu0 0.0
  %1915 = vmatprep.subr.mxu0 0.0
  %1916 = vmatpush1.msra.mxu0 0.0
  %1917 = vmatprep.subr.mxu0 0.0
  %1918 = vmatpush1.msra.mxu0 0.0
  %1919 = vmatprep.subr.mxu0 0.0
  %1920 = vmatpush1.msra.mxu0 0.0
  %1921 = vmatprep.subr.mxu0 0.0
  %1922 = vmatpush1.msra.mxu0 0.0
  %1923 = vmatprep.subr.mxu0 0.0
  %1924 = vmatpush1.msra.mxu0 0.0
  %1925 = vmatprep.subr.mxu0 0.0
  %1926 = vmatpush1.msra.mxu0 0.0
  %1927 = vmatprep.subr.mxu0 0.0
  %1928 = vmatpush1.msra.mxu0 0.0
  %1929 = vmatprep.subr.mxu0 0.0
  %1930 = vmatpush1.msra.mxu0 0.0
  %1931 = vmatprep.subr.mxu0 0.0
  %1932 = vmatpush1.msra.mxu0 0.0
  %1933 = vmatprep.subr.mxu0 0.0
  %1934 = vmatpush1.msra.mxu0 0.0
  %1935 = vmatprep.subr.mxu0 0.0
  %1936 = vmatpush1.msra.mxu0 0.0
  %1937 = vmatprep.subr.mxu0 0.0
  %1938 = vmatpush1.msra.mxu0 0.0
  %1939 = vmatprep.subr.mxu0 0.0
  %1940 = vmatpush1.msra.mxu0 0.0
  %1941 = vmatprep.subr.mxu0 0.0
  %1942 = vmatpush1.msra.mxu0 0.0
  %1943 = vmatprep.mubr.f32.mxu0 0.0
  %1944 = vmatmul.mubr.f32.gmra.mrb[0].mxu0 %v1735
  %v1945 = vpop.f32.mrb[0].mxu0
  %v1946 = vadd.f32 0.0, %v1945
  %v1947 = vpop.f32.mrb[0].mxu0
  %1948 = vdwg.mxu0
  %v1949 = vadd.f32 %v1704, %v1804
  %v1950 = vadd.f32 %v1705, %v1806
  %v1951 = vadd.f32 %v1706, %v1875
  %v1952 = vadd.f32 %v1707, %v1877
  %v1953 = vadd.f32 %v1708, %v1946
  %s1954 = scalar_lea.vmem %s1, 64
  %v1955 = vld [vmem:[%s1954] sm:$0xff]
  %1956 = vrot.lane.b32.xlu0 %v1452, 90
  %v1957 = vpop.permute.xlu0 %1956
  %1958 = vrot.lane.b32.xlu0 %v1453, 90
  %v1959 = vpop.permute.xlu0 %1958
  %1960 = vrot.lane.b32.xlu0 %v1454, 90
  %v1961 = vpop.permute.xlu0 %1960
  %1962 = vrot.lane.b32.xlu0 %v1455, 90
  %v1963 = vpop.permute.xlu0 %1962
  %1964 = vrot.lane.b32.xlu0 %v1456, 90
  %v1965 = vpop.permute.xlu0 %1964
  %1966 = vrot.lane.b32.xlu0 %v1457, 90
  %v1967 = vpop.permute.xlu0 %1966
  %vm1968 = vcmask 736256
  %v1969 = vsel %vm1968, %v1957, %v1959
  %v1970 = vsel %vm1968, %v1959, %v1961
  %v1971 = vsel %vm1968, %v1961, %v1963
  %v1972 = vsel %vm1968, %v1963, %v1965
  %v1973 = vsel %vm1968, %v1965, %v1967
  %v1980 = vsel %vm53, %v1955, 0
  %1982 = vmatprep.subr.mxu0 %v1970
  %1983 = vmatpush1.msra.mxu0 %v1969
  %1984 = vmatprep.subr.mxu0 0.0
  %1985 = vmatpush1.msra.mxu0 0.0
  %1986 = vmatprep.subr.mxu0 0.0
  %1987 = vmatpush1.msra.mxu0 0.0
  %1988 = vmatprep.subr.mxu0 0.0
  %1989 = vmatpush1.msra.mxu0 0.0
  %1990 = vmatprep.subr.mxu0 0.0
  %1991 = vmatpush1.msra.mxu0 0.0
  %1992 = vmatprep.subr.mxu0 0.0
  %1993 = vmatpush1.msra.mxu0 0.0
  %1994 = vmatprep.subr.mxu0 0.0
  %1995 = vmatpush1.msra.mxu0 0.0
  %1996 = vmatprep.subr.mxu0 0.0
  %1997 = vmatpush1.msra.mxu0 0.0
  %1998 = vmatprep.subr.mxu0 0.0
  %1999 = vmatpush1.msra.mxu0 0.0
  %2000 = vmatprep.subr.mxu0 0.0
  %2001 = vmatpush1.msra.mxu0 0.0
  %2002 = vmatprep.subr.mxu0 0.0
  %2003 = vmatpush1.msra.mxu0 0.0
  %2004 = vmatprep.subr.mxu0 0.0
  %2005 = vmatpush1.msra.mxu0 0.0
  %2006 = vmatprep.subr.mxu0 0.0
  %2007 = vmatpush1.msra.mxu0 0.0
  %2008 = vmatprep.subr.mxu0 0.0
  %2009 = vmatpush1.msra.mxu0 0.0
  %2010 = vmatprep.subr.mxu0 0.0
  %2011 = vmatpush1.msra.mxu0 0.0
  %2012 = vmatprep.subr.mxu0 0.0
  %2013 = vmatpush1.msra.mxu0 0.0
  %2014 = vmatprep.subr.mxu0 0.0
  %2015 = vmatpush1.msra.mxu0 0.0
  %2016 = vmatprep.subr.mxu0 0.0
  %2017 = vmatpush1.msra.mxu0 0.0
  %2018 = vmatprep.subr.mxu0 0.0
  %2019 = vmatpush1.msra.mxu0 0.0
  %2020 = vmatprep.subr.mxu0 0.0
  %2021 = vmatpush1.msra.mxu0 0.0
  %2022 = vmatprep.subr.mxu0 0.0
  %2023 = vmatpush1.msra.mxu0 0.0
  %2024 = vmatprep.subr.mxu0 0.0
  %2025 = vmatpush1.msra.mxu0 0.0
  %2026 = vmatprep.subr.mxu0 0.0
  %2027 = vmatpush1.msra.mxu0 0.0
  %2028 = vmatprep.subr.mxu0 0.0
  %2029 = vmatpush1.msra.mxu0 0.0
  %2030 = vmatprep.subr.mxu0 0.0
  %2031 = vmatpush1.msra.mxu0 0.0
  %2032 = vmatprep.subr.mxu0 0.0
  %2033 = vmatpush1.msra.mxu0 0.0
  %2034 = vmatprep.subr.mxu0 0.0
  %2035 = vmatpush1.msra.mxu0 0.0
  %2036 = vmatprep.subr.mxu0 0.0
  %2037 = vmatpush1.msra.mxu0 0.0
  %2038 = vmatprep.subr.mxu0 0.0
  %2039 = vmatpush1.msra.mxu0 0.0
  %2040 = vmatprep.subr.mxu0 0.0
  %2041 = vmatpush1.msra.mxu0 0.0
  %2042 = vmatprep.subr.mxu0 0.0
  %2043 = vmatpush1.msra.mxu0 0.0
  %2044 = vmatprep.subr.mxu0 0.0
  %2045 = vmatpush1.msra.mxu0 0.0
  %2046 = vmatprep.mubr.f32.mxu0 0.0
  %2047 = vmatmul.mubr.f32.gmra.mrb[0].mxu0 %v1980
  %v2048 = vpop.f32.mrb[0].mxu0
  %v2049 = vadd.f32 0.0, %v2048
  %v2050 = vpop.f32.mrb[0].mxu0
  %v2051 = vadd.f32 0.0, %v2050
  %2052 = vdwg.mxu0
  %2053 = vmatprep.subr.mxu0 %v1972
  %2054 = vmatpush1.msra.mxu0 %v1971
  %2055 = vmatprep.subr.mxu0 0.0
  %2056 = vmatpush1.msra.mxu0 0.0
  %2057 = vmatprep.subr.mxu0 0.0
  %2058 = vmatpush1.msra.mxu0 0.0
  %2059 = vmatprep.subr.mxu0 0.0
  %2060 = vmatpush1.msra.mxu0 0.0
  %2061 = vmatprep.subr.mxu0 0.0
  %2062 = vmatpush1.msra.mxu0 0.0
  %2063 = vmatprep.subr.mxu0 0.0
  %2064 = vmatpush1.msra.mxu0 0.0
  %2065 = vmatprep.subr.mxu0 0.0
  %2066 = vmatpush1.msra.mxu0 0.0
  %2067 = vmatprep.subr.mxu0 0.0
  %2068 = vmatpush1.msra.mxu0 0.0
  %2069 = vmatprep.subr.mxu0 0.0
  %2070 = vmatpush1.msra.mxu0 0.0
  %2071 = vmatprep.subr.mxu0 0.0
  %2072 = vmatpush1.msra.mxu0 0.0
  %2073 = vmatprep.subr.mxu0 0.0
  %2074 = vmatpush1.msra.mxu0 0.0
  %2075 = vmatprep.subr.mxu0 0.0
  %2076 = vmatpush1.msra.mxu0 0.0
  %2077 = vmatprep.subr.mxu0 0.0
  %2078 = vmatpush1.msra.mxu0 0.0
  %2079 = vmatprep.subr.mxu0 0.0
  %2080 = vmatpush1.msra.mxu0 0.0
  %2081 = vmatprep.subr.mxu0 0.0
  %2082 = vmatpush1.msra.mxu0 0.0
  %2083 = vmatprep.subr.mxu0 0.0
  %2084 = vmatpush1.msra.mxu0 0.0
  %2085 = vmatprep.subr.mxu0 0.0
  %2086 = vmatpush1.msra.mxu0 0.0
  %2087 = vmatprep.subr.mxu0 0.0
  %2088 = vmatpush1.msra.mxu0 0.0
  %2089 = vmatprep.subr.mxu0 0.0
  %2090 = vmatpush1.msra.mxu0 0.0
  %2091 = vmatprep.subr.mxu0 0.0
  %2092 = vmatpush1.msra.mxu0 0.0
  %2093 = vmatprep.subr.mxu0 0.0
  %2094 = vmatpush1.msra.mxu0 0.0
  %2095 = vmatprep.subr.mxu0 0.0
  %2096 = vmatpush1.msra.mxu0 0.0
  %2097 = vmatprep.subr.mxu0 0.0
  %2098 = vmatpush1.msra.mxu0 0.0
  %2099 = vmatprep.subr.mxu0 0.0
  %2100 = vmatpush1.msra.mxu0 0.0
  %2101 = vmatprep.subr.mxu0 0.0
  %2102 = vmatpush1.msra.mxu0 0.0
  %2103 = vmatprep.subr.mxu0 0.0
  %2104 = vmatpush1.msra.mxu0 0.0
  %2105 = vmatprep.subr.mxu0 0.0
  %2106 = vmatpush1.msra.mxu0 0.0
  %2107 = vmatprep.subr.mxu0 0.0
  %2108 = vmatpush1.msra.mxu0 0.0
  %2109 = vmatprep.subr.mxu0 0.0
  %2110 = vmatpush1.msra.mxu0 0.0
  %2111 = vmatprep.subr.mxu0 0.0
  %2112 = vmatpush1.msra.mxu0 0.0
  %2113 = vmatprep.subr.mxu0 0.0
  %2114 = vmatpush1.msra.mxu0 0.0
  %2115 = vmatprep.subr.mxu0 0.0
  %2116 = vmatpush1.msra.mxu0 0.0
  %2117 = vmatprep.mubr.f32.mxu0 0.0
  %2118 = vmatmul.mubr.f32.gmra.mrb[0].mxu0 %v1980
  %v2119 = vpop.f32.mrb[0].mxu0
  %v2120 = vadd.f32 0.0, %v2119
  %v2121 = vpop.f32.mrb[0].mxu0
  %v2122 = vadd.f32 0.0, %v2121
  %2123 = vdwg.mxu0
  %2124 = vmatprep.subr.mxu0 0.0
  %2125 = vmatpush1.msra.mxu0 %v1973
  %2126 = vmatprep.subr.mxu0 0.0
  %2127 = vmatpush1.msra.mxu0 0.0
  %2128 = vmatprep.subr.mxu0 0.0
  %2129 = vmatpush1.msra.mxu0 0.0
  %2130 = vmatprep.subr.mxu0 0.0
  %2131 = vmatpush1.msra.mxu0 0.0
  %2132 = vmatprep.subr.mxu0 0.0
  %2133 = vmatpush1.msra.mxu0 0.0
  %2134 = vmatprep.subr.mxu0 0.0
  %2135 = vmatpush1.msra.mxu0 0.0
  %2136 = vmatprep.subr.mxu0 0.0
  %2137 = vmatpush1.msra.mxu0 0.0
  %2138 = vmatprep.subr.mxu0 0.0
  %2139 = vmatpush1.msra.mxu0 0.0
  %2140 = vmatprep.subr.mxu0 0.0
  %2141 = vmatpush1.msra.mxu0 0.0
  %2142 = vmatprep.subr.mxu0 0.0
  %2143 = vmatpush1.msra.mxu0 0.0
  %2144 = vmatprep.subr.mxu0 0.0
  %2145 = vmatpush1.msra.mxu0 0.0
  %2146 = vmatprep.subr.mxu0 0.0
  %2147 = vmatpush1.msra.mxu0 0.0
  %2148 = vmatprep.subr.mxu0 0.0
  %2149 = vmatpush1.msra.mxu0 0.0
  %2150 = vmatprep.subr.mxu0 0.0
  %2151 = vmatpush1.msra.mxu0 0.0
  %2152 = vmatprep.subr.mxu0 0.0
  %2153 = vmatpush1.msra.mxu0 0.0
  %2154 = vmatprep.subr.mxu0 0.0
  %2155 = vmatpush1.msra.mxu0 0.0
  %2156 = vmatprep.subr.mxu0 0.0
  %2157 = vmatpush1.msra.mxu0 0.0
  %2158 = vmatprep.subr.mxu0 0.0
  %2159 = vmatpush1.msra.mxu0 0.0
  %2160 = vmatprep.subr.mxu0 0.0
  %2161 = vmatpush1.msra.mxu0 0.0
  %2162 = vmatprep.subr.mxu0 0.0
  %2163 = vmatpush1.msra.mxu0 0.0
  %2164 = vmatprep.subr.mxu0 0.0
  %2165 = vmatpush1.msra.mxu0 0.0
  %2166 = vmatprep.subr.mxu0 0.0
  %2167 = vmatpush1.msra.mxu0 0.0
  %2168 = vmatprep.subr.mxu0 0.0
  %2169 = vmatpush1.msra.mxu0 0.0
  %2170 = vmatprep.subr.mxu0 0.0
  %2171 = vmatpush1.msra.mxu0 0.0
  %2172 = vmatprep.subr.mxu0 0.0
  %2173 = vmatpush1.msra.mxu0 0.0
  %2174 = vmatprep.subr.mxu0 0.0
  %2175 = vmatpush1.msra.mxu0 0.0
  %2176 = vmatprep.subr.mxu0 0.0
  %2177 = vmatpush1.msra.mxu0 0.0
  %2178 = vmatprep.subr.mxu0 0.0
  %2179 = vmatpush1.msra.mxu0 0.0
  %2180 = vmatprep.subr.mxu0 0.0
  %2181 = vmatpush1.msra.mxu0 0.0
  %2182 = vmatprep.subr.mxu0 0.0
  %2183 = vmatpush1.msra.mxu0 0.0
  %2184 = vmatprep.subr.mxu0 0.0
  %2185 = vmatpush1.msra.mxu0 0.0
  %2186 = vmatprep.subr.mxu0 0.0
  %2187 = vmatpush1.msra.mxu0 0.0
  %2188 = vmatprep.mubr.f32.mxu0 0.0
  %2189 = vmatmul.mubr.f32.gmra.mrb[0].mxu0 %v1980
  %v2190 = vpop.f32.mrb[0].mxu0
  %v2191 = vadd.f32 0.0, %v2190
  %v2192 = vpop.f32.mrb[0].mxu0
  %2193 = vdwg.mxu0
  %v2194 = vadd.f32 %v1949, %v2049
  %v2195 = vadd.f32 %v1950, %v2051
  %v2196 = vadd.f32 %v1951, %v2120
  %v2197 = vadd.f32 %v1952, %v2122
  %v2198 = vadd.f32 %v1953, %v2191
  %v2199 = vld [vmem:[%s4] sm:$0x1f]
  %v2200 = vld [vmem:[%s2] sm:$0xff]
  %2202 = vset.pattern.permute.xlu0 0
  %2203 = vperm.xlu0 %2202, %v2200
  %v2204 = vpop.permute.xlu0 %2203
  %v2206 = vadd.f32 %v2194, %v2204
  %v2207 = vadd.f32 %v2195, %v2204
  %v2208 = vadd.f32 %v2196, %v2204
  %v2209 = vadd.f32 %v2197, %v2204
  %v2210 = vadd.f32 %v2198, %v2204
  %v2211 = vmax.f32 %v2206, 0.0
  %v2212 = vmax.f32 %v2207, 0.0
  %v2213 = vmax.f32 %v2208, 0.0
  %v2214 = vmax.f32 %v2209, 0.0
  %v2215 = vmax.f32 %v2210, 0.0
  %v2217 = vlaneseq
  %v2218 = vshrl.u32 %v2217, 7
  %v2219 = vsub.s32 0, %v2218
  %v2220 = vrot.slane %v2199, %v2219
  %v2221 = vlaneseq
  %v2222 = vshrl.u32 %v2221, 7
  %v2223 = vsub.s32 1, %v2222
  %v2224 = vrot.slane %v2199, %v2223
  %v2225 = vlaneseq
  %v2226 = vshrl.u32 %v2225, 7
  %v2227 = vsub.s32 2, %v2226
  %v2228 = vrot.slane %v2199, %v2227
  %v2229 = vlaneseq
  %v2230 = vshrl.u32 %v2229, 7
  %v2231 = vsub.s32 3, %v2230
  %v2232 = vrot.slane %v2199, %v2231
  %v2233 = vlaneseq
  %v2234 = vshrl.u32 %v2233, 7
  %v2235 = vsub.s32 4, %v2234
  %v2236 = vrot.slane %v2199, %v2235
  %v2242 = vmul.f32 %v2211, %v2220
  %v2243 = vmul.f32 %v2212, %v2224
  %v2244 = vmul.f32 %v2213, %v2228
  %v2245 = vmul.f32 %v2214, %v2232
  %v2246 = vmul.f32 %v2215, %v2236
  %2247 = vst [vmem:[%s5] sm:$0xff] 0.0
  %2248 = vst [vmem:[%s5 + $0x8] sm:$0xff] 0.0
  %2249 = vst [vmem:[%s5 + $0x10] sm:$0xff] 0.0
  %2250 = vst [vmem:[%s5 + $0x18] sm:$0xff] 0.0
  %2251 = vst [vmem:[%s5 + $0x20] sm:$0xff] 0.0
  %2252 = vst.msk [vmem:[%s5 + $0x28] sm:$0xff] %vm53, 0.0
  %2258 = vrot.lane.b32.xlu0 %v2242, 19
  %v2259 = vpop.permute.xlu0 %2258
  %2260 = vrot.lane.b32.xlu0 %v2243, 19
  %v2261 = vpop.permute.xlu0 %2260
  %2262 = vrot.lane.b32.xlu0 %v2244, 19
  %v2263 = vpop.permute.xlu0 %2262
  %2264 = vrot.lane.b32.xlu0 %v2245, 19
  %v2265 = vpop.permute.xlu0 %2264
  %2266 = vrot.lane.b32.xlu0 %v2246, 19
  %v2267 = vpop.permute.xlu0 %2266
  %vm2268 = vcmask 154624
  %v2269 = vsel %vm2268, %v2259, %v2261
  %v2270 = vsel %vm2268, %v2261, %v2263
  %v2271 = vsel %vm2268, %v2263, %v2265
  %v2272 = vsel %vm2268, %v2265, %v2267
  %vm2278 = vcmask 1047704
  %2279 = vst.msk [vmem:[%s5] sm:$0xff] %vm2278, %v2259
  %2280 = vst [vmem:[%s5 + $0x8] sm:$0xff] %v2269
  %2281 = vst [vmem:[%s5 + $0x10] sm:$0xff] %v2270
  %2282 = vst [vmem:[%s5 + $0x18] sm:$0xff] %v2271
  %vm2283 = vcmask 957440
  %2284 = vst.msk [vmem:[%s5 + $0x20] sm:$0xff] %vm2283, %v2272
  // Predicated region
  $region22: #{double_module_forward.3} parent=0 // pred_check
    _
  $region23: #{double_module_forward.3} parent=0 // pred_check_branch
    %2286 = sbr.rel (0) target = $region25
  $region24: #{double_module_forward.3} parent=0 // pred_region
    _
  $region25: #{double_module_forward.3} parent=0 // pred_fallthru
    _
  // Predicated region
  $region26: #{double_module_forward.3} parent=0 // pred_check
    _
  $region27: #{double_module_forward.3} parent=0 // pred_check_branch
    %2288 = sbr.rel (0) target = $region29
  $region28: #{double_module_forward.3} parent=0 // pred_region
    _
  $region29: #{double_module_forward.3} parent=0 // pred_fallthru
    _

// kernel: double_module_forward.4
$region0: #{double_module_forward.4}
  #allocation0 [shape = 'u32[]', space=smem, size = 0x4, offset = 0x4, fixed_abs, tag = 'smem constant byte address 0x4 - core index']
  #allocation1 [shape = 'u32[144,128]{1,0:T(1,128)}', space=vmem, size = 0x12000, scoped, tag = 'internal scratch']
  %s0 = inlined_call_operand.vmem [shape: f32[8,648], index: 0, kind: input, shape index: {}]
  %s1 = inlined_call_operand.vmem [shape: f32[9,8,8], index: 1, kind: input, shape index: {}]
  %s2 = inlined_call_operand.vmem [shape: f32[8,1], index: 2, kind: input, shape index: {}]
  %s3 = inlined_call_operand.vmem [shape: f32[8,1], index: 3, kind: input, shape index: {}]
  %s4 = inlined_call_operand.vmem [shape: f32[1,610], index: 4, kind: input, shape index: {}]
  %s5 = inlined_call_operand.vmem [shape: f32[8,648], index: 5, kind: output, shape index: {}]
  %s6 = sld [smem:[#allocation0]]
  $region30: #{double_module_forward.4} parent=0
    _
  %s8 = ssub.s32 1, %s6
  %s9 = scalar_select 0, %s8, %s6
  // Predicated region
  $region2: #{double_module_forward.4} parent=0 // pred_check
    _
  $region3: #{double_module_forward.4} parent=0 // pred_check_branch
    %11 = sbr.rel (0) target = $region5
  $region4: #{double_module_forward.4} parent=0 // pred_region
    _
  $region5: #{double_module_forward.4} parent=0 // pred_fallthru
    _
  // Predicated region
  $region6: #{double_module_forward.4} parent=0 // pred_check
    _
  $region7: #{double_module_forward.4} parent=0 // pred_check_branch
    %13 = sbr.rel (0) target = $region9
  $region8: #{double_module_forward.4} parent=0 // pred_region
    _
  $region9: #{double_module_forward.4} parent=0 // pred_fallthru
    _
  // Predicated region
  $region10: #{double_module_forward.4} parent=0 // pred_check
    _
  $region11: #{double_module_forward.4} parent=0 // pred_check_branch
    %15 = sbr.rel (0) target = $region13
  $region12: #{double_module_forward.4} parent=0 // pred_region
    _
  $region13: #{double_module_forward.4} parent=0 // pred_fallthru
    _
  // Predicated region
  $region14: #{double_module_forward.4} parent=0 // pred_check
    _
  $region15: #{double_module_forward.4} parent=0 // pred_check_branch
    %17 = sbr.rel (0) target = $region17
  $region16: #{double_module_forward.4} parent=0 // pred_region
    _
  $region17: #{double_module_forward.4} parent=0 // pred_fallthru
    _
  // Predicated region
  $region18: #{double_module_forward.4} parent=0 // pred_check
    _
  $region19: #{double_module_forward.4} parent=0 // pred_check_branch
    %19 = sbr.rel (0) target = $region21
  $region20: #{double_module_forward.4} parent=0 // pred_region
    _
  $region21: #{double_module_forward.4} parent=0 // pred_fallthru
    _
  %v20 = vld [vmem:[%s0] sm:$0xff]
  %v21 = vld [vmem:[%s0 + $0x8] sm:$0xff]
  %v22 = vld [vmem:[%s0 + $0x10] sm:$0xff]
  %v23 = vld [vmem:[%s0 + $0x18] sm:$0xff]
  %v24 = vld [vmem:[%s0 + $0x20] sm:$0xff]
  %v25 = vld [vmem:[%s1] sm:$0xff]
  %s26 = scalar_lea.vmem %s1, 8
  %v27 = vld [vmem:[%s26] sm:$0xff]
  %33 = vrot.lane.b32.xlu0 %v20, 127
  %v34 = vpop.permute.xlu0 %33
  %35 = vrot.lane.b32.xlu0 %v21, 127
  %v36 = vpop.permute.xlu0 %35
  %37 = vrot.lane.b32.xlu0 %v22, 127
  %v38 = vpop.permute.xlu0 %37
  %39 = vrot.lane.b32.xlu0 %v23, 127
  %v40 = vpop.permute.xlu0 %39
  %41 = vrot.lane.b32.xlu0 %v24, 127
  %v42 = vpop.permute.xlu0 %41
  %vm43 = vcmask 1039360
  %v44 = vsel %vm43, %v34, %v36
  %v45 = vsel %vm43, %v36, %v38
  %v46 = vsel %vm43, %v38, %v40
  %v47 = vsel %vm43, %v40, %v42
  %vm53 = vcmask 64512
  %v55 = vsel %vm53, %v27, 0
  %57 = vmatprep.subr.mxu0 %v45
  %58 = vmatpush1.msra.mxu0 %v44
  %59 = vmatprep.subr.mxu0 0.0
  %60 = vmatpush1.msra.mxu0 0.0
  %61 = vmatprep.subr.mxu0 0.0
  %62 = vmatpush1.msra.mxu0 0.0
  %63 = vmatprep.subr.mxu0 0.0
  %64 = vmatpush1.msra.mxu0 0.0
  %65 = vmatprep.subr.mxu0 0.0
  %66 = vmatpush1.msra.mxu0 0.0
  %67 = vmatprep.subr.mxu0 0.0
  %68 = vmatpush1.msra.mxu0 0.0
  %69 = vmatprep.subr.mxu0 0.0
  %70 = vmatpush1.msra.mxu0 0.0
  %71 = vmatprep.subr.mxu0 0.0
  %72 = vmatpush1.msra.mxu0 0.0
  %73 = vmatprep.subr.mxu0 0.0
  %74 = vmatpush1.msra.mxu0 0.0
  %75 = vmatprep.subr.mxu0 0.0
  %76 = vmatpush1.msra.mxu0 0.0
  %77 = vmatprep.subr.mxu0 0.0
  %78 = vmatpush1.msra.mxu0 0.0
  %79 = vmatprep.subr.mxu0 0.0
  %80 = vmatpush1.msra.mxu0 0.0
  %81 = vmatprep.subr.mxu0 0.0
  %82 = vmatpush1.msra.mxu0 0.0
  %83 = vmatprep.subr.mxu0 0.0
  %84 = vmatpush1.msra.mxu0 0.0
  %85 = vmatprep.subr.mxu0 0.0
  %86 = vmatpush1.msra.mxu0 0.0
  %87 = vmatprep.subr.mxu0 0.0
  %88 = vmatpush1.msra.mxu0 0.0
  %89 = vmatprep.subr.mxu0 0.0
  %90 = vmatpush1.msra.mxu0 0.0
  %91 = vmatprep.subr.mxu0 0.0
  %92 = vmatpush1.msra.mxu0 0.0
  %93 = vmatprep.subr.mxu0 0.0
  %94 = vmatpush1.msra.mxu0 0.0
  %95 = vmatprep.subr.mxu0 0.0
  %96 = vmatpush1.msra.mxu0 0.0
  %97 = vmatprep.subr.mxu0 0.0
  %98 = vmatpush1.msra.mxu0 0.0
  %99 = vmatprep.subr.mxu0 0.0
  %100 = vmatpush1.msra.mxu0 0.0
  %101 = vmatprep.subr.mxu0 0.0
  %102 = vmatpush1.msra.mxu0 0.0
  %103 = vmatprep.subr.mxu0 0.0
  %104 = vmatpush1.msra.mxu0 0.0
  %105 = vmatprep.subr.mxu0 0.0
  %106 = vmatpush1.msra.mxu0 0.0
  %107 = vmatprep.subr.mxu0 0.0
  %108 = vmatpush1.msra.mxu0 0.0
  %109 = vmatprep.subr.mxu0 0.0
  %110 = vmatpush1.msra.mxu0 0.0
  %111 = vmatprep.subr.mxu0 0.0
  %112 = vmatpush1.msra.mxu0 0.0
  %113 = vmatprep.subr.mxu0 0.0
  %114 = vmatpush1.msra.mxu0 0.0
  %115 = vmatprep.subr.mxu0 0.0
  %116 = vmatpush1.msra.mxu0 0.0
  %117 = vmatprep.subr.mxu0 0.0
  %118 = vmatpush1.msra.mxu0 0.0
  %119 = vmatprep.subr.mxu0 0.0
  %120 = vmatpush1.msra.mxu0 0.0
  %121 = vmatprep.mubr.f32.mxu0 0.0
  %122 = vmatmul.mubr.f32.gmra.mrb[0].mxu0 %v55
  %v123 = vpop.f32.mrb[0].mxu0
  %v124 = vadd.f32 0.0, %v123
  %v125 = vpop.f32.mrb[0].mxu0
  %v126 = vadd.f32 0.0, %v125
  %127 = vdwg.mxu0
  %128 = vmatprep.subr.mxu0 %v47
  %129 = vmatpush1.msra.mxu0 %v46
  %130 = vmatprep.subr.mxu0 0.0
  %131 = vmatpush1.msra.mxu0 0.0
  %132 = vmatprep.subr.mxu0 0.0
  %133 = vmatpush1.msra.mxu0 0.0
  %134 = vmatprep.subr.mxu0 0.0
  %135 = vmatpush1.msra.mxu0 0.0
  %136 = vmatprep.subr.mxu0 0.0
  %137 = vmatpush1.msra.mxu0 0.0
  %138 = vmatprep.subr.mxu0 0.0
  %139 = vmatpush1.msra.mxu0 0.0
  %140 = vmatprep.subr.mxu0 0.0
  %141 = vmatpush1.msra.mxu0 0.0
  %142 = vmatprep.subr.mxu0 0.0
  %143 = vmatpush1.msra.mxu0 0.0
  %144 = vmatprep.subr.mxu0 0.0
  %145 = vmatpush1.msra.mxu0 0.0
  %146 = vmatprep.subr.mxu0 0.0
  %147 = vmatpush1.msra.mxu0 0.0
  %148 = vmatprep.subr.mxu0 0.0
  %149 = vmatpush1.msra.mxu0 0.0
  %150 = vmatprep.subr.mxu0 0.0
  %151 = vmatpush1.msra.mxu0 0.0
  %152 = vmatprep.subr.mxu0 0.0
  %153 = vmatpush1.msra.mxu0 0.0
  %154 = vmatprep.subr.mxu0 0.0
  %155 = vmatpush1.msra.mxu0 0.0
  %156 = vmatprep.subr.mxu0 0.0
  %157 = vmatpush1.msra.mxu0 0.0
  %158 = vmatprep.subr.mxu0 0.0
  %159 = vmatpush1.msra.mxu0 0.0
  %160 = vmatprep.subr.mxu0 0.0
  %161 = vmatpush1.msra.mxu0 0.0
  %162 = vmatprep.subr.mxu0 0.0
  %163 = vmatpush1.msra.mxu0 0.0
  %164 = vmatprep.subr.mxu0 0.0
  %165 = vmatpush1.msra.mxu0 0.0
  %166 = vmatprep.subr.mxu0 0.0
  %167 = vmatpush1.msra.mxu0 0.0
  %168 = vmatprep.subr.mxu0 0.0
  %169 = vmatpush1.msra.mxu0 0.0
  %170 = vmatprep.subr.mxu0 0.0
  %171 = vmatpush1.msra.mxu0 0.0
  %172 = vmatprep.subr.mxu0 0.0
  %173 = vmatpush1.msra.mxu0 0.0
  %174 = vmatprep.subr.mxu0 0.0
  %175 = vmatpush1.msra.mxu0 0.0
  %176 = vmatprep.subr.mxu0 0.0
  %177 = vmatpush1.msra.mxu0 0.0
  %178 = vmatprep.subr.mxu0 0.0
  %179 = vmatpush1.msra.mxu0 0.0
  %180 = vmatprep.subr.mxu0 0.0
  %181 = vmatpush1.msra.mxu0 0.0
  %182 = vmatprep.subr.mxu0 0.0
  %183 = vmatpush1.msra.mxu0 0.0
  %184 = vmatprep.subr.mxu0 0.0
  %185 = vmatpush1.msra.mxu0 0.0
  %186 = vmatprep.subr.mxu0 0.0
  %187 = vmatpush1.msra.mxu0 0.0
  %188 = vmatprep.subr.mxu0 0.0
  %189 = vmatpush1.msra.mxu0 0.0
  %190 = vmatprep.subr.mxu0 0.0
  %191 = vmatpush1.msra.mxu0 0.0
  %192 = vmatprep.mubr.f32.mxu0 0.0
  %193 = vmatmul.mubr.f32.gmra.mrb[0].mxu0 %v55
  %v194 = vpop.f32.mrb[0].mxu0
  %v195 = vadd.f32 0.0, %v194
  %v196 = vpop.f32.mrb[0].mxu0
  %v197 = vadd.f32 0.0, %v196
  %198 = vdwg.mxu0
  %199 = vmatprep.subr.mxu0 0.0
  %200 = vmatpush1.msra.mxu0 %v42
  %201 = vmatprep.subr.mxu0 0.0
  %202 = vmatpush1.msra.mxu0 0.0
  %203 = vmatprep.subr.mxu0 0.0
  %204 = vmatpush1.msra.mxu0 0.0
  %205 = vmatprep.subr.mxu0 0.0
  %206 = vmatpush1.msra.mxu0 0.0
  %207 = vmatprep.subr.mxu0 0.0
  %208 = vmatpush1.msra.mxu0 0.0
  %209 = vmatprep.subr.mxu0 0.0
  %210 = vmatpush1.msra.mxu0 0.0
  %211 = vmatprep.subr.mxu0 0.0
  %212 = vmatpush1.msra.mxu0 0.0
  %213 = vmatprep.subr.mxu0 0.0
  %214 = vmatpush1.msra.mxu0 0.0
  %215 = vmatprep.subr.mxu0 0.0
  %216 = vmatpush1.msra.mxu0 0.0
  %217 = vmatprep.subr.mxu0 0.0
  %218 = vmatpush1.msra.mxu0 0.0
  %219 = vmatprep.subr.mxu0 0.0
  %220 = vmatpush1.msra.mxu0 0.0
  %221 = vmatprep.subr.mxu0 0.0
  %222 = vmatpush1.msra.mxu0 0.0
  %223 = vmatprep.subr.mxu0 0.0
  %224 = vmatpush1.msra.mxu0 0.0
  %225 = vmatprep.subr.mxu0 0.0
  %226 = vmatpush1.msra.mxu0 0.0
  %227 = vmatprep.subr.mxu0 0.0
  %228 = vmatpush1.msra.mxu0 0.0
  %229 = vmatprep.subr.mxu0 0.0
  %230 = vmatpush1.msra.mxu0 0.0
  %231 = vmatprep.subr.mxu0 0.0
  %232 = vmatpush1.msra.mxu0 0.0
  %233 = vmatprep.subr.mxu0 0.0
  %234 = vmatpush1.msra.mxu0 0.0
  %235 = vmatprep.subr.mxu0 0.0
  %236 = vmatpush1.msra.mxu0 0.0
  %237 = vmatprep.subr.mxu0 0.0
  %238 = vmatpush1.msra.mxu0 0.0
  %239 = vmatprep.subr.mxu0 0.0
  %240 = vmatpush1.msra.mxu0 0.0
  %241 = vmatprep.subr.mxu0 0.0
  %242 = vmatpush1.msra.mxu0 0.0
  %243 = vmatprep.subr.mxu0 0.0
  %244 = vmatpush1.msra.mxu0 0.0
  %245 = vmatprep.subr.mxu0 0.0
  %246 = vmatpush1.msra.mxu0 0.0
  %247 = vmatprep.subr.mxu0 0.0
  %248 = vmatpush1.msra.mxu0 0.0
  %249 = vmatprep.subr.mxu0 0.0
  %250 = vmatpush1.msra.mxu0 0.0
  %251 = vmatprep.subr.mxu0 0.0
  %252 = vmatpush1.msra.mxu0 0.0
  %253 = vmatprep.subr.mxu0 0.0
  %254 = vmatpush1.msra.mxu0 0.0
  %255 = vmatprep.subr.mxu0 0.0
  %256 = vmatpush1.msra.mxu0 0.0
  %257 = vmatprep.subr.mxu0 0.0
  %258 = vmatpush1.msra.mxu0 0.0
  %259 = vmatprep.subr.mxu0 0.0
  %260 = vmatpush1.msra.mxu0 0.0
  %261 = vmatprep.subr.mxu0 0.0
  %262 = vmatpush1.msra.mxu0 0.0
  %263 = vmatprep.mubr.f32.mxu0 0.0
  %264 = vmatmul.mubr.f32.gmra.mrb[0].mxu0 %v55
  %v265 = vpop.f32.mrb[0].mxu0
  %v266 = vadd.f32 0.0, %v265
  %v267 = vpop.f32.mrb[0].mxu0
  %268 = vdwg.mxu0
  %v270 = vsel %vm53, %v25, 0
  %272 = vmatprep.subr.mxu0 %v21
  %273 = vmatpush1.msra.mxu0 %v20
  %274 = vmatprep.subr.mxu0 0.0
  %275 = vmatpush1.msra.mxu0 0.0
  %276 = vmatprep.subr.mxu0 0.0
  %277 = vmatpush1.msra.mxu0 0.0
  %278 = vmatprep.subr.mxu0 0.0
  %279 = vmatpush1.msra.mxu0 0.0
  %280 = vmatprep.subr.mxu0 0.0
  %281 = vmatpush1.msra.mxu0 0.0
  %282 = vmatprep.subr.mxu0 0.0
  %283 = vmatpush1.msra.mxu0 0.0
  %284 = vmatprep.subr.mxu0 0.0
  %285 = vmatpush1.msra.mxu0 0.0
  %286 = vmatprep.subr.mxu0 0.0
  %287 = vmatpush1.msra.mxu0 0.0
  %288 = vmatprep.subr.mxu0 0.0
  %289 = vmatpush1.msra.mxu0 0.0
  %290 = vmatprep.subr.mxu0 0.0
  %291 = vmatpush1.msra.mxu0 0.0
  %292 = vmatprep.subr.mxu0 0.0
  %293 = vmatpush1.msra.mxu0 0.0
  %294 = vmatprep.subr.mxu0 0.0
  %295 = vmatpush1.msra.mxu0 0.0
  %296 = vmatprep.subr.mxu0 0.0
  %297 = vmatpush1.msra.mxu0 0.0
  %298 = vmatprep.subr.mxu0 0.0
  %299 = vmatpush1.msra.mxu0 0.0
  %300 = vmatprep.subr.mxu0 0.0
  %301 = vmatpush1.msra.mxu0 0.0
  %302 = vmatprep.subr.mxu0 0.0
  %303 = vmatpush1.msra.mxu0 0.0
  %304 = vmatprep.subr.mxu0 0.0
  %305 = vmatpush1.msra.mxu0 0.0
  %306 = vmatprep.subr.mxu0 0.0
  %307 = vmatpush1.msra.mxu0 0.0
  %308 = vmatprep.subr.mxu0 0.0
  %309 = vmatpush1.msra.mxu0 0.0
  %310 = vmatprep.subr.mxu0 0.0
  %311 = vmatpush1.msra.mxu0 0.0
  %312 = vmatprep.subr.mxu0 0.0
  %313 = vmatpush1.msra.mxu0 0.0
  %314 = vmatprep.subr.mxu0 0.0
  %315 = vmatpush1.msra.mxu0 0.0
  %316 = vmatprep.subr.mxu0 0.0
  %317 = vmatpush1.msra.mxu0 0.0
  %318 = vmatprep.subr.mxu0 0.0
  %319 = vmatpush1.msra.mxu0 0.0
  %320 = vmatprep.subr.mxu0 0.0
  %321 = vmatpush1.msra.mxu0 0.0
  %322 = vmatprep.subr.mxu0 0.0
  %323 = vmatpush1.msra.mxu0 0.0
  %324 = vmatprep.subr.mxu0 0.0
  %325 = vmatpush1.msra.mxu0 0.0
  %326 = vmatprep.subr.mxu0 0.0
  %327 = vmatpush1.msra.mxu0 0.0
  %328 = vmatprep.subr.mxu0 0.0
  %329 = vmatpush1.msra.mxu0 0.0
  %330 = vmatprep.subr.mxu0 0.0
  %331 = vmatpush1.msra.mxu0 0.0
  %332 = vmatprep.subr.mxu0 0.0
  %333 = vmatpush1.msra.mxu0 0.0
  %334 = vmatprep.subr.mxu0 0.0
  %335 = vmatpush1.msra.mxu0 0.0
  %336 = vmatprep.mubr.f32.mxu0 0.0
  %337 = vmatmul.mubr.f32.gmra.mrb[0].mxu0 %v270
  %v338 = vpop.f32.mrb[0].mxu0
  %v339 = vadd.f32 %v124, %v338
  %v340 = vpop.f32.mrb[0].mxu0
  %v341 = vadd.f32 %v126, %v340
  %342 = vdwg.mxu0
  %343 = vmatprep.subr.mxu0 %v23
  %344 = vmatpush1.msra.mxu0 %v22
  %345 = vmatprep.subr.mxu0 0.0
  %346 = vmatpush1.msra.mxu0 0.0
  %347 = vmatprep.subr.mxu0 0.0
  %348 = vmatpush1.msra.mxu0 0.0
  %349 = vmatprep.subr.mxu0 0.0
  %350 = vmatpush1.msra.mxu0 0.0
  %351 = vmatprep.subr.mxu0 0.0
  %352 = vmatpush1.msra.mxu0 0.0
  %353 = vmatprep.subr.mxu0 0.0
  %354 = vmatpush1.msra.mxu0 0.0
  %355 = vmatprep.subr.mxu0 0.0
  %356 = vmatpush1.msra.mxu0 0.0
  %357 = vmatprep.subr.mxu0 0.0
  %358 = vmatpush1.msra.mxu0 0.0
  %359 = vmatprep.subr.mxu0 0.0
  %360 = vmatpush1.msra.mxu0 0.0
  %361 = vmatprep.subr.mxu0 0.0
  %362 = vmatpush1.msra.mxu0 0.0
  %363 = vmatprep.subr.mxu0 0.0
  %364 = vmatpush1.msra.mxu0 0.0
  %365 = vmatprep.subr.mxu0 0.0
  %366 = vmatpush1.msra.mxu0 0.0
  %367 = vmatprep.subr.mxu0 0.0
  %368 = vmatpush1.msra.mxu0 0.0
  %369 = vmatprep.subr.mxu0 0.0
  %370 = vmatpush1.msra.mxu0 0.0
  %371 = vmatprep.subr.mxu0 0.0
  %372 = vmatpush1.msra.mxu0 0.0
  %373 = vmatprep.subr.mxu0 0.0
  %374 = vmatpush1.msra.mxu0 0.0
  %375 = vmatprep.subr.mxu0 0.0
  %376 = vmatpush1.msra.mxu0 0.0
  %377 = vmatprep.subr.mxu0 0.0
  %378 = vmatpush1.msra.mxu0 0.0
  %379 = vmatprep.subr.mxu0 0.0
  %380 = vmatpush1.msra.mxu0 0.0
  %381 = vmatprep.subr.mxu0 0.0
  %382 = vmatpush1.msra.mxu0 0.0
  %383 = vmatprep.subr.mxu0 0.0
  %384 = vmatpush1.msra.mxu0 0.0
  %385 = vmatprep.subr.mxu0 0.0
  %386 = vmatpush1.msra.mxu0 0.0
  %387 = vmatprep.subr.mxu0 0.0
  %388 = vmatpush1.msra.mxu0 0.0
  %389 = vmatprep.subr.mxu0 0.0
  %390 = vmatpush1.msra.mxu0 0.0
  %391 = vmatprep.subr.mxu0 0.0
  %392 = vmatpush1.msra.mxu0 0.0
  %393 = vmatprep.subr.mxu0 0.0
  %394 = vmatpush1.msra.mxu0 0.0
  %395 = vmatprep.subr.mxu0 0.0
  %396 = vmatpush1.msra.mxu0 0.0
  %397 = vmatprep.subr.mxu0 0.0
  %398 = vmatpush1.msra.mxu0 0.0
  %399 = vmatprep.subr.mxu0 0.0
  %400 = vmatpush1.msra.mxu0 0.0
  %401 = vmatprep.subr.mxu0 0.0
  %402 = vmatpush1.msra.mxu0 0.0
  %403 = vmatprep.subr.mxu0 0.0
  %404 = vmatpush1.msra.mxu0 0.0
  %405 = vmatprep.subr.mxu0 0.0
  %406 = vmatpush1.msra.mxu0 0.0
  %407 = vmatprep.mubr.f32.mxu0 0.0
  %408 = vmatmul.mubr.f32.gmra.mrb[0].mxu0 %v270
  %v409 = vpop.f32.mrb[0].mxu0
  %v410 = vadd.f32 %v195, %v409
  %v411 = vpop.f32.mrb[0].mxu0
  %v412 = vadd.f32 %v197, %v411
  %413 = vdwg.mxu0
  %414 = vmatprep.subr.mxu0 0.0
  %415 = vmatpush1.msra.mxu0 %v24
  %416 = vmatprep.subr.mxu0 0.0
  %417 = vmatpush1.msra.mxu0 0.0
  %418 = vmatprep.subr.mxu0 0.0
  %419 = vmatpush1.msra.mxu0 0.0
  %420 = vmatprep.subr.mxu0 0.0
  %421 = vmatpush1.msra.mxu0 0.0
  %422 = vmatprep.subr.mxu0 0.0
  %423 = vmatpush1.msra.mxu0 0.0
  %424 = vmatprep.subr.mxu0 0.0
  %425 = vmatpush1.msra.mxu0 0.0
  %426 = vmatprep.subr.mxu0 0.0
  %427 = vmatpush1.msra.mxu0 0.0
  %428 = vmatprep.subr.mxu0 0.0
  %429 = vmatpush1.msra.mxu0 0.0
  %430 = vmatprep.subr.mxu0 0.0
  %431 = vmatpush1.msra.mxu0 0.0
  %432 = vmatprep.subr.mxu0 0.0
  %433 = vmatpush1.msra.mxu0 0.0
  %434 = vmatprep.subr.mxu0 0.0
  %435 = vmatpush1.msra.mxu0 0.0
  %436 = vmatprep.subr.mxu0 0.0
  %437 = vmatpush1.msra.mxu0 0.0
  %438 = vmatprep.subr.mxu0 0.0
  %439 = vmatpush1.msra.mxu0 0.0
  %440 = vmatprep.subr.mxu0 0.0
  %441 = vmatpush1.msra.mxu0 0.0
  %442 = vmatprep.subr.mxu0 0.0
  %443 = vmatpush1.msra.mxu0 0.0
  %444 = vmatprep.subr.mxu0 0.0
  %445 = vmatpush1.msra.mxu0 0.0
  %446 = vmatprep.subr.mxu0 0.0
  %447 = vmatpush1.msra.mxu0 0.0
  %448 = vmatprep.subr.mxu0 0.0
  %449 = vmatpush1.msra.mxu0 0.0
  %450 = vmatprep.subr.mxu0 0.0
  %451 = vmatpush1.msra.mxu0 0.0
  %452 = vmatprep.subr.mxu0 0.0
  %453 = vmatpush1.msra.mxu0 0.0
  %454 = vmatprep.subr.mxu0 0.0
  %455 = vmatpush1.msra.mxu0 0.0
  %456 = vmatprep.subr.mxu0 0.0
  %457 = vmatpush1.msra.mxu0 0.0
  %458 = vmatprep.subr.mxu0 0.0
  %459 = vmatpush1.msra.mxu0 0.0
  %460 = vmatprep.subr.mxu0 0.0
  %461 = vmatpush1.msra.mxu0 0.0
  %462 = vmatprep.subr.mxu0 0.0
  %463 = vmatpush1.msra.mxu0 0.0
  %464 = vmatprep.subr.mxu0 0.0
  %465 = vmatpush1.msra.mxu0 0.0
  %466 = vmatprep.subr.mxu0 0.0
  %467 = vmatpush1.msra.mxu0 0.0
  %468 = vmatprep.subr.mxu0 0.0
  %469 = vmatpush1.msra.mxu0 0.0
  %470 = vmatprep.subr.mxu0 0.0
  %471 = vmatpush1.msra.mxu0 0.0
  %472 = vmatprep.subr.mxu0 0.0
  %473 = vmatpush1.msra.mxu0 0.0
  %474 = vmatprep.subr.mxu0 0.0
  %475 = vmatpush1.msra.mxu0 0.0
  %476 = vmatprep.subr.mxu0 0.0
  %477 = vmatpush1.msra.mxu0 0.0
  %478 = vmatprep.mubr.f32.mxu0 0.0
  %479 = vmatmul.mubr.f32.gmra.mrb[0].mxu0 %v270
  %v480 = vpop.f32.mrb[0].mxu0
  %v481 = vadd.f32 %v266, %v480
  %v482 = vpop.f32.mrb[0].mxu0
  %483 = vdwg.mxu0
  %s484 = scalar_lea.vmem %s1, 16
  %v485 = vld [vmem:[%s484] sm:$0xff]
  %486 = vrot.lane.b32.xlu0 %v20, 126
  %v487 = vpop.permute.xlu0 %486
  %488 = vrot.lane.b32.xlu0 %v21, 126
  %v489 = vpop.permute.xlu0 %488
  %490 = vrot.lane.b32.xlu0 %v22, 126
  %v491 = vpop.permute.xlu0 %490
  %492 = vrot.lane.b32.xlu0 %v23, 126
  %v493 = vpop.permute.xlu0 %492
  %494 = vrot.lane.b32.xlu0 %v24, 126
  %v495 = vpop.permute.xlu0 %494
  %vm496 = vcmask 1031168
  %v497 = vsel %vm496, %v487, %v489
  %v498 = vsel %vm496, %v489, %v491
  %v499 = vsel %vm496, %v491, %v493
  %v500 = vsel %vm496, %v493, %v495
  %v507 = vsel %vm53, %v485, 0
  %509 = vmatprep.subr.mxu0 %v498
  %510 = vmatpush1.msra.mxu0 %v497
  %511 = vmatprep.subr.mxu0 0.0
  %512 = vmatpush1.msra.mxu0 0.0
  %513 = vmatprep.subr.mxu0 0.0
  %514 = vmatpush1.msra.mxu0 0.0
  %515 = vmatprep.subr.mxu0 0.0
  %516 = vmatpush1.msra.mxu0 0.0
  %517 = vmatprep.subr.mxu0 0.0
  %518 = vmatpush1.msra.mxu0 0.0
  %519 = vmatprep.subr.mxu0 0.0
  %520 = vmatpush1.msra.mxu0 0.0
  %521 = vmatprep.subr.mxu0 0.0
  %522 = vmatpush1.msra.mxu0 0.0
  %523 = vmatprep.subr.mxu0 0.0
  %524 = vmatpush1.msra.mxu0 0.0
  %525 = vmatprep.subr.mxu0 0.0
  %526 = vmatpush1.msra.mxu0 0.0
  %527 = vmatprep.subr.mxu0 0.0
  %528 = vmatpush1.msra.mxu0 0.0
  %529 = vmatprep.subr.mxu0 0.0
  %530 = vmatpush1.msra.mxu0 0.0
  %531 = vmatprep.subr.mxu0 0.0
  %532 = vmatpush1.msra.mxu0 0.0
  %533 = vmatprep.subr.mxu0 0.0
  %534 = vmatpush1.msra.mxu0 0.0
  %535 = vmatprep.subr.mxu0 0.0
  %536 = vmatpush1.msra.mxu0 0.0
  %537 = vmatprep.subr.mxu0 0.0
  %538 = vmatpush1.msra.mxu0 0.0
  %539 = vmatprep.subr.mxu0 0.0
  %540 = vmatpush1.msra.mxu0 0.0
  %541 = vmatprep.subr.mxu0 0.0
  %542 = vmatpush1.msra.mxu0 0.0
  %543 = vmatprep.subr.mxu0 0.0
  %544 = vmatpush1.msra.mxu0 0.0
  %545 = vmatprep.subr.mxu0 0.0
  %546 = vmatpush1.msra.mxu0 0.0
  %547 = vmatprep.subr.mxu0 0.0
  %548 = vmatpush1.msra.mxu0 0.0
  %549 = vmatprep.subr.mxu0 0.0
  %550 = vmatpush1.msra.mxu0 0.0
  %551 = vmatprep.subr.mxu0 0.0
  %552 = vmatpush1.msra.mxu0 0.0
  %553 = vmatprep.subr.mxu0 0.0
  %554 = vmatpush1.msra.mxu0 0.0
  %555 = vmatprep.subr.mxu0 0.0
  %556 = vmatpush1.msra.mxu0 0.0
  %557 = vmatprep.subr.mxu0 0.0
  %558 = vmatpush1.msra.mxu0 0.0
  %559 = vmatprep.subr.mxu0 0.0
  %560 = vmatpush1.msra.mxu0 0.0
  %561 = vmatprep.subr.mxu0 0.0
  %562 = vmatpush1.msra.mxu0 0.0
  %563 = vmatprep.subr.mxu0 0.0
  %564 = vmatpush1.msra.mxu0 0.0
  %565 = vmatprep.subr.mxu0 0.0
  %566 = vmatpush1.msra.mxu0 0.0
  %567 = vmatprep.subr.mxu0 0.0
  %568 = vmatpush1.msra.mxu0 0.0
  %569 = vmatprep.subr.mxu0 0.0
  %570 = vmatpush1.msra.mxu0 0.0
  %571 = vmatprep.subr.mxu0 0.0
  %572 = vmatpush1.msra.mxu0 0.0
  %573 = vmatprep.mubr.f32.mxu0 0.0
  %574 = vmatmul.mubr.f32.gmra.mrb[0].mxu0 %v507
  %v575 = vpop.f32.mrb[0].mxu0
  %v576 = vadd.f32 0.0, %v575
  %v577 = vpop.f32.mrb[0].mxu0
  %v578 = vadd.f32 0.0, %v577
  %579 = vdwg.mxu0
  %580 = vmatprep.subr.mxu0 %v500
  %581 = vmatpush1.msra.mxu0 %v499
  %582 = vmatprep.subr.mxu0 0.0
  %583 = vmatpush1.msra.mxu0 0.0
  %584 = vmatprep.subr.mxu0 0.0
  %585 = vmatpush1.msra.mxu0 0.0
  %586 = vmatprep.subr.mxu0 0.0
  %587 = vmatpush1.msra.mxu0 0.0
  %588 = vmatprep.subr.mxu0 0.0
  %589 = vmatpush1.msra.mxu0 0.0
  %590 = vmatprep.subr.mxu0 0.0
  %591 = vmatpush1.msra.mxu0 0.0
  %592 = vmatprep.subr.mxu0 0.0
  %593 = vmatpush1.msra.mxu0 0.0
  %594 = vmatprep.subr.mxu0 0.0
  %595 = vmatpush1.msra.mxu0 0.0
  %596 = vmatprep.subr.mxu0 0.0
  %597 = vmatpush1.msra.mxu0 0.0
  %598 = vmatprep.subr.mxu0 0.0
  %599 = vmatpush1.msra.mxu0 0.0
  %600 = vmatprep.subr.mxu0 0.0
  %601 = vmatpush1.msra.mxu0 0.0
  %602 = vmatprep.subr.mxu0 0.0
  %603 = vmatpush1.msra.mxu0 0.0
  %604 = vmatprep.subr.mxu0 0.0
  %605 = vmatpush1.msra.mxu0 0.0
  %606 = vmatprep.subr.mxu0 0.0
  %607 = vmatpush1.msra.mxu0 0.0
  %608 = vmatprep.subr.mxu0 0.0
  %609 = vmatpush1.msra.mxu0 0.0
  %610 = vmatprep.subr.mxu0 0.0
  %611 = vmatpush1.msra.mxu0 0.0
  %612 = vmatprep.subr.mxu0 0.0
  %613 = vmatpush1.msra.mxu0 0.0
  %614 = vmatprep.subr.mxu0 0.0
  %615 = vmatpush1.msra.mxu0 0.0
  %616 = vmatprep.subr.mxu0 0.0
  %617 = vmatpush1.msra.mxu0 0.0
  %618 = vmatprep.subr.mxu0 0.0
  %619 = vmatpush1.msra.mxu0 0.0
  %620 = vmatprep.subr.mxu0 0.0
  %621 = vmatpush1.msra.mxu0 0.0
  %622 = vmatprep.subr.mxu0 0.0
  %623 = vmatpush1.msra.mxu0 0.0
  %624 = vmatprep.subr.mxu0 0.0
  %625 = vmatpush1.msra.mxu0 0.0
  %626 = vmatprep.subr.mxu0 0.0
  %627 = vmatpush1.msra.mxu0 0.0
  %628 = vmatprep.subr.mxu0 0.0
  %629 = vmatpush1.msra.mxu0 0.0
  %630 = vmatprep.subr.mxu0 0.0
  %631 = vmatpush1.msra.mxu0 0.0
  %632 = vmatprep.subr.mxu0 0.0
  %633 = vmatpush1.msra.mxu0 0.0
  %634 = vmatprep.subr.mxu0 0.0
  %635 = vmatpush1.msra.mxu0 0.0
  %636 = vmatprep.subr.mxu0 0.0
  %637 = vmatpush1.msra.mxu0 0.0
  %638 = vmatprep.subr.mxu0 0.0
  %639 = vmatpush1.msra.mxu0 0.0
  %640 = vmatprep.subr.mxu0 0.0
  %641 = vmatpush1.msra.mxu0 0.0
  %642 = vmatprep.subr.mxu0 0.0
  %643 = vmatpush1.msra.mxu0 0.0
  %644 = vmatprep.mubr.f32.mxu0 0.0
  %645 = vmatmul.mubr.f32.gmra.mrb[0].mxu0 %v507
  %v646 = vpop.f32.mrb[0].mxu0
  %v647 = vadd.f32 0.0, %v646
  %v648 = vpop.f32.mrb[0].mxu0
  %v649 = vadd.f32 0.0, %v648
  %650 = vdwg.mxu0
  %651 = vmatprep.subr.mxu0 0.0
  %652 = vmatpush1.msra.mxu0 %v495
  %653 = vmatprep.subr.mxu0 0.0
  %654 = vmatpush1.msra.mxu0 0.0
  %655 = vmatprep.subr.mxu0 0.0
  %656 = vmatpush1.msra.mxu0 0.0
  %657 = vmatprep.subr.mxu0 0.0
  %658 = vmatpush1.msra.mxu0 0.0
  %659 = vmatprep.subr.mxu0 0.0
  %660 = vmatpush1.msra.mxu0 0.0
  %661 = vmatprep.subr.mxu0 0.0
  %662 = vmatpush1.msra.mxu0 0.0
  %663 = vmatprep.subr.mxu0 0.0
  %664 = vmatpush1.msra.mxu0 0.0
  %665 = vmatprep.subr.mxu0 0.0
  %666 = vmatpush1.msra.mxu0 0.0
  %667 = vmatprep.subr.mxu0 0.0
  %668 = vmatpush1.msra.mxu0 0.0
  %669 = vmatprep.subr.mxu0 0.0
  %670 = vmatpush1.msra.mxu0 0.0
  %671 = vmatprep.subr.mxu0 0.0
  %672 = vmatpush1.msra.mxu0 0.0
  %673 = vmatprep.subr.mxu0 0.0
  %674 = vmatpush1.msra.mxu0 0.0
  %675 = vmatprep.subr.mxu0 0.0
  %676 = vmatpush1.msra.mxu0 0.0
  %677 = vmatprep.subr.mxu0 0.0
  %678 = vmatpush1.msra.mxu0 0.0
  %679 = vmatprep.subr.mxu0 0.0
  %680 = vmatpush1.msra.mxu0 0.0
  %681 = vmatprep.subr.mxu0 0.0
  %682 = vmatpush1.msra.mxu0 0.0
  %683 = vmatprep.subr.mxu0 0.0
  %684 = vmatpush1.msra.mxu0 0.0
  %685 = vmatprep.subr.mxu0 0.0
  %686 = vmatpush1.msra.mxu0 0.0
  %687 = vmatprep.subr.mxu0 0.0
  %688 = vmatpush1.msra.mxu0 0.0
  %689 = vmatprep.subr.mxu0 0.0
  %690 = vmatpush1.msra.mxu0 0.0
  %691 = vmatprep.subr.mxu0 0.0
  %692 = vmatpush1.msra.mxu0 0.0
  %693 = vmatprep.subr.mxu0 0.0
  %694 = vmatpush1.msra.mxu0 0.0
  %695 = vmatprep.subr.mxu0 0.0
  %696 = vmatpush1.msra.mxu0 0.0
  %697 = vmatprep.subr.mxu0 0.0
  %698 = vmatpush1.msra.mxu0 0.0
  %699 = vmatprep.subr.mxu0 0.0
  %700 = vmatpush1.msra.mxu0 0.0
  %701 = vmatprep.subr.mxu0 0.0
  %702 = vmatpush1.msra.mxu0 0.0
  %703 = vmatprep.subr.mxu0 0.0
  %704 = vmatpush1.msra.mxu0 0.0
  %705 = vmatprep.subr.mxu0 0.0
  %706 = vmatpush1.msra.mxu0 0.0
  %707 = vmatprep.subr.mxu0 0.0
  %708 = vmatpush1.msra.mxu0 0.0
  %709 = vmatprep.subr.mxu0 0.0
  %710 = vmatpush1.msra.mxu0 0.0
  %711 = vmatprep.subr.mxu0 0.0
  %712 = vmatpush1.msra.mxu0 0.0
  %713 = vmatprep.subr.mxu0 0.0
  %714 = vmatpush1.msra.mxu0 0.0
  %715 = vmatprep.mubr.f32.mxu0 0.0
  %716 = vmatmul.mubr.f32.gmra.mrb[0].mxu0 %v507
  %v717 = vpop.f32.mrb[0].mxu0
  %v718 = vadd.f32 0.0, %v717
  %v719 = vpop.f32.mrb[0].mxu0
  %720 = vdwg.mxu0
  %v721 = vadd.f32 %v339, %v576
  %v722 = vadd.f32 %v341, %v578
  %v723 = vadd.f32 %v410, %v647
  %v724 = vadd.f32 %v412, %v649
  %v725 = vadd.f32 %v481, %v718
  %s726 = scalar_lea.vmem %s1, 24
  %v727 = vld [vmem:[%s726] sm:$0xff]
  %728 = vrot.lane.b32.xlu0 %v20, 110
  %v729 = vpop.permute.xlu0 %728
  %730 = vrot.lane.b32.xlu0 %v21, 110
  %v731 = vpop.permute.xlu0 %730
  %732 = vrot.lane.b32.xlu0 %v22, 110
  %v733 = vpop.permute.xlu0 %732
  %734 = vrot.lane.b32.xlu0 %v23, 110
  %v735 = vpop.permute.xlu0 %734
  %736 = vrot.lane.b32.xlu0 %v24, 110
  %v737 = vpop.permute.xlu0 %736
  %vm738 = vcmask 900096
  %v739 = vsel %vm738, %v729, %v731
  %v740 = vsel %vm738, %v731, %v733
  %v741 = vsel %vm738, %v733, %v735
  %v742 = vsel %vm738, %v735, %v737
  %v749 = vsel %vm53, %v727, 0
  %751 = vmatprep.subr.mxu0 %v740
  %752 = vmatpush1.msra.mxu0 %v739
  %753 = vmatprep.subr.mxu0 0.0
  %754 = vmatpush1.msra.mxu0 0.0
  %755 = vmatprep.subr.mxu0 0.0
  %756 = vmatpush1.msra.mxu0 0.0
  %757 = vmatprep.subr.mxu0 0.0
  %758 = vmatpush1.msra.mxu0 0.0
  %759 = vmatprep.subr.mxu0 0.0
  %760 = vmatpush1.msra.mxu0 0.0
  %761 = vmatprep.subr.mxu0 0.0
  %762 = vmatpush1.msra.mxu0 0.0
  %763 = vmatprep.subr.mxu0 0.0
  %764 = vmatpush1.msra.mxu0 0.0
  %765 = vmatprep.subr.mxu0 0.0
  %766 = vmatpush1.msra.mxu0 0.0
  %767 = vmatprep.subr.mxu0 0.0
  %768 = vmatpush1.msra.mxu0 0.0
  %769 = vmatprep.subr.mxu0 0.0
  %770 = vmatpush1.msra.mxu0 0.0
  %771 = vmatprep.subr.mxu0 0.0
  %772 = vmatpush1.msra.mxu0 0.0
  %773 = vmatprep.subr.mxu0 0.0
  %774 = vmatpush1.msra.mxu0 0.0
  %775 = vmatprep.subr.mxu0 0.0
  %776 = vmatpush1.msra.mxu0 0.0
  %777 = vmatprep.subr.mxu0 0.0
  %778 = vmatpush1.msra.mxu0 0.0
  %779 = vmatprep.subr.mxu0 0.0
  %780 = vmatpush1.msra.mxu0 0.0
  %781 = vmatprep.subr.mxu0 0.0
  %782 = vmatpush1.msra.mxu0 0.0
  %783 = vmatprep.subr.mxu0 0.0
  %784 = vmatpush1.msra.mxu0 0.0
  %785 = vmatprep.subr.mxu0 0.0
  %786 = vmatpush1.msra.mxu0 0.0
  %787 = vmatprep.subr.mxu0 0.0
  %788 = vmatpush1.msra.mxu0 0.0
  %789 = vmatprep.subr.mxu0 0.0
  %790 = vmatpush1.msra.mxu0 0.0
  %791 = vmatprep.subr.mxu0 0.0
  %792 = vmatpush1.msra.mxu0 0.0
  %793 = vmatprep.subr.mxu0 0.0
  %794 = vmatpush1.msra.mxu0 0.0
  %795 = vmatprep.subr.mxu0 0.0
  %796 = vmatpush1.msra.mxu0 0.0
  %797 = vmatprep.subr.mxu0 0.0
  %798 = vmatpush1.msra.mxu0 0.0
  %799 = vmatprep.subr.mxu0 0.0
  %800 = vmatpush1.msra.mxu0 0.0
  %801 = vmatprep.subr.mxu0 0.0
  %802 = vmatpush1.msra.mxu0 0.0
  %803 = vmatprep.subr.mxu0 0.0
  %804 = vmatpush1.msra.mxu0 0.0
  %805 = vmatprep.subr.mxu0 0.0
  %806 = vmatpush1.msra.mxu0 0.0
  %807 = vmatprep.subr.mxu0 0.0
  %808 = vmatpush1.msra.mxu0 0.0
  %809 = vmatprep.subr.mxu0 0.0
  %810 = vmatpush1.msra.mxu0 0.0
  %811 = vmatprep.subr.mxu0 0.0
  %812 = vmatpush1.msra.mxu0 0.0
  %813 = vmatprep.subr.mxu0 0.0
  %814 = vmatpush1.msra.mxu0 0.0
  %815 = vmatprep.mubr.f32.mxu0 0.0
  %816 = vmatmul.mubr.f32.gmra.mrb[0].mxu0 %v749
  %v817 = vpop.f32.mrb[0].mxu0
  %v818 = vadd.f32 0.0, %v817
  %v819 = vpop.f32.mrb[0].mxu0
  %v820 = vadd.f32 0.0, %v819
  %821 = vdwg.mxu0
  %822 = vmatprep.subr.mxu0 %v742
  %823 = vmatpush1.msra.mxu0 %v741
  %824 = vmatprep.subr.mxu0 0.0
  %825 = vmatpush1.msra.mxu0 0.0
  %826 = vmatprep.subr.mxu0 0.0
  %827 = vmatpush1.msra.mxu0 0.0
  %828 = vmatprep.subr.mxu0 0.0
  %829 = vmatpush1.msra.mxu0 0.0
  %830 = vmatprep.subr.mxu0 0.0
  %831 = vmatpush1.msra.mxu0 0.0
  %832 = vmatprep.subr.mxu0 0.0
  %833 = vmatpush1.msra.mxu0 0.0
  %834 = vmatprep.subr.mxu0 0.0
  %835 = vmatpush1.msra.mxu0 0.0
  %836 = vmatprep.subr.mxu0 0.0
  %837 = vmatpush1.msra.mxu0 0.0
  %838 = vmatprep.subr.mxu0 0.0
  %839 = vmatpush1.msra.mxu0 0.0
  %840 = vmatprep.subr.mxu0 0.0
  %841 = vmatpush1.msra.mxu0 0.0
  %842 = vmatprep.subr.mxu0 0.0
  %843 = vmatpush1.msra.mxu0 0.0
  %844 = vmatprep.subr.mxu0 0.0
  %845 = vmatpush1.msra.mxu0 0.0
  %846 = vmatprep.subr.mxu0 0.0
  %847 = vmatpush1.msra.mxu0 0.0
  %848 = vmatprep.subr.mxu0 0.0
  %849 = vmatpush1.msra.mxu0 0.0
  %850 = vmatprep.subr.mxu0 0.0
  %851 = vmatpush1.msra.mxu0 0.0
  %852 = vmatprep.subr.mxu0 0.0
  %853 = vmatpush1.msra.mxu0 0.0
  %854 = vmatprep.subr.mxu0 0.0
  %855 = vmatpush1.msra.mxu0 0.0
  %856 = vmatprep.subr.mxu0 0.0
  %857 = vmatpush1.msra.mxu0 0.0
  %858 = vmatprep.subr.mxu0 0.0
  %859 = vmatpush1.msra.mxu0 0.0
  %860 = vmatprep.subr.mxu0 0.0
  %861 = vmatpush1.msra.mxu0 0.0
  %862 = vmatprep.subr.mxu0 0.0
  %863 = vmatpush1.msra.mxu0 0.0
  %864 = vmatprep.subr.mxu0 0.0
  %865 = vmatpush1.msra.mxu0 0.0
  %866 = vmatprep.subr.mxu0 0.0
  %867 = vmatpush1.msra.mxu0 0.0
  %868 = vmatprep.subr.mxu0 0.0
  %869 = vmatpush1.msra.mxu0 0.0
  %870 = vmatprep.subr.mxu0 0.0
  %871 = vmatpush1.msra.mxu0 0.0
  %872 = vmatprep.subr.mxu0 0.0
  %873 = vmatpush1.msra.mxu0 0.0
  %874 = vmatprep.subr.mxu0 0.0
  %875 = vmatpush1.msra.mxu0 0.0
  %876 = vmatprep.subr.mxu0 0.0
  %877 = vmatpush1.msra.mxu0 0.0
  %878 = vmatprep.subr.mxu0 0.0
  %879 = vmatpush1.msra.mxu0 0.0
  %880 = vmatprep.subr.mxu0 0.0
  %881 = vmatpush1.msra.mxu0 0.0
  %882 = vmatprep.subr.mxu0 0.0
  %883 = vmatpush1.msra.mxu0 0.0
  %884 = vmatprep.subr.mxu0 0.0
  %885 = vmatpush1.msra.mxu0 0.0
  %886 = vmatprep.mubr.f32.mxu0 0.0
  %887 = vmatmul.mubr.f32.gmra.mrb[0].mxu0 %v749
  %v888 = vpop.f32.mrb[0].mxu0
  %v889 = vadd.f32 0.0, %v888
  %v890 = vpop.f32.mrb[0].mxu0
  %v891 = vadd.f32 0.0, %v890
  %892 = vdwg.mxu0
  %893 = vmatprep.subr.mxu0 0.0
  %894 = vmatpush1.msra.mxu0 %v737
  %895 = vmatprep.subr.mxu0 0.0
  %896 = vmatpush1.msra.mxu0 0.0
  %897 = vmatprep.subr.mxu0 0.0
  %898 = vmatpush1.msra.mxu0 0.0
  %899 = vmatprep.subr.mxu0 0.0
  %900 = vmatpush1.msra.mxu0 0.0
  %901 = vmatprep.subr.mxu0 0.0
  %902 = vmatpush1.msra.mxu0 0.0
  %903 = vmatprep.subr.mxu0 0.0
  %904 = vmatpush1.msra.mxu0 0.0
  %905 = vmatprep.subr.mxu0 0.0
  %906 = vmatpush1.msra.mxu0 0.0
  %907 = vmatprep.subr.mxu0 0.0
  %908 = vmatpush1.msra.mxu0 0.0
  %909 = vmatprep.subr.mxu0 0.0
  %910 = vmatpush1.msra.mxu0 0.0
  %911 = vmatprep.subr.mxu0 0.0
  %912 = vmatpush1.msra.mxu0 0.0
  %913 = vmatprep.subr.mxu0 0.0
  %914 = vmatpush1.msra.mxu0 0.0
  %915 = vmatprep.subr.mxu0 0.0
  %916 = vmatpush1.msra.mxu0 0.0
  %917 = vmatprep.subr.mxu0 0.0
  %918 = vmatpush1.msra.mxu0 0.0
  %919 = vmatprep.subr.mxu0 0.0
  %920 = vmatpush1.msra.mxu0 0.0
  %921 = vmatprep.subr.mxu0 0.0
  %922 = vmatpush1.msra.mxu0 0.0
  %923 = vmatprep.subr.mxu0 0.0
  %924 = vmatpush1.msra.mxu0 0.0
  %925 = vmatprep.subr.mxu0 0.0
  %926 = vmatpush1.msra.mxu0 0.0
  %927 = vmatprep.subr.mxu0 0.0
  %928 = vmatpush1.msra.mxu0 0.0
  %929 = vmatprep.subr.mxu0 0.0
  %930 = vmatpush1.msra.mxu0 0.0
  %931 = vmatprep.subr.mxu0 0.0
  %932 = vmatpush1.msra.mxu0 0.0
  %933 = vmatprep.subr.mxu0 0.0
  %934 = vmatpush1.msra.mxu0 0.0
  %935 = vmatprep.subr.mxu0 0.0
  %936 = vmatpush1.msra.mxu0 0.0
  %937 = vmatprep.subr.mxu0 0.0
  %938 = vmatpush1.msra.mxu0 0.0
  %939 = vmatprep.subr.mxu0 0.0
  %940 = vmatpush1.msra.mxu0 0.0
  %941 = vmatprep.subr.mxu0 0.0
  %942 = vmatpush1.msra.mxu0 0.0
  %943 = vmatprep.subr.mxu0 0.0
  %944 = vmatpush1.msra.mxu0 0.0
  %945 = vmatprep.subr.mxu0 0.0
  %946 = vmatpush1.msra.mxu0 0.0
  %947 = vmatprep.subr.mxu0 0.0
  %948 = vmatpush1.msra.mxu0 0.0
  %949 = vmatprep.subr.mxu0 0.0
  %950 = vmatpush1.msra.mxu0 0.0
  %951 = vmatprep.subr.mxu0 0.0
  %952 = vmatpush1.msra.mxu0 0.0
  %953 = vmatprep.subr.mxu0 0.0
  %954 = vmatpush1.msra.mxu0 0.0
  %955 = vmatprep.subr.mxu0 0.0
  %956 = vmatpush1.msra.mxu0 0.0
  %957 = vmatprep.mubr.f32.mxu0 0.0
  %958 = vmatmul.mubr.f32.gmra.mrb[0].mxu0 %v749
  %v959 = vpop.f32.mrb[0].mxu0
  %v960 = vadd.f32 0.0, %v959
  %v961 = vpop.f32.mrb[0].mxu0
  %962 = vdwg.mxu0
  %v963 = vadd.f32 %v721, %v818
  %v964 = vadd.f32 %v722, %v820
  %v965 = vadd.f32 %v723, %v889
  %v966 = vadd.f32 %v724, %v891
  %v967 = vadd.f32 %v725, %v960
  %s968 = scalar_lea.vmem %s1, 32
  %v969 = vld [vmem:[%s968] sm:$0xff]
  %970 = vrot.lane.b32.xlu0 %v20, 109
  %v971 = vpop.permute.xlu0 %970
  %972 = vrot.lane.b32.xlu0 %v21, 109
  %v973 = vpop.permute.xlu0 %972
  %974 = vrot.lane.b32.xlu0 %v22, 109
  %v975 = vpop.permute.xlu0 %974
  %976 = vrot.lane.b32.xlu0 %v23, 109
  %v977 = vpop.permute.xlu0 %976
  %978 = vrot.lane.b32.xlu0 %v24, 109
  %v979 = vpop.permute.xlu0 %978
  %vm980 = vcmask 891904
  %v981 = vsel %vm980, %v971, %v973
  %v982 = vsel %vm980, %v973, %v975
  %v983 = vsel %vm980, %v975, %v977
  %v984 = vsel %vm980, %v977, %v979
  %v991 = vsel %vm53, %v969, 0
  %993 = vmatprep.subr.mxu0 %v982
  %994 = vmatpush1.msra.mxu0 %v981
  %995 = vmatprep.subr.mxu0 0.0
  %996 = vmatpush1.msra.mxu0 0.0
  %997 = vmatprep.subr.mxu0 0.0
  %998 = vmatpush1.msra.mxu0 0.0
  %999 = vmatprep.subr.mxu0 0.0
  %1000 = vmatpush1.msra.mxu0 0.0
  %1001 = vmatprep.subr.mxu0 0.0
  %1002 = vmatpush1.msra.mxu0 0.0
  %1003 = vmatprep.subr.mxu0 0.0
  %1004 = vmatpush1.msra.mxu0 0.0
  %1005 = vmatprep.subr.mxu0 0.0
  %1006 = vmatpush1.msra.mxu0 0.0
  %1007 = vmatprep.subr.mxu0 0.0
  %1008 = vmatpush1.msra.mxu0 0.0
  %1009 = vmatprep.subr.mxu0 0.0
  %1010 = vmatpush1.msra.mxu0 0.0
  %1011 = vmatprep.subr.mxu0 0.0
  %1012 = vmatpush1.msra.mxu0 0.0
  %1013 = vmatprep.subr.mxu0 0.0
  %1014 = vmatpush1.msra.mxu0 0.0
  %1015 = vmatprep.subr.mxu0 0.0
  %1016 = vmatpush1.msra.mxu0 0.0
  %1017 = vmatprep.subr.mxu0 0.0
  %1018 = vmatpush1.msra.mxu0 0.0
  %1019 = vmatprep.subr.mxu0 0.0
  %1020 = vmatpush1.msra.mxu0 0.0
  %1021 = vmatprep.subr.mxu0 0.0
  %1022 = vmatpush1.msra.mxu0 0.0
  %1023 = vmatprep.subr.mxu0 0.0
  %1024 = vmatpush1.msra.mxu0 0.0
  %1025 = vmatprep.subr.mxu0 0.0
  %1026 = vmatpush1.msra.mxu0 0.0
  %1027 = vmatprep.subr.mxu0 0.0
  %1028 = vmatpush1.msra.mxu0 0.0
  %1029 = vmatprep.subr.mxu0 0.0
  %1030 = vmatpush1.msra.mxu0 0.0
  %1031 = vmatprep.subr.mxu0 0.0
  %1032 = vmatpush1.msra.mxu0 0.0
  %1033 = vmatprep.subr.mxu0 0.0
  %1034 = vmatpush1.msra.mxu0 0.0
  %1035 = vmatprep.subr.mxu0 0.0
  %1036 = vmatpush1.msra.mxu0 0.0
  %1037 = vmatprep.subr.mxu0 0.0
  %1038 = vmatpush1.msra.mxu0 0.0
  %1039 = vmatprep.subr.mxu0 0.0
  %1040 = vmatpush1.msra.mxu0 0.0
  %1041 = vmatprep.subr.mxu0 0.0
  %1042 = vmatpush1.msra.mxu0 0.0
  %1043 = vmatprep.subr.mxu0 0.0
  %1044 = vmatpush1.msra.mxu0 0.0
  %1045 = vmatprep.subr.mxu0 0.0
  %1046 = vmatpush1.msra.mxu0 0.0
  %1047 = vmatprep.subr.mxu0 0.0
  %1048 = vmatpush1.msra.mxu0 0.0
  %1049 = vmatprep.subr.mxu0 0.0
  %1050 = vmatpush1.msra.mxu0 0.0
  %1051 = vmatprep.subr.mxu0 0.0
  %1052 = vmatpush1.msra.mxu0 0.0
  %1053 = vmatprep.subr.mxu0 0.0
  %1054 = vmatpush1.msra.mxu0 0.0
  %1055 = vmatprep.subr.mxu0 0.0
  %1056 = vmatpush1.msra.mxu0 0.0
  %1057 = vmatprep.mubr.f32.mxu0 0.0
  %1058 = vmatmul.mubr.f32.gmra.mrb[0].mxu0 %v991
  %v1059 = vpop.f32.mrb[0].mxu0
  %v1060 = vadd.f32 0.0, %v1059
  %v1061 = vpop.f32.mrb[0].mxu0
  %v1062 = vadd.f32 0.0, %v1061
  %1063 = vdwg.mxu0
  %1064 = vmatprep.subr.mxu0 %v984
  %1065 = vmatpush1.msra.mxu0 %v983
  %1066 = vmatprep.subr.mxu0 0.0
  %1067 = vmatpush1.msra.mxu0 0.0
  %1068 = vmatprep.subr.mxu0 0.0
  %1069 = vmatpush1.msra.mxu0 0.0
  %1070 = vmatprep.subr.mxu0 0.0
  %1071 = vmatpush1.msra.mxu0 0.0
  %1072 = vmatprep.subr.mxu0 0.0
  %1073 = vmatpush1.msra.mxu0 0.0
  %1074 = vmatprep.subr.mxu0 0.0
  %1075 = vmatpush1.msra.mxu0 0.0
  %1076 = vmatprep.subr.mxu0 0.0
  %1077 = vmatpush1.msra.mxu0 0.0
  %1078 = vmatprep.subr.mxu0 0.0
  %1079 = vmatpush1.msra.mxu0 0.0
  %1080 = vmatprep.subr.mxu0 0.0
  %1081 = vmatpush1.msra.mxu0 0.0
  %1082 = vmatprep.subr.mxu0 0.0
  %1083 = vmatpush1.msra.mxu0 0.0
  %1084 = vmatprep.subr.mxu0 0.0
  %1085 = vmatpush1.msra.mxu0 0.0
  %1086 = vmatprep.subr.mxu0 0.0
  %1087 = vmatpush1.msra.mxu0 0.0
  %1088 = vmatprep.subr.mxu0 0.0
  %1089 = vmatpush1.msra.mxu0 0.0
  %1090 = vmatprep.subr.mxu0 0.0
  %1091 = vmatpush1.msra.mxu0 0.0
  %1092 = vmatprep.subr.mxu0 0.0
  %1093 = vmatpush1.msra.mxu0 0.0
  %1094 = vmatprep.subr.mxu0 0.0
  %1095 = vmatpush1.msra.mxu0 0.0
  %1096 = vmatprep.subr.mxu0 0.0
  %1097 = vmatpush1.msra.mxu0 0.0
  %1098 = vmatprep.subr.mxu0 0.0
  %1099 = vmatpush1.msra.mxu0 0.0
  %1100 = vmatprep.subr.mxu0 0.0
  %1101 = vmatpush1.msra.mxu0 0.0
  %1102 = vmatprep.subr.mxu0 0.0
  %1103 = vmatpush1.msra.mxu0 0.0
  %1104 = vmatprep.subr.mxu0 0.0
  %1105 = vmatpush1.msra.mxu0 0.0
  %1106 = vmatprep.subr.mxu0 0.0
  %1107 = vmatpush1.msra.mxu0 0.0
  %1108 = vmatprep.subr.mxu0 0.0
  %1109 = vmatpush1.msra.mxu0 0.0
  %1110 = vmatprep.subr.mxu0 0.0
  %1111 = vmatpush1.msra.mxu0 0.0
  %1112 = vmatprep.subr.mxu0 0.0
  %1113 = vmatpush1.msra.mxu0 0.0
  %1114 = vmatprep.subr.mxu0 0.0
  %1115 = vmatpush1.msra.mxu0 0.0
  %1116 = vmatprep.subr.mxu0 0.0
  %1117 = vmatpush1.msra.mxu0 0.0
  %1118 = vmatprep.subr.mxu0 0.0
  %1119 = vmatpush1.msra.mxu0 0.0
  %1120 = vmatprep.subr.mxu0 0.0
  %1121 = vmatpush1.msra.mxu0 0.0
  %1122 = vmatprep.subr.mxu0 0.0
  %1123 = vmatpush1.msra.mxu0 0.0
  %1124 = vmatprep.subr.mxu0 0.0
  %1125 = vmatpush1.msra.mxu0 0.0
  %1126 = vmatprep.subr.mxu0 0.0
  %1127 = vmatpush1.msra.mxu0 0.0
  %1128 = vmatprep.mubr.f32.mxu0 0.0
  %1129 = vmatmul.mubr.f32.gmra.mrb[0].mxu0 %v991
  %v1130 = vpop.f32.mrb[0].mxu0
  %v1131 = vadd.f32 0.0, %v1130
  %v1132 = vpop.f32.mrb[0].mxu0
  %v1133 = vadd.f32 0.0, %v1132
  %1134 = vdwg.mxu0
  %1135 = vmatprep.subr.mxu0 0.0
  %1136 = vmatpush1.msra.mxu0 %v979
  %1137 = vmatprep.subr.mxu0 0.0
  %1138 = vmatpush1.msra.mxu0 0.0
  %1139 = vmatprep.subr.mxu0 0.0
  %1140 = vmatpush1.msra.mxu0 0.0
  %1141 = vmatprep.subr.mxu0 0.0
  %1142 = vmatpush1.msra.mxu0 0.0
  %1143 = vmatprep.subr.mxu0 0.0
  %1144 = vmatpush1.msra.mxu0 0.0
  %1145 = vmatprep.subr.mxu0 0.0
  %1146 = vmatpush1.msra.mxu0 0.0
  %1147 = vmatprep.subr.mxu0 0.0
  %1148 = vmatpush1.msra.mxu0 0.0
  %1149 = vmatprep.subr.mxu0 0.0
  %1150 = vmatpush1.msra.mxu0 0.0
  %1151 = vmatprep.subr.mxu0 0.0
  %1152 = vmatpush1.msra.mxu0 0.0
  %1153 = vmatprep.subr.mxu0 0.0
  %1154 = vmatpush1.msra.mxu0 0.0
  %1155 = vmatprep.subr.mxu0 0.0
  %1156 = vmatpush1.msra.mxu0 0.0
  %1157 = vmatprep.subr.mxu0 0.0
  %1158 = vmatpush1.msra.mxu0 0.0
  %1159 = vmatprep.subr.mxu0 0.0
  %1160 = vmatpush1.msra.mxu0 0.0
  %1161 = vmatprep.subr.mxu0 0.0
  %1162 = vmatpush1.msra.mxu0 0.0
  %1163 = vmatprep.subr.mxu0 0.0
  %1164 = vmatpush1.msra.mxu0 0.0
  %1165 = vmatprep.subr.mxu0 0.0
  %1166 = vmatpush1.msra.mxu0 0.0
  %1167 = vmatprep.subr.mxu0 0.0
  %1168 = vmatpush1.msra.mxu0 0.0
  %1169 = vmatprep.subr.mxu0 0.0
  %1170 = vmatpush1.msra.mxu0 0.0
  %1171 = vmatprep.subr.mxu0 0.0
  %1172 = vmatpush1.msra.mxu0 0.0
  %1173 = vmatprep.subr.mxu0 0.0
  %1174 = vmatpush1.msra.mxu0 0.0
  %1175 = vmatprep.subr.mxu0 0.0
  %1176 = vmatpush1.msra.mxu0 0.0
  %1177 = vmatprep.subr.mxu0 0.0
  %1178 = vmatpush1.msra.mxu0 0.0
  %1179 = vmatprep.subr.mxu0 0.0
  %1180 = vmatpush1.msra.mxu0 0.0
  %1181 = vmatprep.subr.mxu0 0.0
  %1182 = vmatpush1.msra.mxu0 0.0
  %1183 = vmatprep.subr.mxu0 0.0
  %1184 = vmatpush1.msra.mxu0 0.0
  %1185 = vmatprep.subr.mxu0 0.0
  %1186 = vmatpush1.msra.mxu0 0.0
  %1187 = vmatprep.subr.mxu0 0.0
  %1188 = vmatpush1.msra.mxu0 0.0
  %1189 = vmatprep.subr.mxu0 0.0
  %1190 = vmatpush1.msra.mxu0 0.0
  %1191 = vmatprep.subr.mxu0 0.0
  %1192 = vmatpush1.msra.mxu0 0.0
  %1193 = vmatprep.subr.mxu0 0.0
  %1194 = vmatpush1.msra.mxu0 0.0
  %1195 = vmatprep.subr.mxu0 0.0
  %1196 = vmatpush1.msra.mxu0 0.0
  %1197 = vmatprep.subr.mxu0 0.0
  %1198 = vmatpush1.msra.mxu0 0.0
  %1199 = vmatprep.mubr.f32.mxu0 0.0
  %1200 = vmatmul.mubr.f32.gmra.mrb[0].mxu0 %v991
  %v1201 = vpop.f32.mrb[0].mxu0
  %v1202 = vadd.f32 0.0, %v1201
  %v1203 = vpop.f32.mrb[0].mxu0
  %1204 = vdwg.mxu0
  %v1205 = vadd.f32 %v963, %v1060
  %v1206 = vadd.f32 %v964, %v1062
  %v1207 = vadd.f32 %v965, %v1131
  %v1208 = vadd.f32 %v966, %v1133
  %v1209 = vadd.f32 %v967, %v1202
  %s1210 = scalar_lea.vmem %s1, 40
  %v1211 = vld [vmem:[%s1210] sm:$0xff]
  %1212 = vrot.lane.b32.xlu0 %v20, 108
  %v1213 = vpop.permute.xlu0 %1212
  %1214 = vrot.lane.b32.xlu0 %v21, 108
  %v1215 = vpop.permute.xlu0 %1214
  %1216 = vrot.lane.b32.xlu0 %v22, 108
  %v1217 = vpop.permute.xlu0 %1216
  %1218 = vrot.lane.b32.xlu0 %v23, 108
  %v1219 = vpop.permute.xlu0 %1218
  %1220 = vrot.lane.b32.xlu0 %v24, 108
  %v1221 = vpop.permute.xlu0 %1220
  %vm1222 = vcmask 883712
  %v1223 = vsel %vm1222, %v1213, %v1215
  %v1224 = vsel %vm1222, %v1215, %v1217
  %v1225 = vsel %vm1222, %v1217, %v1219
  %v1226 = vsel %vm1222, %v1219, %v1221
  %v1233 = vsel %vm53, %v1211, 0
  %1235 = vmatprep.subr.mxu0 %v1224
  %1236 = vmatpush1.msra.mxu0 %v1223
  %1237 = vmatprep.subr.mxu0 0.0
  %1238 = vmatpush1.msra.mxu0 0.0
  %1239 = vmatprep.subr.mxu0 0.0
  %1240 = vmatpush1.msra.mxu0 0.0
  %1241 = vmatprep.subr.mxu0 0.0
  %1242 = vmatpush1.msra.mxu0 0.0
  %1243 = vmatprep.subr.mxu0 0.0
  %1244 = vmatpush1.msra.mxu0 0.0
  %1245 = vmatprep.subr.mxu0 0.0
  %1246 = vmatpush1.msra.mxu0 0.0
  %1247 = vmatprep.subr.mxu0 0.0
  %1248 = vmatpush1.msra.mxu0 0.0
  %1249 = vmatprep.subr.mxu0 0.0
  %1250 = vmatpush1.msra.mxu0 0.0
  %1251 = vmatprep.subr.mxu0 0.0
  %1252 = vmatpush1.msra.mxu0 0.0
  %1253 = vmatprep.subr.mxu0 0.0
  %1254 = vmatpush1.msra.mxu0 0.0
  %1255 = vmatprep.subr.mxu0 0.0
  %1256 = vmatpush1.msra.mxu0 0.0
  %1257 = vmatprep.subr.mxu0 0.0
  %1258 = vmatpush1.msra.mxu0 0.0
  %1259 = vmatprep.subr.mxu0 0.0
  %1260 = vmatpush1.msra.mxu0 0.0
  %1261 = vmatprep.subr.mxu0 0.0
  %1262 = vmatpush1.msra.mxu0 0.0
  %1263 = vmatprep.subr.mxu0 0.0
  %1264 = vmatpush1.msra.mxu0 0.0
  %1265 = vmatprep.subr.mxu0 0.0
  %1266 = vmatpush1.msra.mxu0 0.0
  %1267 = vmatprep.subr.mxu0 0.0
  %1268 = vmatpush1.msra.mxu0 0.0
  %1269 = vmatprep.subr.mxu0 0.0
  %1270 = vmatpush1.msra.mxu0 0.0
  %1271 = vmatprep.subr.mxu0 0.0
  %1272 = vmatpush1.msra.mxu0 0.0
  %1273 = vmatprep.subr.mxu0 0.0
  %1274 = vmatpush1.msra.mxu0 0.0
  %1275 = vmatprep.subr.mxu0 0.0
  %1276 = vmatpush1.msra.mxu0 0.0
  %1277 = vmatprep.subr.mxu0 0.0
  %1278 = vmatpush1.msra.mxu0 0.0
  %1279 = vmatprep.subr.mxu0 0.0
  %1280 = vmatpush1.msra.mxu0 0.0
  %1281 = vmatprep.subr.mxu0 0.0
  %1282 = vmatpush1.msra.mxu0 0.0
  %1283 = vmatprep.subr.mxu0 0.0
  %1284 = vmatpush1.msra.mxu0 0.0
  %1285 = vmatprep.subr.mxu0 0.0
  %1286 = vmatpush1.msra.mxu0 0.0
  %1287 = vmatprep.subr.mxu0 0.0
  %1288 = vmatpush1.msra.mxu0 0.0
  %1289 = vmatprep.subr.mxu0 0.0
  %1290 = vmatpush1.msra.mxu0 0.0
  %1291 = vmatprep.subr.mxu0 0.0
  %1292 = vmatpush1.msra.mxu0 0.0
  %1293 = vmatprep.subr.mxu0 0.0
  %1294 = vmatpush1.msra.mxu0 0.0
  %1295 = vmatprep.subr.mxu0 0.0
  %1296 = vmatpush1.msra.mxu0 0.0
  %1297 = vmatprep.subr.mxu0 0.0
  %1298 = vmatpush1.msra.mxu0 0.0
  %1299 = vmatprep.mubr.f32.mxu0 0.0
  %1300 = vmatmul.mubr.f32.gmra.mrb[0].mxu0 %v1233
  %v1301 = vpop.f32.mrb[0].mxu0
  %v1302 = vadd.f32 0.0, %v1301
  %v1303 = vpop.f32.mrb[0].mxu0
  %v1304 = vadd.f32 0.0, %v1303
  %1305 = vdwg.mxu0
  %1306 = vmatprep.subr.mxu0 %v1226
  %1307 = vmatpush1.msra.mxu0 %v1225
  %1308 = vmatprep.subr.mxu0 0.0
  %1309 = vmatpush1.msra.mxu0 0.0
  %1310 = vmatprep.subr.mxu0 0.0
  %1311 = vmatpush1.msra.mxu0 0.0
  %1312 = vmatprep.subr.mxu0 0.0
  %1313 = vmatpush1.msra.mxu0 0.0
  %1314 = vmatprep.subr.mxu0 0.0
  %1315 = vmatpush1.msra.mxu0 0.0
  %1316 = vmatprep.subr.mxu0 0.0
  %1317 = vmatpush1.msra.mxu0 0.0
  %1318 = vmatprep.subr.mxu0 0.0
  %1319 = vmatpush1.msra.mxu0 0.0
  %1320 = vmatprep.subr.mxu0 0.0
  %1321 = vmatpush1.msra.mxu0 0.0
  %1322 = vmatprep.subr.mxu0 0.0
  %1323 = vmatpush1.msra.mxu0 0.0
  %1324 = vmatprep.subr.mxu0 0.0
  %1325 = vmatpush1.msra.mxu0 0.0
  %1326 = vmatprep.subr.mxu0 0.0
  %1327 = vmatpush1.msra.mxu0 0.0
  %1328 = vmatprep.subr.mxu0 0.0
  %1329 = vmatpush1.msra.mxu0 0.0
  %1330 = vmatprep.subr.mxu0 0.0
  %1331 = vmatpush1.msra.mxu0 0.0
  %1332 = vmatprep.subr.mxu0 0.0
  %1333 = vmatpush1.msra.mxu0 0.0
  %1334 = vmatprep.subr.mxu0 0.0
  %1335 = vmatpush1.msra.mxu0 0.0
  %1336 = vmatprep.subr.mxu0 0.0
  %1337 = vmatpush1.msra.mxu0 0.0
  %1338 = vmatprep.subr.mxu0 0.0
  %1339 = vmatpush1.msra.mxu0 0.0
  %1340 = vmatprep.subr.mxu0 0.0
  %1341 = vmatpush1.msra.mxu0 0.0
  %1342 = vmatprep.subr.mxu0 0.0
  %1343 = vmatpush1.msra.mxu0 0.0
  %1344 = vmatprep.subr.mxu0 0.0
  %1345 = vmatpush1.msra.mxu0 0.0
  %1346 = vmatprep.subr.mxu0 0.0
  %1347 = vmatpush1.msra.mxu0 0.0
  %1348 = vmatprep.subr.mxu0 0.0
  %1349 = vmatpush1.msra.mxu0 0.0
  %1350 = vmatprep.subr.mxu0 0.0
  %1351 = vmatpush1.msra.mxu0 0.0
  %1352 = vmatprep.subr.mxu0 0.0
  %1353 = vmatpush1.msra.mxu0 0.0
  %1354 = vmatprep.subr.mxu0 0.0
  %1355 = vmatpush1.msra.mxu0 0.0
  %1356 = vmatprep.subr.mxu0 0.0
  %1357 = vmatpush1.msra.mxu0 0.0
  %1358 = vmatprep.subr.mxu0 0.0
  %1359 = vmatpush1.msra.mxu0 0.0
  %1360 = vmatprep.subr.mxu0 0.0
  %1361 = vmatpush1.msra.mxu0 0.0
  %1362 = vmatprep.subr.mxu0 0.0
  %1363 = vmatpush1.msra.mxu0 0.0
  %1364 = vmatprep.subr.mxu0 0.0
  %1365 = vmatpush1.msra.mxu0 0.0
  %1366 = vmatprep.subr.mxu0 0.0
  %1367 = vmatpush1.msra.mxu0 0.0
  %1368 = vmatprep.subr.mxu0 0.0
  %1369 = vmatpush1.msra.mxu0 0.0
  %1370 = vmatprep.mubr.f32.mxu0 0.0
  %1371 = vmatmul.mubr.f32.gmra.mrb[0].mxu0 %v1233
  %v1372 = vpop.f32.mrb[0].mxu0
  %v1373 = vadd.f32 0.0, %v1372
  %v1374 = vpop.f32.mrb[0].mxu0
  %v1375 = vadd.f32 0.0, %v1374
  %1376 = vdwg.mxu0
  %1377 = vmatprep.subr.mxu0 0.0
  %1378 = vmatpush1.msra.mxu0 %v1221
  %1379 = vmatprep.subr.mxu0 0.0
  %1380 = vmatpush1.msra.mxu0 0.0
  %1381 = vmatprep.subr.mxu0 0.0
  %1382 = vmatpush1.msra.mxu0 0.0
  %1383 = vmatprep.subr.mxu0 0.0
  %1384 = vmatpush1.msra.mxu0 0.0
  %1385 = vmatprep.subr.mxu0 0.0
  %1386 = vmatpush1.msra.mxu0 0.0
  %1387 = vmatprep.subr.mxu0 0.0
  %1388 = vmatpush1.msra.mxu0 0.0
  %1389 = vmatprep.subr.mxu0 0.0
  %1390 = vmatpush1.msra.mxu0 0.0
  %1391 = vmatprep.subr.mxu0 0.0
  %1392 = vmatpush1.msra.mxu0 0.0
  %1393 = vmatprep.subr.mxu0 0.0
  %1394 = vmatpush1.msra.mxu0 0.0
  %1395 = vmatprep.subr.mxu0 0.0
  %1396 = vmatpush1.msra.mxu0 0.0
  %1397 = vmatprep.subr.mxu0 0.0
  %1398 = vmatpush1.msra.mxu0 0.0
  %1399 = vmatprep.subr.mxu0 0.0
  %1400 = vmatpush1.msra.mxu0 0.0
  %1401 = vmatprep.subr.mxu0 0.0
  %1402 = vmatpush1.msra.mxu0 0.0
  %1403 = vmatprep.subr.mxu0 0.0
  %1404 = vmatpush1.msra.mxu0 0.0
  %1405 = vmatprep.subr.mxu0 0.0
  %1406 = vmatpush1.msra.mxu0 0.0
  %1407 = vmatprep.subr.mxu0 0.0
  %1408 = vmatpush1.msra.mxu0 0.0
  %1409 = vmatprep.subr.mxu0 0.0
  %1410 = vmatpush1.msra.mxu0 0.0
  %1411 = vmatprep.subr.mxu0 0.0
  %1412 = vmatpush1.msra.mxu0 0.0
  %1413 = vmatprep.subr.mxu0 0.0
  %1414 = vmatpush1.msra.mxu0 0.0
  %1415 = vmatprep.subr.mxu0 0.0
  %1416 = vmatpush1.msra.mxu0 0.0
  %1417 = vmatprep.subr.mxu0 0.0
  %1418 = vmatpush1.msra.mxu0 0.0
  %1419 = vmatprep.subr.mxu0 0.0
  %1420 = vmatpush1.msra.mxu0 0.0
  %1421 = vmatprep.subr.mxu0 0.0
  %1422 = vmatpush1.msra.mxu0 0.0
  %1423 = vmatprep.subr.mxu0 0.0
  %1424 = vmatpush1.msra.mxu0 0.0
  %1425 = vmatprep.subr.mxu0 0.0
  %1426 = vmatpush1.msra.mxu0 0.0
  %1427 = vmatprep.subr.mxu0 0.0
  %1428 = vmatpush1.msra.mxu0 0.0
  %1429 = vmatprep.subr.mxu0 0.0
  %1430 = vmatpush1.msra.mxu0 0.0
  %1431 = vmatprep.subr.mxu0 0.0
  %1432 = vmatpush1.msra.mxu0 0.0
  %1433 = vmatprep.subr.mxu0 0.0
  %1434 = vmatpush1.msra.mxu0 0.0
  %1435 = vmatprep.subr.mxu0 0.0
  %1436 = vmatpush1.msra.mxu0 0.0
  %1437 = vmatprep.subr.mxu0 0.0
  %1438 = vmatpush1.msra.mxu0 0.0
  %1439 = vmatprep.subr.mxu0 0.0
  %1440 = vmatpush1.msra.mxu0 0.0
  %1441 = vmatprep.mubr.f32.mxu0 0.0
  %1442 = vmatmul.mubr.f32.gmra.mrb[0].mxu0 %v1233
  %v1443 = vpop.f32.mrb[0].mxu0
  %v1444 = vadd.f32 0.0, %v1443
  %v1445 = vpop.f32.mrb[0].mxu0
  %1446 = vdwg.mxu0
  %v1447 = vadd.f32 %v1205, %v1302
  %v1448 = vadd.f32 %v1206, %v1304
  %v1449 = vadd.f32 %v1207, %v1373
  %v1450 = vadd.f32 %v1208, %v1375
  %v1451 = vadd.f32 %v1209, %v1444
  %v1452 = vld [vmem:[%s0] sm:$0xff]
  %v1453 = vld [vmem:[%s0 + $0x8] sm:$0xff]
  %v1454 = vld [vmem:[%s0 + $0x10] sm:$0xff]
  %v1455 = vld [vmem:[%s0 + $0x18] sm:$0xff]
  %v1456 = vld [vmem:[%s0 + $0x20] sm:$0xff]
  %v1457 = vld [vmem:[%s0 + $0x28] sm:$0xff]
  %s1458 = scalar_lea.vmem %s1, 48
  %v1459 = vld [vmem:[%s1458] sm:$0xff]
  %1466 = vrot.lane.b32.xlu0 %v1452, 92
  %v1467 = vpop.permute.xlu0 %1466
  %1468 = vrot.lane.b32.xlu0 %v1453, 92
  %v1469 = vpop.permute.xlu0 %1468
  %1470 = vrot.lane.b32.xlu0 %v1454, 92
  %v1471 = vpop.permute.xlu0 %1470
  %1472 = vrot.lane.b32.xlu0 %v1455, 92
  %v1473 = vpop.permute.xlu0 %1472
  %1474 = vrot.lane.b32.xlu0 %v1456, 92
  %v1475 = vpop.permute.xlu0 %1474
  %1476 = vrot.lane.b32.xlu0 %v1457, 92
  %v1477 = vpop.permute.xlu0 %1476
  %vm1478 = vcmask 752640
  %v1479 = vsel %vm1478, %v1467, %v1469
  %v1480 = vsel %vm1478, %v1469, %v1471
  %v1481 = vsel %vm1478, %v1471, %v1473
  %v1482 = vsel %vm1478, %v1473, %v1475
  %v1483 = vsel %vm1478, %v1475, %v1477
  %v1490 = vsel %vm53, %v1459, 0
  %1492 = vmatprep.subr.mxu0 %v1480
  %1493 = vmatpush1.msra.mxu0 %v1479
  %1494 = vmatprep.subr.mxu0 0.0
  %1495 = vmatpush1.msra.mxu0 0.0
  %1496 = vmatprep.subr.mxu0 0.0
  %1497 = vmatpush1.msra.mxu0 0.0
  %1498 = vmatprep.subr.mxu0 0.0
  %1499 = vmatpush1.msra.mxu0 0.0
  %1500 = vmatprep.subr.mxu0 0.0
  %1501 = vmatpush1.msra.mxu0 0.0
  %1502 = vmatprep.subr.mxu0 0.0
  %1503 = vmatpush1.msra.mxu0 0.0
  %1504 = vmatprep.subr.mxu0 0.0
  %1505 = vmatpush1.msra.mxu0 0.0
  %1506 = vmatprep.subr.mxu0 0.0
  %1507 = vmatpush1.msra.mxu0 0.0
  %1508 = vmatprep.subr.mxu0 0.0
  %1509 = vmatpush1.msra.mxu0 0.0
  %1510 = vmatprep.subr.mxu0 0.0
  %1511 = vmatpush1.msra.mxu0 0.0
  %1512 = vmatprep.subr.mxu0 0.0
  %1513 = vmatpush1.msra.mxu0 0.0
  %1514 = vmatprep.subr.mxu0 0.0
  %1515 = vmatpush1.msra.mxu0 0.0
  %1516 = vmatprep.subr.mxu0 0.0
  %1517 = vmatpush1.msra.mxu0 0.0
  %1518 = vmatprep.subr.mxu0 0.0
  %1519 = vmatpush1.msra.mxu0 0.0
  %1520 = vmatprep.subr.mxu0 0.0
  %1521 = vmatpush1.msra.mxu0 0.0
  %1522 = vmatprep.subr.mxu0 0.0
  %1523 = vmatpush1.msra.mxu0 0.0
  %1524 = vmatprep.subr.mxu0 0.0
  %1525 = vmatpush1.msra.mxu0 0.0
  %1526 = vmatprep.subr.mxu0 0.0
  %1527 = vmatpush1.msra.mxu0 0.0
  %1528 = vmatprep.subr.mxu0 0.0
  %1529 = vmatpush1.msra.mxu0 0.0
  %1530 = vmatprep.subr.mxu0 0.0
  %1531 = vmatpush1.msra.mxu0 0.0
  %1532 = vmatprep.subr.mxu0 0.0
  %1533 = vmatpush1.msra.mxu0 0.0
  %1534 = vmatprep.subr.mxu0 0.0
  %1535 = vmatpush1.msra.mxu0 0.0
  %1536 = vmatprep.subr.mxu0 0.0
  %1537 = vmatpush1.msra.mxu0 0.0
  %1538 = vmatprep.subr.mxu0 0.0
  %1539 = vmatpush1.msra.mxu0 0.0
  %1540 = vmatprep.subr.mxu0 0.0
  %1541 = vmatpush1.msra.mxu0 0.0
  %1542 = vmatprep.subr.mxu0 0.0
  %1543 = vmatpush1.msra.mxu0 0.0
  %1544 = vmatprep.subr.mxu0 0.0
  %1545 = vmatpush1.msra.mxu0 0.0
  %1546 = vmatprep.subr.mxu0 0.0
  %1547 = vmatpush1.msra.mxu0 0.0
  %1548 = vmatprep.subr.mxu0 0.0
  %1549 = vmatpush1.msra.mxu0 0.0
  %1550 = vmatprep.subr.mxu0 0.0
  %1551 = vmatpush1.msra.mxu0 0.0
  %1552 = vmatprep.subr.mxu0 0.0
  %1553 = vmatpush1.msra.mxu0 0.0
  %1554 = vmatprep.subr.mxu0 0.0
  %1555 = vmatpush1.msra.mxu0 0.0
  %1556 = vmatprep.mubr.f32.mxu0 0.0
  %1557 = vmatmul.mubr.f32.gmra.mrb[0].mxu0 %v1490
  %v1558 = vpop.f32.mrb[0].mxu0
  %v1559 = vadd.f32 0.0, %v1558
  %v1560 = vpop.f32.mrb[0].mxu0
  %v1561 = vadd.f32 0.0, %v1560
  %1562 = vdwg.mxu0
  %1563 = vmatprep.subr.mxu0 %v1482
  %1564 = vmatpush1.msra.mxu0 %v1481
  %1565 = vmatprep.subr.mxu0 0.0
  %1566 = vmatpush1.msra.mxu0 0.0
  %1567 = vmatprep.subr.mxu0 0.0
  %1568 = vmatpush1.msra.mxu0 0.0
  %1569 = vmatprep.subr.mxu0 0.0
  %1570 = vmatpush1.msra.mxu0 0.0
  %1571 = vmatprep.subr.mxu0 0.0
  %1572 = vmatpush1.msra.mxu0 0.0
  %1573 = vmatprep.subr.mxu0 0.0
  %1574 = vmatpush1.msra.mxu0 0.0
  %1575 = vmatprep.subr.mxu0 0.0
  %1576 = vmatpush1.msra.mxu0 0.0
  %1577 = vmatprep.subr.mxu0 0.0
  %1578 = vmatpush1.msra.mxu0 0.0
  %1579 = vmatprep.subr.mxu0 0.0
  %1580 = vmatpush1.msra.mxu0 0.0
  %1581 = vmatprep.subr.mxu0 0.0
  %1582 = vmatpush1.msra.mxu0 0.0
  %1583 = vmatprep.subr.mxu0 0.0
  %1584 = vmatpush1.msra.mxu0 0.0
  %1585 = vmatprep.subr.mxu0 0.0
  %1586 = vmatpush1.msra.mxu0 0.0
  %1587 = vmatprep.subr.mxu0 0.0
  %1588 = vmatpush1.msra.mxu0 0.0
  %1589 = vmatprep.subr.mxu0 0.0
  %1590 = vmatpush1.msra.mxu0 0.0
  %1591 = vmatprep.subr.mxu0 0.0
  %1592 = vmatpush1.msra.mxu0 0.0
  %1593 = vmatprep.subr.mxu0 0.0
  %1594 = vmatpush1.msra.mxu0 0.0
  %1595 = vmatprep.subr.mxu0 0.0
  %1596 = vmatpush1.msra.mxu0 0.0
  %1597 = vmatprep.subr.mxu0 0.0
  %1598 = vmatpush1.msra.mxu0 0.0
  %1599 = vmatprep.subr.mxu0 0.0
  %1600 = vmatpush1.msra.mxu0 0.0
  %1601 = vmatprep.subr.mxu0 0.0
  %1602 = vmatpush1.msra.mxu0 0.0
  %1603 = vmatprep.subr.mxu0 0.0
  %1604 = vmatpush1.msra.mxu0 0.0
  %1605 = vmatprep.subr.mxu0 0.0
  %1606 = vmatpush1.msra.mxu0 0.0
  %1607 = vmatprep.subr.mxu0 0.0
  %1608 = vmatpush1.msra.mxu0 0.0
  %1609 = vmatprep.subr.mxu0 0.0
  %1610 = vmatpush1.msra.mxu0 0.0
  %1611 = vmatprep.subr.mxu0 0.0
  %1612 = vmatpush1.msra.mxu0 0.0
  %1613 = vmatprep.subr.mxu0 0.0
  %1614 = vmatpush1.msra.mxu0 0.0
  %1615 = vmatprep.subr.mxu0 0.0
  %1616 = vmatpush1.msra.mxu0 0.0
  %1617 = vmatprep.subr.mxu0 0.0
  %1618 = vmatpush1.msra.mxu0 0.0
  %1619 = vmatprep.subr.mxu0 0.0
  %1620 = vmatpush1.msra.mxu0 0.0
  %1621 = vmatprep.subr.mxu0 0.0
  %1622 = vmatpush1.msra.mxu0 0.0
  %1623 = vmatprep.subr.mxu0 0.0
  %1624 = vmatpush1.msra.mxu0 0.0
  %1625 = vmatprep.subr.mxu0 0.0
  %1626 = vmatpush1.msra.mxu0 0.0
  %1627 = vmatprep.mubr.f32.mxu0 0.0
  %1628 = vmatmul.mubr.f32.gmra.mrb[0].mxu0 %v1490
  %v1629 = vpop.f32.mrb[0].mxu0
  %v1630 = vadd.f32 0.0, %v1629
  %v1631 = vpop.f32.mrb[0].mxu0
  %v1632 = vadd.f32 0.0, %v1631
  %1633 = vdwg.mxu0
  %1634 = vmatprep.subr.mxu0 0.0
  %1635 = vmatpush1.msra.mxu0 %v1483
  %1636 = vmatprep.subr.mxu0 0.0
  %1637 = vmatpush1.msra.mxu0 0.0
  %1638 = vmatprep.subr.mxu0 0.0
  %1639 = vmatpush1.msra.mxu0 0.0
  %1640 = vmatprep.subr.mxu0 0.0
  %1641 = vmatpush1.msra.mxu0 0.0
  %1642 = vmatprep.subr.mxu0 0.0
  %1643 = vmatpush1.msra.mxu0 0.0
  %1644 = vmatprep.subr.mxu0 0.0
  %1645 = vmatpush1.msra.mxu0 0.0
  %1646 = vmatprep.subr.mxu0 0.0
  %1647 = vmatpush1.msra.mxu0 0.0
  %1648 = vmatprep.subr.mxu0 0.0
  %1649 = vmatpush1.msra.mxu0 0.0
  %1650 = vmatprep.subr.mxu0 0.0
  %1651 = vmatpush1.msra.mxu0 0.0
  %1652 = vmatprep.subr.mxu0 0.0
  %1653 = vmatpush1.msra.mxu0 0.0
  %1654 = vmatprep.subr.mxu0 0.0
  %1655 = vmatpush1.msra.mxu0 0.0
  %1656 = vmatprep.subr.mxu0 0.0
  %1657 = vmatpush1.msra.mxu0 0.0
  %1658 = vmatprep.subr.mxu0 0.0
  %1659 = vmatpush1.msra.mxu0 0.0
  %1660 = vmatprep.subr.mxu0 0.0
  %1661 = vmatpush1.msra.mxu0 0.0
  %1662 = vmatprep.subr.mxu0 0.0
  %1663 = vmatpush1.msra.mxu0 0.0
  %1664 = vmatprep.subr.mxu0 0.0
  %1665 = vmatpush1.msra.mxu0 0.0
  %1666 = vmatprep.subr.mxu0 0.0
  %1667 = vmatpush1.msra.mxu0 0.0
  %1668 = vmatprep.subr.mxu0 0.0
  %1669 = vmatpush1.msra.mxu0 0.0
  %1670 = vmatprep.subr.mxu0 0.0
  %1671 = vmatpush1.msra.mxu0 0.0
  %1672 = vmatprep.subr.mxu0 0.0
  %1673 = vmatpush1.msra.mxu0 0.0
  %1674 = vmatprep.subr.mxu0 0.0
  %1675 = vmatpush1.msra.mxu0 0.0
  %1676 = vmatprep.subr.mxu0 0.0
  %1677 = vmatpush1.msra.mxu0 0.0
  %1678 = vmatprep.subr.mxu0 0.0
  %1679 = vmatpush1.msra.mxu0 0.0
  %1680 = vmatprep.subr.mxu0 0.0
  %1681 = vmatpush1.msra.mxu0 0.0
  %1682 = vmatprep.subr.mxu0 0.0
  %1683 = vmatpush1.msra.mxu0 0.0
  %1684 = vmatprep.subr.mxu0 0.0
  %1685 = vmatpush1.msra.mxu0 0.0
  %1686 = vmatprep.subr.mxu0 0.0
  %1687 = vmatpush1.msra.mxu0 0.0
  %1688 = vmatprep.subr.mxu0 0.0
  %1689 = vmatpush1.msra.mxu0 0.0
  %1690 = vmatprep.subr.mxu0 0.0
  %1691 = vmatpush1.msra.mxu0 0.0
  %1692 = vmatprep.subr.mxu0 0.0
  %1693 = vmatpush1.msra.mxu0 0.0
  %1694 = vmatprep.subr.mxu0 0.0
  %1695 = vmatpush1.msra.mxu0 0.0
  %1696 = vmatprep.subr.mxu0 0.0
  %1697 = vmatpush1.msra.mxu0 0.0
  %1698 = vmatprep.mubr.f32.mxu0 0.0
  %1699 = vmatmul.mubr.f32.gmra.mrb[0].mxu0 %v1490
  %v1700 = vpop.f32.mrb[0].mxu0
  %v1701 = vadd.f32 0.0, %v1700
  %v1702 = vpop.f32.mrb[0].mxu0
  %1703 = vdwg.mxu0
  %v1704 = vadd.f32 %v1447, %v1559
  %v1705 = vadd.f32 %v1448, %v1561
  %v1706 = vadd.f32 %v1449, %v1630
  %v1707 = vadd.f32 %v1450, %v1632
  %v1708 = vadd.f32 %v1451, %v1701
  %s1709 = scalar_lea.vmem %s1, 56
  %v1710 = vld [vmem:[%s1709] sm:$0xff]
  %1711 = vrot.lane.b32.xlu0 %v1452, 91
  %v1712 = vpop.permute.xlu0 %1711
  %1713 = vrot.lane.b32.xlu0 %v1453, 91
  %v1714 = vpop.permute.xlu0 %1713
  %1715 = vrot.lane.b32.xlu0 %v1454, 91
  %v1716 = vpop.permute.xlu0 %1715
  %1717 = vrot.lane.b32.xlu0 %v1455, 91
  %v1718 = vpop.permute.xlu0 %1717
  %1719 = vrot.lane.b32.xlu0 %v1456, 91
  %v1720 = vpop.permute.xlu0 %1719
  %1721 = vrot.lane.b32.xlu0 %v1457, 91
  %v1722 = vpop.permute.xlu0 %1721
  %vm1723 = vcmask 744448
  %v1724 = vsel %vm1723, %v1712, %v1714
  %v1725 = vsel %vm1723, %v1714, %v1716
  %v1726 = vsel %vm1723, %v1716, %v1718
  %v1727 = vsel %vm1723, %v1718, %v1720
  %v1728 = vsel %vm1723, %v1720, %v1722
  %v1735 = vsel %vm53, %v1710, 0
  %1737 = vmatprep.subr.mxu0 %v1725
  %1738 = vmatpush1.msra.mxu0 %v1724
  %1739 = vmatprep.subr.mxu0 0.0
  %1740 = vmatpush1.msra.mxu0 0.0
  %1741 = vmatprep.subr.mxu0 0.0
  %1742 = vmatpush1.msra.mxu0 0.0
  %1743 = vmatprep.subr.mxu0 0.0
  %1744 = vmatpush1.msra.mxu0 0.0
  %1745 = vmatprep.subr.mxu0 0.0
  %1746 = vmatpush1.msra.mxu0 0.0
  %1747 = vmatprep.subr.mxu0 0.0
  %1748 = vmatpush1.msra.mxu0 0.0
  %1749 = vmatprep.subr.mxu0 0.0
  %1750 = vmatpush1.msra.mxu0 0.0
  %1751 = vmatprep.subr.mxu0 0.0
  %1752 = vmatpush1.msra.mxu0 0.0
  %1753 = vmatprep.subr.mxu0 0.0
  %1754 = vmatpush1.msra.mxu0 0.0
  %1755 = vmatprep.subr.mxu0 0.0
  %1756 = vmatpush1.msra.mxu0 0.0
  %1757 = vmatprep.subr.mxu0 0.0
  %1758 = vmatpush1.msra.mxu0 0.0
  %1759 = vmatprep.subr.mxu0 0.0
  %1760 = vmatpush1.msra.mxu0 0.0
  %1761 = vmatprep.subr.mxu0 0.0
  %1762 = vmatpush1.msra.mxu0 0.0
  %1763 = vmatprep.subr.mxu0 0.0
  %1764 = vmatpush1.msra.mxu0 0.0
  %1765 = vmatprep.subr.mxu0 0.0
  %1766 = vmatpush1.msra.mxu0 0.0
  %1767 = vmatprep.subr.mxu0 0.0
  %1768 = vmatpush1.msra.mxu0 0.0
  %1769 = vmatprep.subr.mxu0 0.0
  %1770 = vmatpush1.msra.mxu0 0.0
  %1771 = vmatprep.subr.mxu0 0.0
  %1772 = vmatpush1.msra.mxu0 0.0
  %1773 = vmatprep.subr.mxu0 0.0
  %1774 = vmatpush1.msra.mxu0 0.0
  %1775 = vmatprep.subr.mxu0 0.0
  %1776 = vmatpush1.msra.mxu0 0.0
  %1777 = vmatprep.subr.mxu0 0.0
  %1778 = vmatpush1.msra.mxu0 0.0
  %1779 = vmatprep.subr.mxu0 0.0
  %1780 = vmatpush1.msra.mxu0 0.0
  %1781 = vmatprep.subr.mxu0 0.0
  %1782 = vmatpush1.msra.mxu0 0.0
  %1783 = vmatprep.subr.mxu0 0.0
  %1784 = vmatpush1.msra.mxu0 0.0
  %1785 = vmatprep.subr.mxu0 0.0
  %1786 = vmatpush1.msra.mxu0 0.0
  %1787 = vmatprep.subr.mxu0 0.0
  %1788 = vmatpush1.msra.mxu0 0.0
  %1789 = vmatprep.subr.mxu0 0.0
  %1790 = vmatpush1.msra.mxu0 0.0
  %1791 = vmatprep.subr.mxu0 0.0
  %1792 = vmatpush1.msra.mxu0 0.0
  %1793 = vmatprep.subr.mxu0 0.0
  %1794 = vmatpush1.msra.mxu0 0.0
  %1795 = vmatprep.subr.mxu0 0.0
  %1796 = vmatpush1.msra.mxu0 0.0
  %1797 = vmatprep.subr.mxu0 0.0
  %1798 = vmatpush1.msra.mxu0 0.0
  %1799 = vmatprep.subr.mxu0 0.0
  %1800 = vmatpush1.msra.mxu0 0.0
  %1801 = vmatprep.mubr.f32.mxu0 0.0
  %1802 = vmatmul.mubr.f32.gmra.mrb[0].mxu0 %v1735
  %v1803 = vpop.f32.mrb[0].mxu0
  %v1804 = vadd.f32 0.0, %v1803
  %v1805 = vpop.f32.mrb[0].mxu0
  %v1806 = vadd.f32 0.0, %v1805
  %1807 = vdwg.mxu0
  %1808 = vmatprep.subr.mxu0 %v1727
  %1809 = vmatpush1.msra.mxu0 %v1726
  %1810 = vmatprep.subr.mxu0 0.0
  %1811 = vmatpush1.msra.mxu0 0.0
  %1812 = vmatprep.subr.mxu0 0.0
  %1813 = vmatpush1.msra.mxu0 0.0
  %1814 = vmatprep.subr.mxu0 0.0
  %1815 = vmatpush1.msra.mxu0 0.0
  %1816 = vmatprep.subr.mxu0 0.0
  %1817 = vmatpush1.msra.mxu0 0.0
  %1818 = vmatprep.subr.mxu0 0.0
  %1819 = vmatpush1.msra.mxu0 0.0
  %1820 = vmatprep.subr.mxu0 0.0
  %1821 = vmatpush1.msra.mxu0 0.0
  %1822 = vmatprep.subr.mxu0 0.0
  %1823 = vmatpush1.msra.mxu0 0.0
  %1824 = vmatprep.subr.mxu0 0.0
  %1825 = vmatpush1.msra.mxu0 0.0
  %1826 = vmatprep.subr.mxu0 0.0
  %1827 = vmatpush1.msra.mxu0 0.0
  %1828 = vmatprep.subr.mxu0 0.0
  %1829 = vmatpush1.msra.mxu0 0.0
  %1830 = vmatprep.subr.mxu0 0.0
  %1831 = vmatpush1.msra.mxu0 0.0
  %1832 = vmatprep.subr.mxu0 0.0
  %1833 = vmatpush1.msra.mxu0 0.0
  %1834 = vmatprep.subr.mxu0 0.0
  %1835 = vmatpush1.msra.mxu0 0.0
  %1836 = vmatprep.subr.mxu0 0.0
  %1837 = vmatpush1.msra.mxu0 0.0
  %1838 = vmatprep.subr.mxu0 0.0
  %1839 = vmatpush1.msra.mxu0 0.0
  %1840 = vmatprep.subr.mxu0 0.0
  %1841 = vmatpush1.msra.mxu0 0.0
  %1842 = vmatprep.subr.mxu0 0.0
  %1843 = vmatpush1.msra.mxu0 0.0
  %1844 = vmatprep.subr.mxu0 0.0
  %1845 = vmatpush1.msra.mxu0 0.0
  %1846 = vmatprep.subr.mxu0 0.0
  %1847 = vmatpush1.msra.mxu0 0.0
  %1848 = vmatprep.subr.mxu0 0.0
  %1849 = vmatpush1.msra.mxu0 0.0
  %1850 = vmatprep.subr.mxu0 0.0
  %1851 = vmatpush1.msra.mxu0 0.0
  %1852 = vmatprep.subr.mxu0 0.0
  %1853 = vmatpush1.msra.mxu0 0.0
  %1854 = vmatprep.subr.mxu0 0.0
  %1855 = vmatpush1.msra.mxu0 0.0
  %1856 = vmatprep.subr.mxu0 0.0
  %1857 = vmatpush1.msra.mxu0 0.0
  %1858 = vmatprep.subr.mxu0 0.0
  %1859 = vmatpush1.msra.mxu0 0.0
  %1860 = vmatprep.subr.mxu0 0.0
  %1861 = vmatpush1.msra.mxu0 0.0
  %1862 = vmatprep.subr.mxu0 0.0
  %1863 = vmatpush1.msra.mxu0 0.0
  %1864 = vmatprep.subr.mxu0 0.0
  %1865 = vmatpush1.msra.mxu0 0.0
  %1866 = vmatprep.subr.mxu0 0.0
  %1867 = vmatpush1.msra.mxu0 0.0
  %1868 = vmatprep.subr.mxu0 0.0
  %1869 = vmatpush1.msra.mxu0 0.0
  %1870 = vmatprep.subr.mxu0 0.0
  %1871 = vmatpush1.msra.mxu0 0.0
  %1872 = vmatprep.mubr.f32.mxu0 0.0
  %1873 = vmatmul.mubr.f32.gmra.mrb[0].mxu0 %v1735
  %v1874 = vpop.f32.mrb[0].mxu0
  %v1875 = vadd.f32 0.0, %v1874
  %v1876 = vpop.f32.mrb[0].mxu0
  %v1877 = vadd.f32 0.0, %v1876
  %1878 = vdwg.mxu0
  %1879 = vmatprep.subr.mxu0 0.0
  %1880 = vmatpush1.msra.mxu0 %v1728
  %1881 = vmatprep.subr.mxu0 0.0
  %1882 = vmatpush1.msra.mxu0 0.0
  %1883 = vmatprep.subr.mxu0 0.0
  %1884 = vmatpush1.msra.mxu0 0.0
  %1885 = vmatprep.subr.mxu0 0.0
  %1886 = vmatpush1.msra.mxu0 0.0
  %1887 = vmatprep.subr.mxu0 0.0
  %1888 = vmatpush1.msra.mxu0 0.0
  %1889 = vmatprep.subr.mxu0 0.0
  %1890 = vmatpush1.msra.mxu0 0.0
  %1891 = vmatprep.subr.mxu0 0.0
  %1892 = vmatpush1.msra.mxu0 0.0
  %1893 = vmatprep.subr.mxu0 0.0
  %1894 = vmatpush1.msra.mxu0 0.0
  %1895 = vmatprep.subr.mxu0 0.0
  %1896 = vmatpush1.msra.mxu0 0.0
  %1897 = vmatprep.subr.mxu0 0.0
  %1898 = vmatpush1.msra.mxu0 0.0
  %1899 = vmatprep.subr.mxu0 0.0
  %1900 = vmatpush1.msra.mxu0 0.0
  %1901 = vmatprep.subr.mxu0 0.0
  %1902 = vmatpush1.msra.mxu0 0.0
  %1903 = vmatprep.subr.mxu0 0.0
  %1904 = vmatpush1.msra.mxu0 0.0
  %1905 = vmatprep.subr.mxu0 0.0
  %1906 = vmatpush1.msra.mxu0 0.0
  %1907 = vmatprep.subr.mxu0 0.0
  %1908 = vmatpush1.msra.mxu0 0.0
  %1909 = vmatprep.subr.mxu0 0.0
  %1910 = vmatpush1.msra.mxu0 0.0
  %1911 = vmatprep.subr.mxu0 0.0
  %1912 = vmatpush1.msra.mxu0 0.0
  %1913 = vmatprep.subr.mxu0 0.0
  %1914 = vmatpush1.msra.mxu0 0.0
  %1915 = vmatprep.subr.mxu0 0.0
  %1916 = vmatpush1.msra.mxu0 0.0
  %1917 = vmatprep.subr.mxu0 0.0
  %1918 = vmatpush1.msra.mxu0 0.0
  %1919 = vmatprep.subr.mxu0 0.0
  %1920 = vmatpush1.msra.mxu0 0.0
  %1921 = vmatprep.subr.mxu0 0.0
  %1922 = vmatpush1.msra.mxu0 0.0
  %1923 = vmatprep.subr.mxu0 0.0
  %1924 = vmatpush1.msra.mxu0 0.0
  %1925 = vmatprep.subr.mxu0 0.0
  %1926 = vmatpush1.msra.mxu0 0.0
  %1927 = vmatprep.subr.mxu0 0.0
  %1928 = vmatpush1.msra.mxu0 0.0
  %1929 = vmatprep.subr.mxu0 0.0
  %1930 = vmatpush1.msra.mxu0 0.0
  %1931 = vmatprep.subr.mxu0 0.0
  %1932 = vmatpush1.msra.mxu0 0.0
  %1933 = vmatprep.subr.mxu0 0.0
  %1934 = vmatpush1.msra.mxu0 0.0
  %1935 = vmatprep.subr.mxu0 0.0
  %1936 = vmatpush1.msra.mxu0 0.0
  %1937 = vmatprep.subr.mxu0 0.0
  %1938 = vmatpush1.msra.mxu0 0.0
  %1939 = vmatprep.subr.mxu0 0.0
  %1940 = vmatpush1.msra.mxu0 0.0
  %1941 = vmatprep.subr.mxu0 0.0
  %1942 = vmatpush1.msra.mxu0 0.0
  %1943 = vmatprep.mubr.f32.mxu0 0.0
  %1944 = vmatmul.mubr.f32.gmra.mrb[0].mxu0 %v1735
  %v1945 = vpop.f32.mrb[0].mxu0
  %v1946 = vadd.f32 0.0, %v1945
  %v1947 = vpop.f32.mrb[0].mxu0
  %1948 = vdwg.mxu0
  %v1949 = vadd.f32 %v1704, %v1804
  %v1950 = vadd.f32 %v1705, %v1806
  %v1951 = vadd.f32 %v1706, %v1875
  %v1952 = vadd.f32 %v1707, %v1877
  %v1953 = vadd.f32 %v1708, %v1946
  %s1954 = scalar_lea.vmem %s1, 64
  %v1955 = vld [vmem:[%s1954] sm:$0xff]
  %1956 = vrot.lane.b32.xlu0 %v1452, 90
  %v1957 = vpop.permute.xlu0 %1956
  %1958 = vrot.lane.b32.xlu0 %v1453, 90
  %v1959 = vpop.permute.xlu0 %1958
  %1960 = vrot.lane.b32.xlu0 %v1454, 90
  %v1961 = vpop.permute.xlu0 %1960
  %1962 = vrot.lane.b32.xlu0 %v1455, 90
  %v1963 = vpop.permute.xlu0 %1962
  %1964 = vrot.lane.b32.xlu0 %v1456, 90
  %v1965 = vpop.permute.xlu0 %1964
  %1966 = vrot.lane.b32.xlu0 %v1457, 90
  %v1967 = vpop.permute.xlu0 %1966
  %vm1968 = vcmask 736256
  %v1969 = vsel %vm1968, %v1957, %v1959
  %v1970 = vsel %vm1968, %v1959, %v1961
  %v1971 = vsel %vm1968, %v1961, %v1963
  %v1972 = vsel %vm1968, %v1963, %v1965
  %v1973 = vsel %vm1968, %v1965, %v1967
  %v1980 = vsel %vm53, %v1955, 0
  %1982 = vmatprep.subr.mxu0 %v1970
  %1983 = vmatpush1.msra.mxu0 %v1969
  %1984 = vmatprep.subr.mxu0 0.0
  %1985 = vmatpush1.msra.mxu0 0.0
  %1986 = vmatprep.subr.mxu0 0.0
  %1987 = vmatpush1.msra.mxu0 0.0
  %1988 = vmatprep.subr.mxu0 0.0
  %1989 = vmatpush1.msra.mxu0 0.0
  %1990 = vmatprep.subr.mxu0 0.0
  %1991 = vmatpush1.msra.mxu0 0.0
  %1992 = vmatprep.subr.mxu0 0.0
  %1993 = vmatpush1.msra.mxu0 0.0
  %1994 = vmatprep.subr.mxu0 0.0
  %1995 = vmatpush1.msra.mxu0 0.0
  %1996 = vmatprep.subr.mxu0 0.0
  %1997 = vmatpush1.msra.mxu0 0.0
  %1998 = vmatprep.subr.mxu0 0.0
  %1999 = vmatpush1.msra.mxu0 0.0
  %2000 = vmatprep.subr.mxu0 0.0
  %2001 = vmatpush1.msra.mxu0 0.0
  %2002 = vmatprep.subr.mxu0 0.0
  %2003 = vmatpush1.msra.mxu0 0.0
  %2004 = vmatprep.subr.mxu0 0.0
  %2005 = vmatpush1.msra.mxu0 0.0
  %2006 = vmatprep.subr.mxu0 0.0
  %2007 = vmatpush1.msra.mxu0 0.0
  %2008 = vmatprep.subr.mxu0 0.0
  %2009 = vmatpush1.msra.mxu0 0.0
  %2010 = vmatprep.subr.mxu0 0.0
  %2011 = vmatpush1.msra.mxu0 0.0
  %2012 = vmatprep.subr.mxu0 0.0
  %2013 = vmatpush1.msra.mxu0 0.0
  %2014 = vmatprep.subr.mxu0 0.0
  %2015 = vmatpush1.msra.mxu0 0.0
  %2016 = vmatprep.subr.mxu0 0.0
  %2017 = vmatpush1.msra.mxu0 0.0
  %2018 = vmatprep.subr.mxu0 0.0
  %2019 = vmatpush1.msra.mxu0 0.0
  %2020 = vmatprep.subr.mxu0 0.0
  %2021 = vmatpush1.msra.mxu0 0.0
  %2022 = vmatprep.subr.mxu0 0.0
  %2023 = vmatpush1.msra.mxu0 0.0
  %2024 = vmatprep.subr.mxu0 0.0
  %2025 = vmatpush1.msra.mxu0 0.0
  %2026 = vmatprep.subr.mxu0 0.0
  %2027 = vmatpush1.msra.mxu0 0.0
  %2028 = vmatprep.subr.mxu0 0.0
  %2029 = vmatpush1.msra.mxu0 0.0
  %2030 = vmatprep.subr.mxu0 0.0
  %2031 = vmatpush1.msra.mxu0 0.0
  %2032 = vmatprep.subr.mxu0 0.0
  %2033 = vmatpush1.msra.mxu0 0.0
  %2034 = vmatprep.subr.mxu0 0.0
  %2035 = vmatpush1.msra.mxu0 0.0
  %2036 = vmatprep.subr.mxu0 0.0
  %2037 = vmatpush1.msra.mxu0 0.0
  %2038 = vmatprep.subr.mxu0 0.0
  %2039 = vmatpush1.msra.mxu0 0.0
  %2040 = vmatprep.subr.mxu0 0.0
  %2041 = vmatpush1.msra.mxu0 0.0
  %2042 = vmatprep.subr.mxu0 0.0
  %2043 = vmatpush1.msra.mxu0 0.0
  %2044 = vmatprep.subr.mxu0 0.0
  %2045 = vmatpush1.msra.mxu0 0.0
  %2046 = vmatprep.mubr.f32.mxu0 0.0
  %2047 = vmatmul.mubr.f32.gmra.mrb[0].mxu0 %v1980
  %v2048 = vpop.f32.mrb[0].mxu0
  %v2049 = vadd.f32 0.0, %v2048
  %v2050 = vpop.f32.mrb[0].mxu0
  %v2051 = vadd.f32 0.0, %v2050
  %2052 = vdwg.mxu0
  %2053 = vmatprep.subr.mxu0 %v1972
  %2054 = vmatpush1.msra.mxu0 %v1971
  %2055 = vmatprep.subr.mxu0 0.0
  %2056 = vmatpush1.msra.mxu0 0.0
  %2057 = vmatprep.subr.mxu0 0.0
  %2058 = vmatpush1.msra.mxu0 0.0
  %2059 = vmatprep.subr.mxu0 0.0
  %2060 = vmatpush1.msra.mxu0 0.0
  %2061 = vmatprep.subr.mxu0 0.0
  %2062 = vmatpush1.msra.mxu0 0.0
  %2063 = vmatprep.subr.mxu0 0.0
  %2064 = vmatpush1.msra.mxu0 0.0
  %2065 = vmatprep.subr.mxu0 0.0
  %2066 = vmatpush1.msra.mxu0 0.0
  %2067 = vmatprep.subr.mxu0 0.0
  %2068 = vmatpush1.msra.mxu0 0.0
  %2069 = vmatprep.subr.mxu0 0.0
  %2070 = vmatpush1.msra.mxu0 0.0
  %2071 = vmatprep.subr.mxu0 0.0
  %2072 = vmatpush1.msra.mxu0 0.0
  %2073 = vmatprep.subr.mxu0 0.0
  %2074 = vmatpush1.msra.mxu0 0.0
  %2075 = vmatprep.subr.mxu0 0.0
  %2076 = vmatpush1.msra.mxu0 0.0
  %2077 = vmatprep.subr.mxu0 0.0
  %2078 = vmatpush1.msra.mxu0 0.0
  %2079 = vmatprep.subr.mxu0 0.0
  %2080 = vmatpush1.msra.mxu0 0.0
  %2081 = vmatprep.subr.mxu0 0.0
  %2082 = vmatpush1.msra.mxu0 0.0
  %2083 = vmatprep.subr.mxu0 0.0
  %2084 = vmatpush1.msra.mxu0 0.0
  %2085 = vmatprep.subr.mxu0 0.0
  %2086 = vmatpush1.msra.mxu0 0.0
  %2087 = vmatprep.subr.mxu0 0.0
  %2088 = vmatpush1.msra.mxu0 0.0
  %2089 = vmatprep.subr.mxu0 0.0
  %2090 = vmatpush1.msra.mxu0 0.0
  %2091 = vmatprep.subr.mxu0 0.0
  %2092 = vmatpush1.msra.mxu0 0.0
  %2093 = vmatprep.subr.mxu0 0.0
  %2094 = vmatpush1.msra.mxu0 0.0
  %2095 = vmatprep.subr.mxu0 0.0
  %2096 = vmatpush1.msra.mxu0 0.0
  %2097 = vmatprep.subr.mxu0 0.0
  %2098 = vmatpush1.msra.mxu0 0.0
  %2099 = vmatprep.subr.mxu0 0.0
  %2100 = vmatpush1.msra.mxu0 0.0
  %2101 = vmatprep.subr.mxu0 0.0
  %2102 = vmatpush1.msra.mxu0 0.0
  %2103 = vmatprep.subr.mxu0 0.0
  %2104 = vmatpush1.msra.mxu0 0.0
  %2105 = vmatprep.subr.mxu0 0.0
  %2106 = vmatpush1.msra.mxu0 0.0
  %2107 = vmatprep.subr.mxu0 0.0
  %2108 = vmatpush1.msra.mxu0 0.0
  %2109 = vmatprep.subr.mxu0 0.0
  %2110 = vmatpush1.msra.mxu0 0.0
  %2111 = vmatprep.subr.mxu0 0.0
  %2112 = vmatpush1.msra.mxu0 0.0
  %2113 = vmatprep.subr.mxu0 0.0
  %2114 = vmatpush1.msra.mxu0 0.0
  %2115 = vmatprep.subr.mxu0 0.0
  %2116 = vmatpush1.msra.mxu0 0.0
  %2117 = vmatprep.mubr.f32.mxu0 0.0
  %2118 = vmatmul.mubr.f32.gmra.mrb[0].mxu0 %v1980
  %v2119 = vpop.f32.mrb[0].mxu0
  %v2120 = vadd.f32 0.0, %v2119
  %v2121 = vpop.f32.mrb[0].mxu0
  %v2122 = vadd.f32 0.0, %v2121
  %2123 = vdwg.mxu0
  %2124 = vmatprep.subr.mxu0 0.0
  %2125 = vmatpush1.msra.mxu0 %v1973
  %2126 = vmatprep.subr.mxu0 0.0
  %2127 = vmatpush1.msra.mxu0 0.0
  %2128 = vmatprep.subr.mxu0 0.0
  %2129 = vmatpush1.msra.mxu0 0.0
  %2130 = vmatprep.subr.mxu0 0.0
  %2131 = vmatpush1.msra.mxu0 0.0
  %2132 = vmatprep.subr.mxu0 0.0
  %2133 = vmatpush1.msra.mxu0 0.0
  %2134 = vmatprep.subr.mxu0 0.0
  %2135 = vmatpush1.msra.mxu0 0.0
  %2136 = vmatprep.subr.mxu0 0.0
  %2137 = vmatpush1.msra.mxu0 0.0
  %2138 = vmatprep.subr.mxu0 0.0
  %2139 = vmatpush1.msra.mxu0 0.0
  %2140 = vmatprep.subr.mxu0 0.0
  %2141 = vmatpush1.msra.mxu0 0.0
  %2142 = vmatprep.subr.mxu0 0.0
  %2143 = vmatpush1.msra.mxu0 0.0
  %2144 = vmatprep.subr.mxu0 0.0
  %2145 = vmatpush1.msra.mxu0 0.0
  %2146 = vmatprep.subr.mxu0 0.0
  %2147 = vmatpush1.msra.mxu0 0.0
  %2148 = vmatprep.subr.mxu0 0.0
  %2149 = vmatpush1.msra.mxu0 0.0
  %2150 = vmatprep.subr.mxu0 0.0
  %2151 = vmatpush1.msra.mxu0 0.0
  %2152 = vmatprep.subr.mxu0 0.0
  %2153 = vmatpush1.msra.mxu0 0.0
  %2154 = vmatprep.subr.mxu0 0.0
  %2155 = vmatpush1.msra.mxu0 0.0
  %2156 = vmatprep.subr.mxu0 0.0
  %2157 = vmatpush1.msra.mxu0 0.0
  %2158 = vmatprep.subr.mxu0 0.0
  %2159 = vmatpush1.msra.mxu0 0.0
  %2160 = vmatprep.subr.mxu0 0.0
  %2161 = vmatpush1.msra.mxu0 0.0
  %2162 = vmatprep.subr.mxu0 0.0
  %2163 = vmatpush1.msra.mxu0 0.0
  %2164 = vmatprep.subr.mxu0 0.0
  %2165 = vmatpush1.msra.mxu0 0.0
  %2166 = vmatprep.subr.mxu0 0.0
  %2167 = vmatpush1.msra.mxu0 0.0
  %2168 = vmatprep.subr.mxu0 0.0
  %2169 = vmatpush1.msra.mxu0 0.0
  %2170 = vmatprep.subr.mxu0 0.0
  %2171 = vmatpush1.msra.mxu0 0.0
  %2172 = vmatprep.subr.mxu0 0.0
  %2173 = vmatpush1.msra.mxu0 0.0
  %2174 = vmatprep.subr.mxu0 0.0
  %2175 = vmatpush1.msra.mxu0 0.0
  %2176 = vmatprep.subr.mxu0 0.0
  %2177 = vmatpush1.msra.mxu0 0.0
  %2178 = vmatprep.subr.mxu0 0.0
  %2179 = vmatpush1.msra.mxu0 0.0
  %2180 = vmatprep.subr.mxu0 0.0
  %2181 = vmatpush1.msra.mxu0 0.0
  %2182 = vmatprep.subr.mxu0 0.0
  %2183 = vmatpush1.msra.mxu0 0.0
  %2184 = vmatprep.subr.mxu0 0.0
  %2185 = vmatpush1.msra.mxu0 0.0
  %2186 = vmatprep.subr.mxu0 0.0
  %2187 = vmatpush1.msra.mxu0 0.0
  %2188 = vmatprep.mubr.f32.mxu0 0.0
  %2189 = vmatmul.mubr.f32.gmra.mrb[0].mxu0 %v1980
  %v2190 = vpop.f32.mrb[0].mxu0
  %v2191 = vadd.f32 0.0, %v2190
  %v2192 = vpop.f32.mrb[0].mxu0
  %2193 = vdwg.mxu0
  %v2194 = vadd.f32 %v1949, %v2049
  %v2195 = vadd.f32 %v1950, %v2051
  %v2196 = vadd.f32 %v1951, %v2120
  %v2197 = vadd.f32 %v1952, %v2122
  %v2198 = vadd.f32 %v1953, %v2191
  %v2199 = vld [vmem:[%s4] sm:$0x1f]
  %v2201 = vlaneseq
  %v2202 = vshrl.u32 %v2201, 7
  %v2203 = vsub.s32 0, %v2202
  %v2204 = vrot.slane %v2199, %v2203
  %v2205 = vlaneseq
  %v2206 = vshrl.u32 %v2205, 7
  %v2207 = vsub.s32 1, %v2206
  %v2208 = vrot.slane %v2199, %v2207
  %v2209 = vlaneseq
  %v2210 = vshrl.u32 %v2209, 7
  %v2211 = vsub.s32 2, %v2210
  %v2212 = vrot.slane %v2199, %v2211
  %v2213 = vlaneseq
  %v2214 = vshrl.u32 %v2213, 7
  %v2215 = vsub.s32 3, %v2214
  %v2216 = vrot.slane %v2199, %v2215
  %v2217 = vlaneseq
  %v2218 = vshrl.u32 %v2217, 7
  %v2219 = vsub.s32 4, %v2218
  %v2220 = vrot.slane %v2199, %v2219
  %v2226 = vmul.f32 %v2194, %v2204
  %v2227 = vmul.f32 %v2195, %v2208
  %v2228 = vmul.f32 %v2196, %v2212
  %v2229 = vmul.f32 %v2197, %v2216
  %v2230 = vmul.f32 %v2198, %v2220
  %v2231 = vadd.f32 %v2226, %v2227
  %v2232 = vadd.f32 %v2231, %v2228
  %v2233 = vadd.f32 %v2232, %v2229
  %vm2234 = vcmask 801792
  %v2235 = vsel %vm2234, %v2230, 0.0
  %v2236 = vadd.f32 %v2233, %v2235
  %2237 = vadd.xlane.f32.xlu0 %v2236
  %v2238 = vpop.xlane.xlu0 %2237
  %v2239 = vmul.f32 %v2238, 0.001953125
  %v2240 = vmul.f32 %v2226, %v2226
  %v2241 = vmul.f32 %v2227, %v2227
  %v2242 = vmul.f32 %v2228, %v2228
  %v2243 = vmul.f32 %v2229, %v2229
  %v2244 = vmul.f32 %v2230, %v2230
  %v2245 = vadd.f32 %v2240, %v2241
  %v2246 = vadd.f32 %v2245, %v2242
  %v2247 = vadd.f32 %v2246, %v2243
  %v2248 = vsel %vm2234, %v2244, 0.0
  %v2249 = vadd.f32 %v2247, %v2248
  %2250 = vadd.xlane.f32.xlu0 %v2249
  %v2251 = vpop.xlane.xlu0 %2250
  %v2252 = vmul.f32 %v2251, 0.001953125
  %v2253 = vmul.f32 %v2239, %v2239
  %v2254 = vsub.f32 %v2252, %v2253
  %v2255 = vmax.f32 %v2254, 0.0
  %v2256 = vld [vmem:[%s2] sm:$0xff]
  %v2257 = vadd.f32 %v2255, 0.0001
  %v2258 = vrsqrt.pop %v2257
  %v2259 = vmul.f32 %v2256, %v2258
  %v2260 = vld [vmem:[%s3] sm:$0xff]
  %v2261 = vmul.f32 %v2239, %v2259
  %v2262 = vsub.f32 %v2260, %v2261
  %2264 = vset.pattern.permute.xlu0 0
  %2265 = vperm.xlu0 %2264, %v2259
  %v2266 = vpop.permute.xlu0 %2265
  %v2268 = vmul.f32 %v2194, %v2266
  %v2269 = vmul.f32 %v2195, %v2266
  %v2270 = vmul.f32 %v2196, %v2266
  %v2271 = vmul.f32 %v2197, %v2266
  %v2272 = vmul.f32 %v2198, %v2266
  %2274 = vset.pattern.permute.xlu0 0
  %2275 = vperm.xlu0 %2274, %v2262
  %v2276 = vpop.permute.xlu0 %2275
  %v2278 = vadd.f32 %v2268, %v2276
  %v2279 = vadd.f32 %v2269, %v2276
  %v2280 = vadd.f32 %v2270, %v2276
  %v2281 = vadd.f32 %v2271, %v2276
  %v2282 = vadd.f32 %v2272, %v2276
  %v2283 = vmax.f32 %v2278, 0.0
  %v2284 = vmax.f32 %v2279, 0.0
  %v2285 = vmax.f32 %v2280, 0.0
  %v2286 = vmax.f32 %v2281, 0.0
  %v2287 = vmax.f32 %v2282, 0.0
  %v2288 = vmul.f32 %v2283, %v2204
  %v2289 = vmul.f32 %v2284, %v2208
  %v2290 = vmul.f32 %v2285, %v2212
  %v2291 = vmul.f32 %v2286, %v2216
  %v2292 = vmul.f32 %v2287, %v2220
  %2293 = vst [vmem:[%s5] sm:$0xff] 0.0
  %2294 = vst [vmem:[%s5 + $0x8] sm:$0xff] 0.0
  %2295 = vst [vmem:[%s5 + $0x10] sm:$0xff] 0.0
  %2296 = vst [vmem:[%s5 + $0x18] sm:$0xff] 0.0
  %2297 = vst [vmem:[%s5 + $0x20] sm:$0xff] 0.0
  %2298 = vst.msk [vmem:[%s5 + $0x28] sm:$0xff] %vm53, 0.0
  %2304 = vrot.lane.b32.xlu0 %v2288, 19
  %v2305 = vpop.permute.xlu0 %2304
  %2306 = vrot.lane.b32.xlu0 %v2289, 19
  %v2307 = vpop.permute.xlu0 %2306
  %2308 = vrot.lane.b32.xlu0 %v2290, 19
  %v2309 = vpop.permute.xlu0 %2308
  %2310 = vrot.lane.b32.xlu0 %v2291, 19
  %v2311 = vpop.permute.xlu0 %2310
  %2312 = vrot.lane.b32.xlu0 %v2292, 19
  %v2313 = vpop.permute.xlu0 %2312
  %vm2314 = vcmask 154624
  %v2315 = vsel %vm2314, %v2305, %v2307
  %v2316 = vsel %vm2314, %v2307, %v2309
  %v2317 = vsel %vm2314, %v2309, %v2311
  %v2318 = vsel %vm2314, %v2311, %v2313
  %vm2324 = vcmask 1047704
  %2325 = vst.msk [vmem:[%s5] sm:$0xff] %vm2324, %v2305
  %2326 = vst [vmem:[%s5 + $0x8] sm:$0xff] %v2315
  %2327 = vst [vmem:[%s5 + $0x10] sm:$0xff] %v2316
  %2328 = vst [vmem:[%s5 + $0x18] sm:$0xff] %v2317
  %vm2329 = vcmask 957440
  %2330 = vst.msk [vmem:[%s5 + $0x20] sm:$0xff] %vm2329, %v2318
  // Predicated region
  $region22: #{double_module_forward.4} parent=0 // pred_check
    _
  $region23: #{double_module_forward.4} parent=0 // pred_check_branch
    %2332 = sbr.rel (0) target = $region25
  $region24: #{double_module_forward.4} parent=0 // pred_region
    _
  $region25: #{double_module_forward.4} parent=0 // pred_fallthru
    _
  // Predicated region
  $region26: #{double_module_forward.4} parent=0 // pred_check
    _
  $region27: #{double_module_forward.4} parent=0 // pred_check_branch
    %2334 = sbr.rel (0) target = $region29
  $region28: #{double_module_forward.4} parent=0 // pred_region
    _
  $region29: #{double_module_forward.4} parent=0 // pred_fallthru
    _

</llo_original>
